<compile_context>
chip_gen: v6e
topology: v6e:2x2x1
jax: 0.10.0
libtpu: 0.0.40
codegen_flags: <defaults>
</compile_context>

<pallas_src>
import jax
import jax.numpy as jnp
from jax.experimental import pallas as pl
from jax.experimental.pallas import tpu as pltpu


def _attn_lstm_kernel(
    x2d_ref,                        # (T*Bp, I)   time-major rows, batch padded
    wih0_ref, whh0_ref, b0_ref,     # (I, 4H), (H, 4H), (1, 4H)  g-cols pre-scaled x2
    wih1_ref, whh1_ref, b1_ref,     # (H, 4H), (H, 4H), (1, 4H)  g-cols pre-scaled x2
    wa1_ref, ba1_ref,               # (H, 64), (1, 64)
    wa2_ref, ba2_ref,               # (1, 64)  [pre-transposed], (1, 1)
    wfc_ref, bfc_ref,               # (H, O), (1, O)
    out_ref,                        # (Bp, O)
):
    R = x2d_ref.shape[0]
    H = whh0_ref.shape[0]
    Bp = out_ref.shape[0]
    T = R // Bp
    f32 = jnp.float32

    # ---- hoisted, row-batched layer-0 input projection (bias folded) --------
    xproj = (jnp.dot(x2d_ref[...], wih0_ref[...], preferred_element_type=f32)
             + b0_ref[...])                                    # (T*Bp, 4H)

    # Weights / biases read (and broadcast) once, outside the recurrence.
    whh0 = whh0_ref[...]
    wih1 = wih1_ref[...]
    whh1 = whh1_ref[...]
    b1 = jnp.broadcast_to(b1_ref[...], (Bp, 4 * H))

    def gates(g):
        # ONE sigmoid over all 4H lanes. The g-gate lanes of the weights were
        # pre-scaled by 2, so tanh(x) = 2*sigmoid(2x) - 1 is one FMA on a
        # quarter-width slice instead of a second full-width transcendental.
        sg = jax.nn.sigmoid(g)
        return (sg[:, 0 * H:1 * H], sg[:, 1 * H:2 * H],
                2.0 * sg[:, 2 * H:3 * H] - 1.0, sg[:, 3 * H:4 * H])

    h0 = jnp.zeros((Bp, H), f32)
    c0 = jnp.zeros((Bp, H), f32)
    h1 = jnp.zeros((Bp, H), f32)
    c1 = jnp.zeros((Bp, H), f32)
    hs = []
    # Static unroll: T is small and fixed; recurrent state stays in vregs.
    for t in range(T):
        # Layer-1 recurrent half FIRST: it only depends on step t-1 state, so
        # it overlaps with layer-0's matmul/gates instead of waiting on h0_t.
        rec1 = jnp.dot(h1, whh1, preferred_element_type=f32) + b1
        # Layer 0: only the recurrent matmul sits on the serial path.
        g0 = xproj[t * Bp:(t + 1) * Bp, :] + jnp.dot(
            h0, whh0, preferred_element_type=f32)
        i0, f0, gg0, o0 = gates(g0)
        c0 = f0 * c0 + i0 * gg0
        h0 = o0 * jnp.tanh(c0)
        # TODO(synk): nn.LSTM inter-layer dropout is train-only; eval forward is identity.
        g1 = jnp.dot(h0, wih1, preferred_element_type=f32) + rec1
        i1, f1, gg1, o1 = gates(g1)
        c1 = f1 * c1 + i1 * gg1
        h1 = o1 * jnp.tanh(c1)
        hs.append(h1)

    # ---- attention MLP, batched over all (t, b) rows -------------------------
    L = jnp.concatenate(hs, axis=0)                            # (T*Bp, H)
    a = jnp.tanh(jnp.dot(L, wa1_ref[...], preferred_element_type=f32)
                 + ba1_ref[...])                               # (T*Bp, 64)
    # 64 -> 1 projection as VPU multiply + lane reduce (no 1-lane MXU push).
    s = (jnp.sum(a * wa2_ref[...], axis=-1, keepdims=True)
         + ba2_ref[...])                                       # (T*Bp, 1)

    # ---- softmax over time (per batch row), vectorized -----------------------
    # Row r = t*Bp + b; assemble scores into one lane-major (Bp, T) tile so the
    # max / exp / sum each run once instead of T times.
    scores = jnp.concatenate(
        [s[t * Bp:(t + 1) * Bp, :] for t in range(T)], axis=1)  # (Bp, T)
    m = jnp.max(scores, axis=-1, keepdims=True)
    e = jnp.exp(scores - m)                                      # one EUP push
    denom = jnp.sum(e, axis=-1, keepdims=True)
    ctx = jnp.zeros((Bp, H), f32)
    for t in range(T):
        ctx = ctx + e[:, t:t + 1] * hs[t]
    ctx = ctx / denom                                            # (Bp, H)

    out = jnp.dot(ctx, wfc_ref[...], preferred_element_type=f32) + bfc_ref[...]
    out_ref[...] = out.astype(out_ref.dtype)


def prepare_params(params):
    """One-time parameter prep (do at init, not per call).

    - Pre-scales the "g" gate columns of the LSTM weights/biases by 2 so the
      kernel can recover tanh from a single full-width sigmoid.
    - Pre-transposes wa2 to a (1, 64) row for the VPU 64->1 projection.
    """
    H = params["whh0"].shape[0]
    g_scale = jnp.ones((4 * H,), jnp.float32).at[2 * H:3 * H].set(2.0)
    return {
        "wih0": params["wih0"] * g_scale,
        "whh0": params["whh0"] * g_scale,
        "b0":   params["b0"] * g_scale,
        "wih1": params["wih1"] * g_scale,
        "whh1": params["whh1"] * g_scale,
        "b1":   params["b1"] * g_scale,
        "wa1":  params["wa1"],
        "ba1":  params["ba1"],
        "wa2_row": params["wa2"].T,          # (1, 64)
        "ba2":  params["ba2"],
        "wfc":  params["wfc"],
        "bfc":  params["bfc"],
    }


@jax.jit
def attention_lstm_forward(x, prepped):
    """x: (B, T, I) batch-first, as in the PyTorch module. Returns (B, O).

    `prepped` is the output of `prepare_params`. The whole forward (x prep,
    pallas_call, output slice) is fused under a single jit.
    """
    B, T, I = x.shape
    H = prepped["whh0"].shape[0]
    O = prepped["wfc"].shape[1]
    Bp = ((B + 7) // 8) * 8        # pad batch to a sublane multiple

    # time-major + batch pad + row-flatten: row r = t*Bp + b
    x_tbi = jnp.transpose(x, (1, 0, 2)).astype(jnp.float32)    # (T, B, I)
    if Bp != B:
        x_tbi = jnp.pad(x_tbi, ((0, 0), (0, Bp - B), (0, 0)))
    x2d = x_tbi.reshape(T * Bp, I)

    # TODO(synk): on v6e/v7x the two recurrent matmuls could be fused into one
    # 256-lane MXU push ([whh0 | whh1] with [h0; h1] LHS); skipped here to stay
    # a single cross-generation (v5e-safe) code path.
    args = (x2d,
            prepped["wih0"], prepped["whh0"], prepped["b0"],
            prepped["wih1"], prepped["whh1"], prepped["b1"],
            prepped["wa1"], prepped["ba1"], prepped["wa2_row"], prepped["ba2"],
            prepped["wfc"], prepped["bfc"])
    vmem = pl.BlockSpec(memory_space=pltpu.MemorySpace.VMEM)

    out = pl.pallas_call(
        _attn_lstm_kernel,
        out_shape=jax.ShapeDtypeStruct((Bp, O), jnp.float32),
        in_specs=[vmem] * len(args),
        out_specs=vmem,
    )(*args)
    return out[:B]


def reference_forward(x, p):
    """Pure-JAX reference matching the PyTorch forward (eval mode)."""
    B, T, _ = x.shape
    H = p["whh0"].shape[0]

    def gates(xt, h, wih, whh, b):
        g = xt @ wih + h @ whh + b
        i, f, gg, o = jnp.split(g, 4, axis=-1)
        return jax.nn.sigmoid(i), jax.nn.sigmoid(f), jnp.tanh(gg), jax.nn.sigmoid(o)

    h0 = c0 = jnp.zeros((B, H), jnp.float32)
    h1 = c1 = jnp.zeros((B, H), jnp.float32)
    outs = []
    for t in range(T):
        i, f, gg, o = gates(x[:, t], h0, p["wih0"], p["whh0"], p["b0"])
        c0 = f * c0 + i * gg
        h0 = o * jnp.tanh(c0)
        i, f, gg, o = gates(h0, h1, p["wih1"], p["whh1"], p["b1"])
        c1 = f * c1 + i * gg
        h1 = o * jnp.tanh(c1)
        outs.append(h1)
    lstm_out = jnp.stack(outs, axis=1)                                       # (B, T, H)
    logits = jnp.tanh(lstm_out @ p["wa1"] + p["ba1"]) @ p["wa2"] + p["ba2"]  # (B, T, 1)
    w = jax.nn.softmax(logits, axis=1)
    context = jnp.sum(w * lstm_out, axis=1)                                  # (B, H)
    return context @ p["wfc"] + p["bfc"]


if __name__ == "__main__":
    # Small shapes consistent with the module: input_size=7, hidden_size=32,
    # num_layers=2, output_size=1; batch=2, seq=8.
    B, T, I, H, O = 2, 8, 7, 32, 1
    key = jax.random.PRNGKey(0)
    keys = jax.random.split(key, 16)
    bound = 1.0 / jnp.sqrt(jnp.float32(H))

    def u(kk, shape):
        return jax.random.uniform(kk, shape, jnp.float32, -bound, bound)

    params = {
        # LSTM layer 0 (weights pre-transposed to (in, 4H)); b = b_ih + b_hh folded
        "wih0": u(keys[0], (I, 4 * H)),
        "whh0": u(keys[1], (H, 4 * H)),
        "b0":   u(keys[2], (1, 4 * H)) + u(keys[3], (1, 4 * H)),
        # LSTM layer 1
        "wih1": u(keys[4], (H, 4 * H)),
        "whh1": u(keys[5], (H, 4 * H)),
        "b1":   u(keys[6], (1, 4 * H)) + u(keys[7], (1, 4 * H)),
        # attention: Linear(H, 64) -> Tanh -> (Dropout: identity in eval) -> Linear(64, 1)
        "wa1": u(keys[8], (H, 64)),
        "ba1": u(keys[9], (1, 64)),
        "wa2": u(keys[10], (64, 1)),
        "ba2": u(keys[11], (1, 1)),
        # fc: Linear(H, O)
        "wfc": u(keys[12], (H, O)),
        "bfc": u(keys[13], (1, O)),
    }
    x = jax.random.normal(keys[14], (B, T, I), jnp.float32)

    prepped = prepare_params(params)           # one-time init-side weight prep
    out = attention_lstm_forward(x, prepped)
    jax.block_until_ready(out)

    ref = reference_forward(x, params)
    assert out.shape == (B, O), out.shape
    assert jnp.allclose(out, ref, atol=1e-4, rtol=1e-4), (out, ref)
    print("KERNEL_OK")
</pallas_src>

<mosaic_0001>
module attributes {stable_mosaic.version = 11 : i64} {
  func.func @_attn_lstm_kernel(%arg0: memref<64x7xf32, #tpu.memory_space<vmem>>, %arg1: memref<7x128xf32, #tpu.memory_space<vmem>>, %arg2: memref<32x128xf32, #tpu.memory_space<vmem>>, %arg3: memref<1x128xf32, #tpu.memory_space<vmem>>, %arg4: memref<32x128xf32, #tpu.memory_space<vmem>>, %arg5: memref<32x128xf32, #tpu.memory_space<vmem>>, %arg6: memref<1x128xf32, #tpu.memory_space<vmem>>, %arg7: memref<32x64xf32, #tpu.memory_space<vmem>>, %arg8: memref<1x64xf32, #tpu.memory_space<vmem>>, %arg9: memref<1x64xf32, #tpu.memory_space<vmem>>, %arg10: memref<1x1xf32, #tpu.memory_space<vmem>>, %arg11: memref<32x1xf32, #tpu.memory_space<vmem>>, %arg12: memref<1x1xf32, #tpu.memory_space<vmem>>, %arg13: memref<8x1xf32, #tpu.memory_space<vmem>>) attributes {dimension_semantics = [], scalar_prefetch = 0 : i64, scratch_operands = 0 : i64, tpu.core_type = #tpu.core_type<tc>} {
    %c0 = arith.constant 0 : index
    %c0_0 = arith.constant 0 : index
    %0 = vector.load %arg0[%c0, %c0_0] : memref<64x7xf32, #tpu.memory_space<vmem>>, vector<64x7xf32>
    %c0_1 = arith.constant 0 : index
    %c0_2 = arith.constant 0 : index
    %1 = vector.load %arg1[%c0_1, %c0_2] : memref<7x128xf32, #tpu.memory_space<vmem>>, vector<7x128xf32>
    %cst = arith.constant dense<0.000000e+00> : vector<64x128xf32>
    %2 = tpu.matmul %0, %1, %cst {dimension_numbers = #tpu.dot_dimension_numbers<[1], [0], [0], [1], [0, 0, 1, 1], [], []>} : vector<64x7xf32>, vector<7x128xf32>, vector<64x128xf32> -> vector<64x128xf32>
    %c0_3 = arith.constant 0 : index
    %c0_4 = arith.constant 0 : index
    %3 = vector.load %arg3[%c0_3, %c0_4] : memref<1x128xf32, #tpu.memory_space<vmem>>, vector<1x128xf32>
    %4 = vector.broadcast %3 : vector<1x128xf32> to vector<64x128xf32>
    %5 = arith.addf %2, %4 : vector<64x128xf32>
    %c0_5 = arith.constant 0 : index
    %c0_6 = arith.constant 0 : index
    %6 = vector.load %arg2[%c0_5, %c0_6] : memref<32x128xf32, #tpu.memory_space<vmem>>, vector<32x128xf32>
    %c0_7 = arith.constant 0 : index
    %c0_8 = arith.constant 0 : index
    %7 = vector.load %arg4[%c0_7, %c0_8] : memref<32x128xf32, #tpu.memory_space<vmem>>, vector<32x128xf32>
    %c0_9 = arith.constant 0 : index
    %c0_10 = arith.constant 0 : index
    %8 = vector.load %arg5[%c0_9, %c0_10] : memref<32x128xf32, #tpu.memory_space<vmem>>, vector<32x128xf32>
    %c0_11 = arith.constant 0 : index
    %c0_12 = arith.constant 0 : index
    %9 = vector.load %arg6[%c0_11, %c0_12] : memref<1x128xf32, #tpu.memory_space<vmem>>, vector<1x128xf32>
    %10 = vector.shape_cast %9 : vector<1x128xf32> to vector<1x128xf32>
    %11 = vector.broadcast %10 : vector<1x128xf32> to vector<8x128xf32>
    %cst_13 = arith.constant 0.000000e+00 : f32
    %12 = vector.broadcast %cst_13 : f32 to vector<8x32xf32>
    %cst_14 = arith.constant 0.000000e+00 : f32
    %13 = vector.broadcast %cst_14 : f32 to vector<8x32xf32>
    %cst_15 = arith.constant 0.000000e+00 : f32
    %14 = vector.broadcast %cst_15 : f32 to vector<8x32xf32>
    %cst_16 = arith.constant 0.000000e+00 : f32
    %15 = vector.broadcast %cst_16 : f32 to vector<8x32xf32>
    %cst_17 = arith.constant dense<0.000000e+00> : vector<8x128xf32>
    %16 = tpu.matmul %14, %8, %cst_17 {dimension_numbers = #tpu.dot_dimension_numbers<[1], [0], [0], [1], [0, 0, 1, 1], [], []>} : vector<8x32xf32>, vector<32x128xf32>, vector<8x128xf32> -> vector<8x128xf32>
    %17 = arith.addf %16, %11 : vector<8x128xf32>
    %18 = vector.extract_strided_slice %5 {offsets = [0, 0], sizes = [8, 128], strides = [1, 1]} : vector<64x128xf32> to vector<8x128xf32>
    %cst_18 = arith.constant dense<0.000000e+00> : vector<8x128xf32>
    %19 = tpu.matmul %12, %6, %cst_18 {dimension_numbers = #tpu.dot_dimension_numbers<[1], [0], [0], [1], [0, 0, 1, 1], [], []>} : vector<8x32xf32>, vector<32x128xf32>, vector<8x128xf32> -> vector<8x128xf32>
    %20 = arith.addf %18, %19 : vector<8x128xf32>
    %21 = arith.negf %20 : vector<8x128xf32>
    %22 = math.exp %21 : vector<8x128xf32>
    %cst_19 = arith.constant 1.000000e+00 : f32
    %23 = vector.broadcast %cst_19 : f32 to vector<8x128xf32>
    %24 = arith.addf %23, %22 : vector<8x128xf32>
    %25 = arith.divf %23, %24 : vector<8x128xf32>
    %26 = vector.extract_strided_slice %25 {offsets = [0, 0], sizes = [8, 32], strides = [1, 1]} : vector<8x128xf32> to vector<8x32xf32>
    %27 = vector.extract_strided_slice %25 {offsets = [0, 32], sizes = [8, 32], strides = [1, 1]} : vector<8x128xf32> to vector<8x32xf32>
    %28 = vector.extract_strided_slice %25 {offsets = [0, 64], sizes = [8, 32], strides = [1, 1]} : vector<8x128xf32> to vector<8x32xf32>
    %cst_20 = arith.constant 2.000000e+00 : f32
    %29 = vector.broadcast %cst_20 : f32 to vector<8x32xf32>
    %30 = arith.mulf %29, %28 : vector<8x32xf32>
    %cst_21 = arith.constant 1.000000e+00 : f32
    %31 = vector.broadcast %cst_21 : f32 to vector<8x32xf32>
    %32 = arith.subf %30, %31 : vector<8x32xf32>
    %33 = vector.extract_strided_slice %25 {offsets = [0, 96], sizes = [8, 32], strides = [1, 1]} : vector<8x128xf32> to vector<8x32xf32>
    %34 = arith.mulf %27, %13 : vector<8x32xf32>
    %35 = arith.mulf %26, %32 : vector<8x32xf32>
    %36 = arith.addf %34, %35 : vector<8x32xf32>
    %37 = math.tanh %36 : vector<8x32xf32>
    %38 = arith.mulf %33, %37 : vector<8x32xf32>
    %cst_22 = arith.constant dense<0.000000e+00> : vector<8x128xf32>
    %39 = tpu.matmul %38, %7, %cst_22 {dimension_numbers = #tpu.dot_dimension_numbers<[1], [0], [0], [1], [0, 0, 1, 1], [], []>} : vector<8x32xf32>, vector<32x128xf32>, vector<8x128xf32> -> vector<8x128xf32>
    %40 = arith.addf %39, %17 : vector<8x128xf32>
    %41 = arith.negf %40 : vector<8x128xf32>
    %42 = math.exp %41 : vector<8x128xf32>
    %cst_23 = arith.constant 1.000000e+00 : f32
    %43 = vector.broadcast %cst_23 : f32 to vector<8x128xf32>
    %44 = arith.addf %43, %42 : vector<8x128xf32>
    %45 = arith.divf %43, %44 : vector<8x128xf32>
    %46 = vector.extract_strided_slice %45 {offsets = [0, 0], sizes = [8, 32], strides = [1, 1]} : vector<8x128xf32> to vector<8x32xf32>
    %47 = vector.extract_strided_slice %45 {offsets = [0, 32], sizes = [8, 32], strides = [1, 1]} : vector<8x128xf32> to vector<8x32xf32>
    %48 = vector.extract_strided_slice %45 {offsets = [0, 64], sizes = [8, 32], strides = [1, 1]} : vector<8x128xf32> to vector<8x32xf32>
    %cst_24 = arith.constant 2.000000e+00 : f32
    %49 = vector.broadcast %cst_24 : f32 to vector<8x32xf32>
    %50 = arith.mulf %49, %48 : vector<8x32xf32>
    %cst_25 = arith.constant 1.000000e+00 : f32
    %51 = vector.broadcast %cst_25 : f32 to vector<8x32xf32>
    %52 = arith.subf %50, %51 : vector<8x32xf32>
    %53 = vector.extract_strided_slice %45 {offsets = [0, 96], sizes = [8, 32], strides = [1, 1]} : vector<8x128xf32> to vector<8x32xf32>
    %54 = arith.mulf %47, %15 : vector<8x32xf32>
    %55 = arith.mulf %46, %52 : vector<8x32xf32>
    %56 = arith.addf %54, %55 : vector<8x32xf32>
    %57 = math.tanh %56 : vector<8x32xf32>
    %58 = arith.mulf %53, %57 : vector<8x32xf32>
    %cst_26 = arith.constant dense<0.000000e+00> : vector<8x128xf32>
    %59 = tpu.matmul %58, %8, %cst_26 {dimension_numbers = #tpu.dot_dimension_numbers<[1], [0], [0], [1], [0, 0, 1, 1], [], []>} : vector<8x32xf32>, vector<32x128xf32>, vector<8x128xf32> -> vector<8x128xf32>
    %60 = arith.addf %59, %11 : vector<8x128xf32>
    %61 = vector.extract_strided_slice %5 {offsets = [8, 0], sizes = [8, 128], strides = [1, 1]} : vector<64x128xf32> to vector<8x128xf32>
    %cst_27 = arith.constant dense<0.000000e+00> : vector<8x128xf32>
    %62 = tpu.matmul %38, %6, %cst_27 {dimension_numbers = #tpu.dot_dimension_numbers<[1], [0], [0], [1], [0, 0, 1, 1], [], []>} : vector<8x32xf32>, vector<32x128xf32>, vector<8x128xf32> -> vector<8x128xf32>
    %63 = arith.addf %61, %62 : vector<8x128xf32>
    %64 = arith.negf %63 : vector<8x128xf32>
    %65 = math.exp %64 : vector<8x128xf32>
    %cst_28 = arith.constant 1.000000e+00 : f32
    %66 = vector.broadcast %cst_28 : f32 to vector<8x128xf32>
    %67 = arith.addf %66, %65 : vector<8x128xf32>
    %68 = arith.divf %66, %67 : vector<8x128xf32>
    %69 = vector.extract_strided_slice %68 {offsets = [0, 0], sizes = [8, 32], strides = [1, 1]} : vector<8x128xf32> to vector<8x32xf32>
    %70 = vector.extract_strided_slice %68 {offsets = [0, 32], sizes = [8, 32], strides = [1, 1]} : vector<8x128xf32> to vector<8x32xf32>
    %71 = vector.extract_strided_slice %68 {offsets = [0, 64], sizes = [8, 32], strides = [1, 1]} : vector<8x128xf32> to vector<8x32xf32>
    %cst_29 = arith.constant 2.000000e+00 : f32
    %72 = vector.broadcast %cst_29 : f32 to vector<8x32xf32>
    %73 = arith.mulf %72, %71 : vector<8x32xf32>
    %cst_30 = arith.constant 1.000000e+00 : f32
    %74 = vector.broadcast %cst_30 : f32 to vector<8x32xf32>
    %75 = arith.subf %73, %74 : vector<8x32xf32>
    %76 = vector.extract_strided_slice %68 {offsets = [0, 96], sizes = [8, 32], strides = [1, 1]} : vector<8x128xf32> to vector<8x32xf32>
    %77 = arith.mulf %70, %36 : vector<8x32xf32>
    %78 = arith.mulf %69, %75 : vector<8x32xf32>
    %79 = arith.addf %77, %78 : vector<8x32xf32>
    %80 = math.tanh %79 : vector<8x32xf32>
    %81 = arith.mulf %76, %80 : vector<8x32xf32>
    %cst_31 = arith.constant dense<0.000000e+00> : vector<8x128xf32>
    %82 = tpu.matmul %81, %7, %cst_31 {dimension_numbers = #tpu.dot_dimension_numbers<[1], [0], [0], [1], [0, 0, 1, 1], [], []>} : vector<8x32xf32>, vector<32x128xf32>, vector<8x128xf32> -> vector<8x128xf32>
    %83 = arith.addf %82, %60 : vector<8x128xf32>
    %84 = arith.negf %83 : vector<8x128xf32>
    %85 = math.exp %84 : vector<8x128xf32>
    %cst_32 = arith.constant 1.000000e+00 : f32
    %86 = vector.broadcast %cst_32 : f32 to vector<8x128xf32>
    %87 = arith.addf %86, %85 : vector<8x128xf32>
    %88 = arith.divf %86, %87 : vector<8x128xf32>
    %89 = vector.extract_strided_slice %88 {offsets = [0, 0], sizes = [8, 32], strides = [1, 1]} : vector<8x128xf32> to vector<8x32xf32>
    %90 = vector.extract_strided_slice %88 {offsets = [0, 32], sizes = [8, 32], strides = [1, 1]} : vector<8x128xf32> to vector<8x32xf32>
    %91 = vector.extract_strided_slice %88 {offsets = [0, 64], sizes = [8, 32], strides = [1, 1]} : vector<8x128xf32> to vector<8x32xf32>
    %cst_33 = arith.constant 2.000000e+00 : f32
    %92 = vector.broadcast %cst_33 : f32 to vector<8x32xf32>
    %93 = arith.mulf %92, %91 : vector<8x32xf32>
    %cst_34 = arith.constant 1.000000e+00 : f32
    %94 = vector.broadcast %cst_34 : f32 to vector<8x32xf32>
    %95 = arith.subf %93, %94 : vector<8x32xf32>
    %96 = vector.extract_strided_slice %88 {offsets = [0, 96], sizes = [8, 32], strides = [1, 1]} : vector<8x128xf32> to vector<8x32xf32>
    %97 = arith.mulf %90, %56 : vector<8x32xf32>
    %98 = arith.mulf %89, %95 : vector<8x32xf32>
    %99 = arith.addf %97, %98 : vector<8x32xf32>
    %100 = math.tanh %99 : vector<8x32xf32>
    %101 = arith.mulf %96, %100 : vector<8x32xf32>
    %cst_35 = arith.constant dense<0.000000e+00> : vector<8x128xf32>
    %102 = tpu.matmul %101, %8, %cst_35 {dimension_numbers = #tpu.dot_dimension_numbers<[1], [0], [0], [1], [0, 0, 1, 1], [], []>} : vector<8x32xf32>, vector<32x128xf32>, vector<8x128xf32> -> vector<8x128xf32>
    %103 = arith.addf %102, %11 : vector<8x128xf32>
    %104 = vector.extract_strided_slice %5 {offsets = [16, 0], sizes = [8, 128], strides = [1, 1]} : vector<64x128xf32> to vector<8x128xf32>
    %cst_36 = arith.constant dense<0.000000e+00> : vector<8x128xf32>
    %105 = tpu.matmul %81, %6, %cst_36 {dimension_numbers = #tpu.dot_dimension_numbers<[1], [0], [0], [1], [0, 0, 1, 1], [], []>} : vector<8x32xf32>, vector<32x128xf32>, vector<8x128xf32> -> vector<8x128xf32>
    %106 = arith.addf %104, %105 : vector<8x128xf32>
    %107 = arith.negf %106 : vector<8x128xf32>
    %108 = math.exp %107 : vector<8x128xf32>
    %cst_37 = arith.constant 1.000000e+00 : f32
    %109 = vector.broadcast %cst_37 : f32 to vector<8x128xf32>
    %110 = arith.addf %109, %108 : vector<8x128xf32>
    %111 = arith.divf %109, %110 : vector<8x128xf32>
    %112 = vector.extract_strided_slice %111 {offsets = [0, 0], sizes = [8, 32], strides = [1, 1]} : vector<8x128xf32> to vector<8x32xf32>
    %113 = vector.extract_strided_slice %111 {offsets = [0, 32], sizes = [8, 32], strides = [1, 1]} : vector<8x128xf32> to vector<8x32xf32>
    %114 = vector.extract_strided_slice %111 {offsets = [0, 64], sizes = [8, 32], strides = [1, 1]} : vector<8x128xf32> to vector<8x32xf32>
    %cst_38 = arith.constant 2.000000e+00 : f32
    %115 = vector.broadcast %cst_38 : f32 to vector<8x32xf32>
    %116 = arith.mulf %115, %114 : vector<8x32xf32>
    %cst_39 = arith.constant 1.000000e+00 : f32
    %117 = vector.broadcast %cst_39 : f32 to vector<8x32xf32>
    %118 = arith.subf %116, %117 : vector<8x32xf32>
    %119 = vector.extract_strided_slice %111 {offsets = [0, 96], sizes = [8, 32], strides = [1, 1]} : vector<8x128xf32> to vector<8x32xf32>
    %120 = arith.mulf %113, %79 : vector<8x32xf32>
    %121 = arith.mulf %112, %118 : vector<8x32xf32>
    %122 = arith.addf %120, %121 : vector<8x32xf32>
    %123 = math.tanh %122 : vector<8x32xf32>
    %124 = arith.mulf %119, %123 : vector<8x32xf32>
    %cst_40 = arith.constant dense<0.000000e+00> : vector<8x128xf32>
    %125 = tpu.matmul %124, %7, %cst_40 {dimension_numbers = #tpu.dot_dimension_numbers<[1], [0], [0], [1], [0, 0, 1, 1], [], []>} : vector<8x32xf32>, vector<32x128xf32>, vector<8x128xf32> -> vector<8x128xf32>
    %126 = arith.addf %125, %103 : vector<8x128xf32>
    %127 = arith.negf %126 : vector<8x128xf32>
    %128 = math.exp %127 : vector<8x128xf32>
    %cst_41 = arith.constant 1.000000e+00 : f32
    %129 = vector.broadcast %cst_41 : f32 to vector<8x128xf32>
    %130 = arith.addf %129, %128 : vector<8x128xf32>
    %131 = arith.divf %129, %130 : vector<8x128xf32>
    %132 = vector.extract_strided_slice %131 {offsets = [0, 0], sizes = [8, 32], strides = [1, 1]} : vector<8x128xf32> to vector<8x32xf32>
    %133 = vector.extract_strided_slice %131 {offsets = [0, 32], sizes = [8, 32], strides = [1, 1]} : vector<8x128xf32> to vector<8x32xf32>
    %134 = vector.extract_strided_slice %131 {offsets = [0, 64], sizes = [8, 32], strides = [1, 1]} : vector<8x128xf32> to vector<8x32xf32>
    %cst_42 = arith.constant 2.000000e+00 : f32
    %135 = vector.broadcast %cst_42 : f32 to vector<8x32xf32>
    %136 = arith.mulf %135, %134 : vector<8x32xf32>
    %cst_43 = arith.constant 1.000000e+00 : f32
    %137 = vector.broadcast %cst_43 : f32 to vector<8x32xf32>
    %138 = arith.subf %136, %137 : vector<8x32xf32>
    %139 = vector.extract_strided_slice %131 {offsets = [0, 96], sizes = [8, 32], strides = [1, 1]} : vector<8x128xf32> to vector<8x32xf32>
    %140 = arith.mulf %133, %99 : vector<8x32xf32>
    %141 = arith.mulf %132, %138 : vector<8x32xf32>
    %142 = arith.addf %140, %141 : vector<8x32xf32>
    %143 = math.tanh %142 : vector<8x32xf32>
    %144 = arith.mulf %139, %143 : vector<8x32xf32>
    %cst_44 = arith.constant dense<0.000000e+00> : vector<8x128xf32>
    %145 = tpu.matmul %144, %8, %cst_44 {dimension_numbers = #tpu.dot_dimension_numbers<[1], [0], [0], [1], [0, 0, 1, 1], [], []>} : vector<8x32xf32>, vector<32x128xf32>, vector<8x128xf32> -> vector<8x128xf32>
    %146 = arith.addf %145, %11 : vector<8x128xf32>
    %147 = vector.extract_strided_slice %5 {offsets = [24, 0], sizes = [8, 128], strides = [1, 1]} : vector<64x128xf32> to vector<8x128xf32>
    %cst_45 = arith.constant dense<0.000000e+00> : vector<8x128xf32>
    %148 = tpu.matmul %124, %6, %cst_45 {dimension_numbers = #tpu.dot_dimension_numbers<[1], [0], [0], [1], [0, 0, 1, 1], [], []>} : vector<8x32xf32>, vector<32x128xf32>, vector<8x128xf32> -> vector<8x128xf32>
    %149 = arith.addf %147, %148 : vector<8x128xf32>
    %150 = arith.negf %149 : vector<8x128xf32>
    %151 = math.exp %150 : vector<8x128xf32>
    %cst_46 = arith.constant 1.000000e+00 : f32
    %152 = vector.broadcast %cst_46 : f32 to vector<8x128xf32>
    %153 = arith.addf %152, %151 : vector<8x128xf32>
    %154 = arith.divf %152, %153 : vector<8x128xf32>
    %155 = vector.extract_strided_slice %154 {offsets = [0, 0], sizes = [8, 32], strides = [1, 1]} : vector<8x128xf32> to vector<8x32xf32>
    %156 = vector.extract_strided_slice %154 {offsets = [0, 32], sizes = [8, 32], strides = [1, 1]} : vector<8x128xf32> to vector<8x32xf32>
    %157 = vector.extract_strided_slice %154 {offsets = [0, 64], sizes = [8, 32], strides = [1, 1]} : vector<8x128xf32> to vector<8x32xf32>
    %cst_47 = arith.constant 2.000000e+00 : f32
    %158 = vector.broadcast %cst_47 : f32 to vector<8x32xf32>
    %159 = arith.mulf %158, %157 : vector<8x32xf32>
    %cst_48 = arith.constant 1.000000e+00 : f32
    %160 = vector.broadcast %cst_48 : f32 to vector<8x32xf32>
    %161 = arith.subf %159, %160 : vector<8x32xf32>
    %162 = vector.extract_strided_slice %154 {offsets = [0, 96], sizes = [8, 32], strides = [1, 1]} : vector<8x128xf32> to vector<8x32xf32>
    %163 = arith.mulf %156, %122 : vector<8x32xf32>
    %164 = arith.mulf %155, %161 : vector<8x32xf32>
    %165 = arith.addf %163, %164 : vector<8x32xf32>
    %166 = math.tanh %165 : vector<8x32xf32>
    %167 = arith.mulf %162, %166 : vector<8x32xf32>
    %cst_49 = arith.constant dense<0.000000e+00> : vector<8x128xf32>
    %168 = tpu.matmul %167, %7, %cst_49 {dimension_numbers = #tpu.dot_dimension_numbers<[1], [0], [0], [1], [0, 0, 1, 1], [], []>} : vector<8x32xf32>, vector<32x128xf32>, vector<8x128xf32> -> vector<8x128xf32>
    %169 = arith.addf %168, %146 : vector<8x128xf32>
    %170 = arith.negf %169 : vector<8x128xf32>
    %171 = math.exp %170 : vector<8x128xf32>
    %cst_50 = arith.constant 1.000000e+00 : f32
    %172 = vector.broadcast %cst_50 : f32 to vector<8x128xf32>
    %173 = arith.addf %172, %171 : vector<8x128xf32>
    %174 = arith.divf %172, %173 : vector<8x128xf32>
    %175 = vector.extract_strided_slice %174 {offsets = [0, 0], sizes = [8, 32], strides = [1, 1]} : vector<8x128xf32> to vector<8x32xf32>
    %176 = vector.extract_strided_slice %174 {offsets = [0, 32], sizes = [8, 32], strides = [1, 1]} : vector<8x128xf32> to vector<8x32xf32>
    %177 = vector.extract_strided_slice %174 {offsets = [0, 64], sizes = [8, 32], strides = [1, 1]} : vector<8x128xf32> to vector<8x32xf32>
    %cst_51 = arith.constant 2.000000e+00 : f32
    %178 = vector.broadcast %cst_51 : f32 to vector<8x32xf32>
    %179 = arith.mulf %178, %177 : vector<8x32xf32>
    %cst_52 = arith.constant 1.000000e+00 : f32
    %180 = vector.broadcast %cst_52 : f32 to vector<8x32xf32>
    %181 = arith.subf %179, %180 : vector<8x32xf32>
    %182 = vector.extract_strided_slice %174 {offsets = [0, 96], sizes = [8, 32], strides = [1, 1]} : vector<8x128xf32> to vector<8x32xf32>
    %183 = arith.mulf %176, %142 : vector<8x32xf32>
    %184 = arith.mulf %175, %181 : vector<8x32xf32>
    %185 = arith.addf %183, %184 : vector<8x32xf32>
    %186 = math.tanh %185 : vector<8x32xf32>
    %187 = arith.mulf %182, %186 : vector<8x32xf32>
    %cst_53 = arith.constant dense<0.000000e+00> : vector<8x128xf32>
    %188 = tpu.matmul %187, %8, %cst_53 {dimension_numbers = #tpu.dot_dimension_numbers<[1], [0], [0], [1], [0, 0, 1, 1], [], []>} : vector<8x32xf32>, vector<32x128xf32>, vector<8x128xf32> -> vector<8x128xf32>
    %189 = arith.addf %188, %11 : vector<8x128xf32>
    %190 = vector.extract_strided_slice %5 {offsets = [32, 0], sizes = [8, 128], strides = [1, 1]} : vector<64x128xf32> to vector<8x128xf32>
    %cst_54 = arith.constant dense<0.000000e+00> : vector<8x128xf32>
    %191 = tpu.matmul %167, %6, %cst_54 {dimension_numbers = #tpu.dot_dimension_numbers<[1], [0], [0], [1], [0, 0, 1, 1], [], []>} : vector<8x32xf32>, vector<32x128xf32>, vector<8x128xf32> -> vector<8x128xf32>
    %192 = arith.addf %190, %191 : vector<8x128xf32>
    %193 = arith.negf %192 : vector<8x128xf32>
    %194 = math.exp %193 : vector<8x128xf32>
    %cst_55 = arith.constant 1.000000e+00 : f32
    %195 = vector.broadcast %cst_55 : f32 to vector<8x128xf32>
    %196 = arith.addf %195, %194 : vector<8x128xf32>
    %197 = arith.divf %195, %196 : vector<8x128xf32>
    %198 = vector.extract_strided_slice %197 {offsets = [0, 0], sizes = [8, 32], strides = [1, 1]} : vector<8x128xf32> to vector<8x32xf32>
    %199 = vector.extract_strided_slice %197 {offsets = [0, 32], sizes = [8, 32], strides = [1, 1]} : vector<8x128xf32> to vector<8x32xf32>
    %200 = vector.extract_strided_slice %197 {offsets = [0, 64], sizes = [8, 32], strides = [1, 1]} : vector<8x128xf32> to vector<8x32xf32>
    %cst_56 = arith.constant 2.000000e+00 : f32
    %201 = vector.broadcast %cst_56 : f32 to vector<8x32xf32>
    %202 = arith.mulf %201, %200 : vector<8x32xf32>
    %cst_57 = arith.constant 1.000000e+00 : f32
    %203 = vector.broadcast %cst_57 : f32 to vector<8x32xf32>
    %204 = arith.subf %202, %203 : vector<8x32xf32>
    %205 = vector.extract_strided_slice %197 {offsets = [0, 96], sizes = [8, 32], strides = [1, 1]} : vector<8x128xf32> to vector<8x32xf32>
    %206 = arith.mulf %199, %165 : vector<8x32xf32>
    %207 = arith.mulf %198, %204 : vector<8x32xf32>
    %208 = arith.addf %206, %207 : vector<8x32xf32>
    %209 = math.tanh %208 : vector<8x32xf32>
    %210 = arith.mulf %205, %209 : vector<8x32xf32>
    %cst_58 = arith.constant dense<0.000000e+00> : vector<8x128xf32>
    %211 = tpu.matmul %210, %7, %cst_58 {dimension_numbers = #tpu.dot_dimension_numbers<[1], [0], [0], [1], [0, 0, 1, 1], [], []>} : vector<8x32xf32>, vector<32x128xf32>, vector<8x128xf32> -> vector<8x128xf32>
    %212 = arith.addf %211, %189 : vector<8x128xf32>
    %213 = arith.negf %212 : vector<8x128xf32>
    %214 = math.exp %213 : vector<8x128xf32>
    %cst_59 = arith.constant 1.000000e+00 : f32
    %215 = vector.broadcast %cst_59 : f32 to vector<8x128xf32>
    %216 = arith.addf %215, %214 : vector<8x128xf32>
    %217 = arith.divf %215, %216 : vector<8x128xf32>
    %218 = vector.extract_strided_slice %217 {offsets = [0, 0], sizes = [8, 32], strides = [1, 1]} : vector<8x128xf32> to vector<8x32xf32>
    %219 = vector.extract_strided_slice %217 {offsets = [0, 32], sizes = [8, 32], strides = [1, 1]} : vector<8x128xf32> to vector<8x32xf32>
    %220 = vector.extract_strided_slice %217 {offsets = [0, 64], sizes = [8, 32], strides = [1, 1]} : vector<8x128xf32> to vector<8x32xf32>
    %cst_60 = arith.constant 2.000000e+00 : f32
    %221 = vector.broadcast %cst_60 : f32 to vector<8x32xf32>
    %222 = arith.mulf %221, %220 : vector<8x32xf32>
    %cst_61 = arith.constant 1.000000e+00 : f32
    %223 = vector.broadcast %cst_61 : f32 to vector<8x32xf32>
    %224 = arith.subf %222, %223 : vector<8x32xf32>
    %225 = vector.extract_strided_slice %217 {offsets = [0, 96], sizes = [8, 32], strides = [1, 1]} : vector<8x128xf32> to vector<8x32xf32>
    %226 = arith.mulf %219, %185 : vector<8x32xf32>
    %227 = arith.mulf %218, %224 : vector<8x32xf32>
    %228 = arith.addf %226, %227 : vector<8x32xf32>
    %229 = math.tanh %228 : vector<8x32xf32>
    %230 = arith.mulf %225, %229 : vector<8x32xf32>
    %cst_62 = arith.constant dense<0.000000e+00> : vector<8x128xf32>
    %231 = tpu.matmul %230, %8, %cst_62 {dimension_numbers = #tpu.dot_dimension_numbers<[1], [0], [0], [1], [0, 0, 1, 1], [], []>} : vector<8x32xf32>, vector<32x128xf32>, vector<8x128xf32> -> vector<8x128xf32>
    %232 = arith.addf %231, %11 : vector<8x128xf32>
    %233 = vector.extract_strided_slice %5 {offsets = [40, 0], sizes = [8, 128], strides = [1, 1]} : vector<64x128xf32> to vector<8x128xf32>
    %cst_63 = arith.constant dense<0.000000e+00> : vector<8x128xf32>
    %234 = tpu.matmul %210, %6, %cst_63 {dimension_numbers = #tpu.dot_dimension_numbers<[1], [0], [0], [1], [0, 0, 1, 1], [], []>} : vector<8x32xf32>, vector<32x128xf32>, vector<8x128xf32> -> vector<8x128xf32>
    %235 = arith.addf %233, %234 : vector<8x128xf32>
    %236 = arith.negf %235 : vector<8x128xf32>
    %237 = math.exp %236 : vector<8x128xf32>
    %cst_64 = arith.constant 1.000000e+00 : f32
    %238 = vector.broadcast %cst_64 : f32 to vector<8x128xf32>
    %239 = arith.addf %238, %237 : vector<8x128xf32>
    %240 = arith.divf %238, %239 : vector<8x128xf32>
    %241 = vector.extract_strided_slice %240 {offsets = [0, 0], sizes = [8, 32], strides = [1, 1]} : vector<8x128xf32> to vector<8x32xf32>
    %242 = vector.extract_strided_slice %240 {offsets = [0, 32], sizes = [8, 32], strides = [1, 1]} : vector<8x128xf32> to vector<8x32xf32>
    %243 = vector.extract_strided_slice %240 {offsets = [0, 64], sizes = [8, 32], strides = [1, 1]} : vector<8x128xf32> to vector<8x32xf32>
    %cst_65 = arith.constant 2.000000e+00 : f32
    %244 = vector.broadcast %cst_65 : f32 to vector<8x32xf32>
    %245 = arith.mulf %244, %243 : vector<8x32xf32>
    %cst_66 = arith.constant 1.000000e+00 : f32
    %246 = vector.broadcast %cst_66 : f32 to vector<8x32xf32>
    %247 = arith.subf %245, %246 : vector<8x32xf32>
    %248 = vector.extract_strided_slice %240 {offsets = [0, 96], sizes = [8, 32], strides = [1, 1]} : vector<8x128xf32> to vector<8x32xf32>
    %249 = arith.mulf %242, %208 : vector<8x32xf32>
    %250 = arith.mulf %241, %247 : vector<8x32xf32>
    %251 = arith.addf %249, %250 : vector<8x32xf32>
    %252 = math.tanh %251 : vector<8x32xf32>
    %253 = arith.mulf %248, %252 : vector<8x32xf32>
    %cst_67 = arith.constant dense<0.000000e+00> : vector<8x128xf32>
    %254 = tpu.matmul %253, %7, %cst_67 {dimension_numbers = #tpu.dot_dimension_numbers<[1], [0], [0], [1], [0, 0, 1, 1], [], []>} : vector<8x32xf32>, vector<32x128xf32>, vector<8x128xf32> -> vector<8x128xf32>
    %255 = arith.addf %254, %232 : vector<8x128xf32>
    %256 = arith.negf %255 : vector<8x128xf32>
    %257 = math.exp %256 : vector<8x128xf32>
    %cst_68 = arith.constant 1.000000e+00 : f32
    %258 = vector.broadcast %cst_68 : f32 to vector<8x128xf32>
    %259 = arith.addf %258, %257 : vector<8x128xf32>
    %260 = arith.divf %258, %259 : vector<8x128xf32>
    %261 = vector.extract_strided_slice %260 {offsets = [0, 0], sizes = [8, 32], strides = [1, 1]} : vector<8x128xf32> to vector<8x32xf32>
    %262 = vector.extract_strided_slice %260 {offsets = [0, 32], sizes = [8, 32], strides = [1, 1]} : vector<8x128xf32> to vector<8x32xf32>
    %263 = vector.extract_strided_slice %260 {offsets = [0, 64], sizes = [8, 32], strides = [1, 1]} : vector<8x128xf32> to vector<8x32xf32>
    %cst_69 = arith.constant 2.000000e+00 : f32
    %264 = vector.broadcast %cst_69 : f32 to vector<8x32xf32>
    %265 = arith.mulf %264, %263 : vector<8x32xf32>
    %cst_70 = arith.constant 1.000000e+00 : f32
    %266 = vector.broadcast %cst_70 : f32 to vector<8x32xf32>
    %267 = arith.subf %265, %266 : vector<8x32xf32>
    %268 = vector.extract_strided_slice %260 {offsets = [0, 96], sizes = [8, 32], strides = [1, 1]} : vector<8x128xf32> to vector<8x32xf32>
    %269 = arith.mulf %262, %228 : vector<8x32xf32>
    %270 = arith.mulf %261, %267 : vector<8x32xf32>
    %271 = arith.addf %269, %270 : vector<8x32xf32>
    %272 = math.tanh %271 : vector<8x32xf32>
    %273 = arith.mulf %268, %272 : vector<8x32xf32>
    %cst_71 = arith.constant dense<0.000000e+00> : vector<8x128xf32>
    %274 = tpu.matmul %273, %8, %cst_71 {dimension_numbers = #tpu.dot_dimension_numbers<[1], [0], [0], [1], [0, 0, 1, 1], [], []>} : vector<8x32xf32>, vector<32x128xf32>, vector<8x128xf32> -> vector<8x128xf32>
    %275 = arith.addf %274, %11 : vector<8x128xf32>
    %276 = vector.extract_strided_slice %5 {offsets = [48, 0], sizes = [8, 128], strides = [1, 1]} : vector<64x128xf32> to vector<8x128xf32>
    %cst_72 = arith.constant dense<0.000000e+00> : vector<8x128xf32>
    %277 = tpu.matmul %253, %6, %cst_72 {dimension_numbers = #tpu.dot_dimension_numbers<[1], [0], [0], [1], [0, 0, 1, 1], [], []>} : vector<8x32xf32>, vector<32x128xf32>, vector<8x128xf32> -> vector<8x128xf32>
    %278 = arith.addf %276, %277 : vector<8x128xf32>
    %279 = arith.negf %278 : vector<8x128xf32>
    %280 = math.exp %279 : vector<8x128xf32>
    %cst_73 = arith.constant 1.000000e+00 : f32
    %281 = vector.broadcast %cst_73 : f32 to vector<8x128xf32>
    %282 = arith.addf %281, %280 : vector<8x128xf32>
    %283 = arith.divf %281, %282 : vector<8x128xf32>
    %284 = vector.extract_strided_slice %283 {offsets = [0, 0], sizes = [8, 32], strides = [1, 1]} : vector<8x128xf32> to vector<8x32xf32>
    %285 = vector.extract_strided_slice %283 {offsets = [0, 32], sizes = [8, 32], strides = [1, 1]} : vector<8x128xf32> to vector<8x32xf32>
    %286 = vector.extract_strided_slice %283 {offsets = [0, 64], sizes = [8, 32], strides = [1, 1]} : vector<8x128xf32> to vector<8x32xf32>
    %cst_74 = arith.constant 2.000000e+00 : f32
    %287 = vector.broadcast %cst_74 : f32 to vector<8x32xf32>
    %288 = arith.mulf %287, %286 : vector<8x32xf32>
    %cst_75 = arith.constant 1.000000e+00 : f32
    %289 = vector.broadcast %cst_75 : f32 to vector<8x32xf32>
    %290 = arith.subf %288, %289 : vector<8x32xf32>
    %291 = vector.extract_strided_slice %283 {offsets = [0, 96], sizes = [8, 32], strides = [1, 1]} : vector<8x128xf32> to vector<8x32xf32>
    %292 = arith.mulf %285, %251 : vector<8x32xf32>
    %293 = arith.mulf %284, %290 : vector<8x32xf32>
    %294 = arith.addf %292, %293 : vector<8x32xf32>
    %295 = math.tanh %294 : vector<8x32xf32>
    %296 = arith.mulf %291, %295 : vector<8x32xf32>
    %cst_76 = arith.constant dense<0.000000e+00> : vector<8x128xf32>
    %297 = tpu.matmul %296, %7, %cst_76 {dimension_numbers = #tpu.dot_dimension_numbers<[1], [0], [0], [1], [0, 0, 1, 1], [], []>} : vector<8x32xf32>, vector<32x128xf32>, vector<8x128xf32> -> vector<8x128xf32>
    %298 = arith.addf %297, %275 : vector<8x128xf32>
    %299 = arith.negf %298 : vector<8x128xf32>
    %300 = math.exp %299 : vector<8x128xf32>
    %cst_77 = arith.constant 1.000000e+00 : f32
    %301 = vector.broadcast %cst_77 : f32 to vector<8x128xf32>
    %302 = arith.addf %301, %300 : vector<8x128xf32>
    %303 = arith.divf %301, %302 : vector<8x128xf32>
    %304 = vector.extract_strided_slice %303 {offsets = [0, 0], sizes = [8, 32], strides = [1, 1]} : vector<8x128xf32> to vector<8x32xf32>
    %305 = vector.extract_strided_slice %303 {offsets = [0, 32], sizes = [8, 32], strides = [1, 1]} : vector<8x128xf32> to vector<8x32xf32>
    %306 = vector.extract_strided_slice %303 {offsets = [0, 64], sizes = [8, 32], strides = [1, 1]} : vector<8x128xf32> to vector<8x32xf32>
    %cst_78 = arith.constant 2.000000e+00 : f32
    %307 = vector.broadcast %cst_78 : f32 to vector<8x32xf32>
    %308 = arith.mulf %307, %306 : vector<8x32xf32>
    %cst_79 = arith.constant 1.000000e+00 : f32
    %309 = vector.broadcast %cst_79 : f32 to vector<8x32xf32>
    %310 = arith.subf %308, %309 : vector<8x32xf32>
    %311 = vector.extract_strided_slice %303 {offsets = [0, 96], sizes = [8, 32], strides = [1, 1]} : vector<8x128xf32> to vector<8x32xf32>
    %312 = arith.mulf %305, %271 : vector<8x32xf32>
    %313 = arith.mulf %304, %310 : vector<8x32xf32>
    %314 = arith.addf %312, %313 : vector<8x32xf32>
    %315 = math.tanh %314 : vector<8x32xf32>
    %316 = arith.mulf %311, %315 : vector<8x32xf32>
    %cst_80 = arith.constant dense<0.000000e+00> : vector<8x128xf32>
    %317 = tpu.matmul %316, %8, %cst_80 {dimension_numbers = #tpu.dot_dimension_numbers<[1], [0], [0], [1], [0, 0, 1, 1], [], []>} : vector<8x32xf32>, vector<32x128xf32>, vector<8x128xf32> -> vector<8x128xf32>
    %318 = arith.addf %317, %11 : vector<8x128xf32>
    %319 = vector.extract_strided_slice %5 {offsets = [56, 0], sizes = [8, 128], strides = [1, 1]} : vector<64x128xf32> to vector<8x128xf32>
    %cst_81 = arith.constant dense<0.000000e+00> : vector<8x128xf32>
    %320 = tpu.matmul %296, %6, %cst_81 {dimension_numbers = #tpu.dot_dimension_numbers<[1], [0], [0], [1], [0, 0, 1, 1], [], []>} : vector<8x32xf32>, vector<32x128xf32>, vector<8x128xf32> -> vector<8x128xf32>
    %321 = arith.addf %319, %320 : vector<8x128xf32>
    %322 = arith.negf %321 : vector<8x128xf32>
    %323 = math.exp %322 : vector<8x128xf32>
    %cst_82 = arith.constant 1.000000e+00 : f32
    %324 = vector.broadcast %cst_82 : f32 to vector<8x128xf32>
    %325 = arith.addf %324, %323 : vector<8x128xf32>
    %326 = arith.divf %324, %325 : vector<8x128xf32>
    %327 = vector.extract_strided_slice %326 {offsets = [0, 0], sizes = [8, 32], strides = [1, 1]} : vector<8x128xf32> to vector<8x32xf32>
    %328 = vector.extract_strided_slice %326 {offsets = [0, 32], sizes = [8, 32], strides = [1, 1]} : vector<8x128xf32> to vector<8x32xf32>
    %329 = vector.extract_strided_slice %326 {offsets = [0, 64], sizes = [8, 32], strides = [1, 1]} : vector<8x128xf32> to vector<8x32xf32>
    %cst_83 = arith.constant 2.000000e+00 : f32
    %330 = vector.broadcast %cst_83 : f32 to vector<8x32xf32>
    %331 = arith.mulf %330, %329 : vector<8x32xf32>
    %cst_84 = arith.constant 1.000000e+00 : f32
    %332 = vector.broadcast %cst_84 : f32 to vector<8x32xf32>
    %333 = arith.subf %331, %332 : vector<8x32xf32>
    %334 = vector.extract_strided_slice %326 {offsets = [0, 96], sizes = [8, 32], strides = [1, 1]} : vector<8x128xf32> to vector<8x32xf32>
    %335 = arith.mulf %328, %294 : vector<8x32xf32>
    %336 = arith.mulf %327, %333 : vector<8x32xf32>
    %337 = arith.addf %335, %336 : vector<8x32xf32>
    %338 = math.tanh %337 : vector<8x32xf32>
    %339 = arith.mulf %334, %338 : vector<8x32xf32>
    %cst_85 = arith.constant dense<0.000000e+00> : vector<8x128xf32>
    %340 = tpu.matmul %339, %7, %cst_85 {dimension_numbers = #tpu.dot_dimension_numbers<[1], [0], [0], [1], [0, 0, 1, 1], [], []>} : vector<8x32xf32>, vector<32x128xf32>, vector<8x128xf32> -> vector<8x128xf32>
    %341 = arith.addf %340, %318 : vector<8x128xf32>
    %342 = arith.negf %341 : vector<8x128xf32>
    %343 = math.exp %342 : vector<8x128xf32>
    %cst_86 = arith.constant 1.000000e+00 : f32
    %344 = vector.broadcast %cst_86 : f32 to vector<8x128xf32>
    %345 = arith.addf %344, %343 : vector<8x128xf32>
    %346 = arith.divf %344, %345 : vector<8x128xf32>
    %347 = vector.extract_strided_slice %346 {offsets = [0, 0], sizes = [8, 32], strides = [1, 1]} : vector<8x128xf32> to vector<8x32xf32>
    %348 = vector.extract_strided_slice %346 {offsets = [0, 32], sizes = [8, 32], strides = [1, 1]} : vector<8x128xf32> to vector<8x32xf32>
    %349 = vector.extract_strided_slice %346 {offsets = [0, 64], sizes = [8, 32], strides = [1, 1]} : vector<8x128xf32> to vector<8x32xf32>
    %cst_87 = arith.constant 2.000000e+00 : f32
    %350 = vector.broadcast %cst_87 : f32 to vector<8x32xf32>
    %351 = arith.mulf %350, %349 : vector<8x32xf32>
    %cst_88 = arith.constant 1.000000e+00 : f32
    %352 = vector.broadcast %cst_88 : f32 to vector<8x32xf32>
    %353 = arith.subf %351, %352 : vector<8x32xf32>
    %354 = vector.extract_strided_slice %346 {offsets = [0, 96], sizes = [8, 32], strides = [1, 1]} : vector<8x128xf32> to vector<8x32xf32>
    %355 = arith.mulf %348, %314 : vector<8x32xf32>
    %356 = arith.mulf %347, %353 : vector<8x32xf32>
    %357 = arith.addf %355, %356 : vector<8x32xf32>
    %358 = math.tanh %357 : vector<8x32xf32>
    %359 = arith.mulf %354, %358 : vector<8x32xf32>
    %360 = tpu.concatenate %58, %101, %144, %187, %230, %273, %316, %359 in 0 : vector<8x32xf32>, vector<8x32xf32>, vector<8x32xf32>, vector<8x32xf32>, vector<8x32xf32>, vector<8x32xf32>, vector<8x32xf32>, vector<8x32xf32> -> vector<64x32xf32>
    %c0_89 = arith.constant 0 : index
    %c0_90 = arith.constant 0 : index
    %361 = vector.load %arg7[%c0_89, %c0_90] : memref<32x64xf32, #tpu.memory_space<vmem>>, vector<32x64xf32>
    %cst_91 = arith.constant dense<0.000000e+00> : vector<64x64xf32>
    %362 = tpu.matmul %360, %361, %cst_91 {dimension_numbers = #tpu.dot_dimension_numbers<[1], [0], [0], [1], [0, 0, 1, 1], [], []>} : vector<64x32xf32>, vector<32x64xf32>, vector<64x64xf32> -> vector<64x64xf32>
    %c0_92 = arith.constant 0 : index
    %c0_93 = arith.constant 0 : index
    %363 = vector.load %arg8[%c0_92, %c0_93] : memref<1x64xf32, #tpu.memory_space<vmem>>, vector<1x64xf32>
    %364 = vector.broadcast %363 : vector<1x64xf32> to vector<64x64xf32>
    %365 = arith.addf %362, %364 : vector<64x64xf32>
    %366 = math.tanh %365 : vector<64x64xf32>
    %c0_94 = arith.constant 0 : index
    %c0_95 = arith.constant 0 : index
    %367 = vector.load %arg9[%c0_94, %c0_95] : memref<1x64xf32, #tpu.memory_space<vmem>>, vector<1x64xf32>
    %368 = vector.broadcast %367 : vector<1x64xf32> to vector<64x64xf32>
    %369 = arith.mulf %366, %368 : vector<64x64xf32>
    %cst_96 = arith.constant dense<0.000000e+00> : vector<64xf32>
    %370 = vector.multi_reduction <add>, %369, %cst_96 [1] : vector<64x64xf32> to vector<64xf32>
    %371 = vector.shape_cast %370 : vector<64xf32> to vector<64x1xf32>
    %c0_97 = arith.constant 0 : index
    %c0_98 = arith.constant 0 : index
    %372 = vector.load %arg10[%c0_97, %c0_98] : memref<1x1xf32, #tpu.memory_space<vmem>>, vector<1x1xf32>
    %373 = vector.broadcast %372 : vector<1x1xf32> to vector<64x1xf32>
    %374 = arith.addf %371, %373 : vector<64x1xf32>
    %375 = vector.extract_strided_slice %374 {offsets = [0, 0], sizes = [8, 1], strides = [1, 1]} : vector<64x1xf32> to vector<8x1xf32>
    %376 = vector.extract_strided_slice %374 {offsets = [8, 0], sizes = [8, 1], strides = [1, 1]} : vector<64x1xf32> to vector<8x1xf32>
    %377 = vector.extract_strided_slice %374 {offsets = [16, 0], sizes = [8, 1], strides = [1, 1]} : vector<64x1xf32> to vector<8x1xf32>
    %378 = vector.extract_strided_slice %374 {offsets = [24, 0], sizes = [8, 1], strides = [1, 1]} : vector<64x1xf32> to vector<8x1xf32>
    %379 = vector.extract_strided_slice %374 {offsets = [32, 0], sizes = [8, 1], strides = [1, 1]} : vector<64x1xf32> to vector<8x1xf32>
    %380 = vector.extract_strided_slice %374 {offsets = [40, 0], sizes = [8, 1], strides = [1, 1]} : vector<64x1xf32> to vector<8x1xf32>
    %381 = vector.extract_strided_slice %374 {offsets = [48, 0], sizes = [8, 1], strides = [1, 1]} : vector<64x1xf32> to vector<8x1xf32>
    %382 = vector.extract_strided_slice %374 {offsets = [56, 0], sizes = [8, 1], strides = [1, 1]} : vector<64x1xf32> to vector<8x1xf32>
    %383 = tpu.concatenate %375, %376, %377, %378, %379, %380, %381, %382 in 1 : vector<8x1xf32>, vector<8x1xf32>, vector<8x1xf32>, vector<8x1xf32>, vector<8x1xf32>, vector<8x1xf32>, vector<8x1xf32>, vector<8x1xf32> -> vector<8x8xf32>
    %cst_99 = arith.constant dense<0xFF800000> : vector<8xf32>
    %384 = vector.multi_reduction <maximumf>, %383, %cst_99 [1] : vector<8x8xf32> to vector<8xf32>
    %385 = vector.shape_cast %384 : vector<8xf32> to vector<8x1xf32>
    %386 = vector.broadcast %385 : vector<8x1xf32> to vector<8x8xf32>
    %387 = arith.subf %383, %386 : vector<8x8xf32>
    %388 = math.exp %387 : vector<8x8xf32>
    %cst_100 = arith.constant dense<0.000000e+00> : vector<8xf32>
    %389 = vector.multi_reduction <add>, %388, %cst_100 [1] : vector<8x8xf32> to vector<8xf32>
    %390 = vector.shape_cast %389 : vector<8xf32> to vector<8x1xf32>
    %cst_101 = arith.constant 0.000000e+00 : f32
    %391 = vector.broadcast %cst_101 : f32 to vector<8x32xf32>
    %392 = vector.extract_strided_slice %388 {offsets = [0, 0], sizes = [8, 1], strides = [1, 1]} : vector<8x8xf32> to vector<8x1xf32>
    %393 = vector.broadcast %392 : vector<8x1xf32> to vector<8x32xf32>
    %394 = arith.mulf %393, %58 : vector<8x32xf32>
    %395 = arith.addf %391, %394 : vector<8x32xf32>
    %396 = vector.extract_strided_slice %388 {offsets = [0, 1], sizes = [8, 1], strides = [1, 1]} : vector<8x8xf32> to vector<8x1xf32>
    %397 = vector.broadcast %396 : vector<8x1xf32> to vector<8x32xf32>
    %398 = arith.mulf %397, %101 : vector<8x32xf32>
    %399 = arith.addf %395, %398 : vector<8x32xf32>
    %400 = vector.extract_strided_slice %388 {offsets = [0, 2], sizes = [8, 1], strides = [1, 1]} : vector<8x8xf32> to vector<8x1xf32>
    %401 = vector.broadcast %400 : vector<8x1xf32> to vector<8x32xf32>
    %402 = arith.mulf %401, %144 : vector<8x32xf32>
    %403 = arith.addf %399, %402 : vector<8x32xf32>
    %404 = vector.extract_strided_slice %388 {offsets = [0, 3], sizes = [8, 1], strides = [1, 1]} : vector<8x8xf32> to vector<8x1xf32>
    %405 = vector.broadcast %404 : vector<8x1xf32> to vector<8x32xf32>
    %406 = arith.mulf %405, %187 : vector<8x32xf32>
    %407 = arith.addf %403, %406 : vector<8x32xf32>
    %408 = vector.extract_strided_slice %388 {offsets = [0, 4], sizes = [8, 1], strides = [1, 1]} : vector<8x8xf32> to vector<8x1xf32>
    %409 = vector.broadcast %408 : vector<8x1xf32> to vector<8x32xf32>
    %410 = arith.mulf %409, %230 : vector<8x32xf32>
    %411 = arith.addf %407, %410 : vector<8x32xf32>
    %412 = vector.extract_strided_slice %388 {offsets = [0, 5], sizes = [8, 1], strides = [1, 1]} : vector<8x8xf32> to vector<8x1xf32>
    %413 = vector.broadcast %412 : vector<8x1xf32> to vector<8x32xf32>
    %414 = arith.mulf %413, %273 : vector<8x32xf32>
    %415 = arith.addf %411, %414 : vector<8x32xf32>
    %416 = vector.extract_strided_slice %388 {offsets = [0, 6], sizes = [8, 1], strides = [1, 1]} : vector<8x8xf32> to vector<8x1xf32>
    %417 = vector.broadcast %416 : vector<8x1xf32> to vector<8x32xf32>
    %418 = arith.mulf %417, %316 : vector<8x32xf32>
    %419 = arith.addf %415, %418 : vector<8x32xf32>
    %420 = vector.extract_strided_slice %388 {offsets = [0, 7], sizes = [8, 1], strides = [1, 1]} : vector<8x8xf32> to vector<8x1xf32>
    %421 = vector.broadcast %420 : vector<8x1xf32> to vector<8x32xf32>
    %422 = arith.mulf %421, %359 : vector<8x32xf32>
    %423 = arith.addf %419, %422 : vector<8x32xf32>
    %424 = vector.broadcast %390 : vector<8x1xf32> to vector<8x32xf32>
    %425 = arith.divf %423, %424 : vector<8x32xf32>
    %c0_102 = arith.constant 0 : index
    %c0_103 = arith.constant 0 : index
    %426 = vector.load %arg11[%c0_102, %c0_103] : memref<32x1xf32, #tpu.memory_space<vmem>>, vector<32x1xf32>
    %cst_104 = arith.constant dense<0.000000e+00> : vector<8x1xf32>
    %427 = tpu.matmul %425, %426, %cst_104 {dimension_numbers = #tpu.dot_dimension_numbers<[1], [0], [0], [1], [0, 0, 1, 1], [], []>} : vector<8x32xf32>, vector<32x1xf32>, vector<8x1xf32> -> vector<8x1xf32>
    %c0_105 = arith.constant 0 : index
    %c0_106 = arith.constant 0 : index
    %428 = vector.load %arg12[%c0_105, %c0_106] : memref<1x1xf32, #tpu.memory_space<vmem>>, vector<1x1xf32>
    %429 = vector.broadcast %428 : vector<1x1xf32> to vector<8x1xf32>
    %430 = arith.addf %427, %429 : vector<8x1xf32>
    %c0_107 = arith.constant 0 : index
    %c0_108 = arith.constant 0 : index
    %431 = vector.load %arg13[%c0_107, %c0_108] : memref<8x1xf32, #tpu.memory_space<vmem>>, vector<8x1xf32>
    tpu.vector_store %arg13[%c0_107, %c0_108], %430 {strides = array<i32>} : memref<8x1xf32, #tpu.memory_space<vmem>>, vector<8x1xf32>,
    return
  }
}

</mosaic_0001>

<llo_original>
// kernel: attention_lstm_forward.1
$region0: #{attention_lstm_forward.1}
  #allocation0 [shape = 'u32[]', space=smem, size = 0x4, offset = 0x4, fixed_abs, tag = 'smem constant byte address 0x4 - core index']
  #allocation1 [shape = 'u32[144,128]{1,0:T(1,128)}', space=vmem, size = 0x12000, scoped, tag = 'internal scratch']
  #allocation2 [shape = 'f32[1,1]{1,0:T(1,128)S(1)}', space=vmem, size = 0x200, scoped, tag = 'scoped memory for attention_lstm_forward.1']
  #allocation3 [shape = 'f32[1,1]{1,0:T(1,128)S(1)}', space=vmem, size = 0x200, scoped, tag = 'scoped memory for attention_lstm_forward.1']
  %s0 = inlined_call_operand.vmem [shape: f32[64,7], index: 0, kind: input, shape index: {}]
  %s1 = inlined_call_operand.vmem [shape: f32[7,128], index: 1, kind: input, shape index: {}]
  %s2 = inlined_call_operand.vmem [shape: f32[32,128], index: 2, kind: input, shape index: {}]
  %s3 = inlined_call_operand.vmem [shape: f32[1,128], index: 3, kind: input, shape index: {}]
  %s4 = inlined_call_operand.vmem [shape: f32[32,128], index: 4, kind: input, shape index: {}]
  %s5 = inlined_call_operand.vmem [shape: f32[32,128], index: 5, kind: input, shape index: {}]
  %s6 = inlined_call_operand.vmem [shape: f32[1,128], index: 6, kind: input, shape index: {}]
  %s7 = inlined_call_operand.vmem [shape: f32[32,64], index: 7, kind: input, shape index: {}]
  %s8 = inlined_call_operand.vmem [shape: f32[1,64], index: 8, kind: input, shape index: {}]
  %s9 = inlined_call_operand.vmem [shape: f32[1,64], index: 9, kind: input, shape index: {}]
  %s10 = inlined_call_operand.<no memory space> [shape: f32[1,1], index: 10, kind: input, shape index: {}]
  %s11 = inlined_call_operand.vmem [shape: f32[32,1], index: 11, kind: input, shape index: {}]
  %s12 = inlined_call_operand.<no memory space> [shape: f32[1,1], index: 12, kind: input, shape index: {}]
  %s13 = inlined_call_operand.vmem [shape: f32[8,1], index: 13, kind: output, shape index: {}]
  %s14 = sld [smem:[#allocation0]]
  $region62: #{attention_lstm_forward.1} parent=0
    _
  %s16 = ssub.s32 1, %s14
  %s17 = scalar_select 0, %s16, %s14
  %v18 = vstv %s10
  %19 = vst [vmem:[#allocation2] sm:$0x1] %v18
  %v20 = vstv %s12
  %21 = vst [vmem:[#allocation3] sm:$0x1] %v20
  // Predicated region
  $region2: #{attention_lstm_forward.1} parent=0 // pred_check
    _
  $region3: #{attention_lstm_forward.1} parent=0 // pred_check_branch
    %23 = sbr.rel (0) target = $region5
  $region4: #{attention_lstm_forward.1} parent=0 // pred_region
    _
  $region5: #{attention_lstm_forward.1} parent=0 // pred_fallthru
    _
  // Predicated region
  $region6: #{attention_lstm_forward.1} parent=0 // pred_check
    _
  $region7: #{attention_lstm_forward.1} parent=0 // pred_check_branch
    %25 = sbr.rel (0) target = $region9
  $region8: #{attention_lstm_forward.1} parent=0 // pred_region
    _
  $region9: #{attention_lstm_forward.1} parent=0 // pred_fallthru
    _
  // Predicated region
  $region10: #{attention_lstm_forward.1} parent=0 // pred_check
    _
  $region11: #{attention_lstm_forward.1} parent=0 // pred_check_branch
    %27 = sbr.rel (0) target = $region13
  $region12: #{attention_lstm_forward.1} parent=0 // pred_region
    _
  $region13: #{attention_lstm_forward.1} parent=0 // pred_fallthru
    _
  // Predicated region
  $region14: #{attention_lstm_forward.1} parent=0 // pred_check
    _
  $region15: #{attention_lstm_forward.1} parent=0 // pred_check_branch
    %29 = sbr.rel (0) target = $region17
  $region16: #{attention_lstm_forward.1} parent=0 // pred_region
    _
  $region17: #{attention_lstm_forward.1} parent=0 // pred_fallthru
    _
  // Predicated region
  $region18: #{attention_lstm_forward.1} parent=0 // pred_check
    _
  $region19: #{attention_lstm_forward.1} parent=0 // pred_check_branch
    %31 = sbr.rel (0) target = $region21
  $region20: #{attention_lstm_forward.1} parent=0 // pred_region
    _
  $region21: #{attention_lstm_forward.1} parent=0 // pred_fallthru
    _
  // Predicated region
  $region22: #{attention_lstm_forward.1} parent=0 // pred_check
    _
  $region23: #{attention_lstm_forward.1} parent=0 // pred_check_branch
    %33 = sbr.rel (0) target = $region25
  $region24: #{attention_lstm_forward.1} parent=0 // pred_region
    _
  $region25: #{attention_lstm_forward.1} parent=0 // pred_fallthru
    _
  // Predicated region
  $region26: #{attention_lstm_forward.1} parent=0 // pred_check
    _
  $region27: #{attention_lstm_forward.1} parent=0 // pred_check_branch
    %35 = sbr.rel (0) target = $region29
  $region28: #{attention_lstm_forward.1} parent=0 // pred_region
    _
  $region29: #{attention_lstm_forward.1} parent=0 // pred_fallthru
    _
  // Predicated region
  $region30: #{attention_lstm_forward.1} parent=0 // pred_check
    _
  $region31: #{attention_lstm_forward.1} parent=0 // pred_check_branch
    %37 = sbr.rel (0) target = $region33
  $region32: #{attention_lstm_forward.1} parent=0 // pred_region
    _
  $region33: #{attention_lstm_forward.1} parent=0 // pred_fallthru
    _
  // Predicated region
  $region34: #{attention_lstm_forward.1} parent=0 // pred_check
    _
  $region35: #{attention_lstm_forward.1} parent=0 // pred_check_branch
    %39 = sbr.rel (0) target = $region37
  $region36: #{attention_lstm_forward.1} parent=0 // pred_region
    _
  $region37: #{attention_lstm_forward.1} parent=0 // pred_fallthru
    _
  // Predicated region
  $region38: #{attention_lstm_forward.1} parent=0 // pred_check
    _
  $region39: #{attention_lstm_forward.1} parent=0 // pred_check_branch
    %41 = sbr.rel (0) target = $region41
  $region40: #{attention_lstm_forward.1} parent=0 // pred_region
    _
  $region41: #{attention_lstm_forward.1} parent=0 // pred_fallthru
    _
  // Predicated region
  $region42: #{attention_lstm_forward.1} parent=0 // pred_check
    _
  $region43: #{attention_lstm_forward.1} parent=0 // pred_check_branch
    %43 = sbr.rel (0) target = $region45
  $region44: #{attention_lstm_forward.1} parent=0 // pred_region
    _
  $region45: #{attention_lstm_forward.1} parent=0 // pred_fallthru
    _
  // Predicated region
  $region46: #{attention_lstm_forward.1} parent=0 // pred_check
    _
  $region47: #{attention_lstm_forward.1} parent=0 // pred_check_branch
    %45 = sbr.rel (0) target = $region49
  $region48: #{attention_lstm_forward.1} parent=0 // pred_region
    _
  $region49: #{attention_lstm_forward.1} parent=0 // pred_fallthru
    _
  // Predicated region
  $region50: #{attention_lstm_forward.1} parent=0 // pred_check
    _
  $region51: #{attention_lstm_forward.1} parent=0 // pred_check_branch
    %47 = sbr.rel (0) target = $region53
  $region52: #{attention_lstm_forward.1} parent=0 // pred_region
    _
  $region53: #{attention_lstm_forward.1} parent=0 // pred_fallthru
    _
  %v48 = vld [vmem:[%s0] sm:$0xff]
  %v49 = vld [vmem:[%s0 + $0x8] sm:$0xff]
  %v50 = vld [vmem:[%s0 + $0x10] sm:$0xff]
  %v51 = vld [vmem:[%s0 + $0x18] sm:$0xff]
  %v52 = vld [vmem:[%s0 + $0x20] sm:$0xff]
  %v53 = vld [vmem:[%s0 + $0x28] sm:$0xff]
  %v54 = vld [vmem:[%s0 + $0x30] sm:$0xff]
  %v55 = vld [vmem:[%s0 + $0x38] sm:$0xff]
  %v56 = vld [vmem:[%s1] sm:$0x7f]
  %v57 = vld [vmem:[%s3] sm:$0x1]
  %v59 = vlaneseq
  %v60 = vshrl.u32 %v59, 7
  %v61 = vsub.s32 0, %v60
  %v62 = vrot.slane %v57, %v61
  %vm64 = vcmask 56320
  %v66 = vsel %vm64, %v48, 0
  %v69 = vsel %vm64, %v49, 0
  %v72 = vsel %vm64, %v50, 0
  %v75 = vsel %vm64, %v51, 0
  %v78 = vsel %vm64, %v52, 0
  %v81 = vsel %vm64, %v53, 0
  %v84 = vsel %vm64, %v54, 0
  %v87 = vsel %vm64, %v55, 0
  %vm89 = vcmask 1046528
  %v91 = vsel %vm89, %v56, 0
  %93 = vmatprep.subr.mxu0 0.0
  %94 = vmatpush1.msra.mxu0 0.0
  %95 = vmatprep.subr.mxu0 0.0
  %96 = vmatpush1.msra.mxu0 0.0
  %97 = vmatprep.subr.mxu0 0.0
  %98 = vmatpush1.msra.mxu0 0.0
  %99 = vmatprep.subr.mxu0 0.0
  %100 = vmatpush1.msra.mxu0 0.0
  %101 = vmatprep.subr.mxu0 0.0
  %102 = vmatpush1.msra.mxu0 0.0
  %103 = vmatprep.subr.mxu0 0.0
  %104 = vmatpush1.msra.mxu0 0.0
  %105 = vmatprep.subr.mxu0 0.0
  %106 = vmatpush1.msra.mxu0 0.0
  %107 = vmatprep.subr.mxu0 0.0
  %108 = vmatpush1.msra.mxu0 0.0
  %109 = vmatprep.subr.mxu0 0.0
  %110 = vmatpush1.msra.mxu0 0.0
  %111 = vmatprep.subr.mxu0 0.0
  %112 = vmatpush1.msra.mxu0 0.0
  %113 = vmatprep.subr.mxu0 0.0
  %114 = vmatpush1.msra.mxu0 0.0
  %115 = vmatprep.subr.mxu0 0.0
  %116 = vmatpush1.msra.mxu0 0.0
  %117 = vmatprep.subr.mxu0 0.0
  %118 = vmatpush1.msra.mxu0 0.0
  %119 = vmatprep.subr.mxu0 0.0
  %120 = vmatpush1.msra.mxu0 0.0
  %121 = vmatprep.subr.mxu0 0.0
  %122 = vmatpush1.msra.mxu0 0.0
  %123 = vmatprep.subr.mxu0 0.0
  %124 = vmatpush1.msra.mxu0 %v91
  %125 = vmatprep.subr.mxu0 0.0
  %126 = vmatpush2.msra.mxu0 0.0
  %127 = vmatprep.subr.mxu0 0.0
  %128 = vmatpush2.msra.mxu0 0.0
  %129 = vmatprep.subr.mxu0 0.0
  %130 = vmatpush2.msra.mxu0 0.0
  %131 = vmatprep.subr.mxu0 0.0
  %132 = vmatpush2.msra.mxu0 0.0
  %133 = vmatprep.subr.mxu0 0.0
  %134 = vmatpush2.msra.mxu0 0.0
  %135 = vmatprep.subr.mxu0 0.0
  %136 = vmatpush2.msra.mxu0 0.0
  %137 = vmatprep.subr.mxu0 0.0
  %138 = vmatpush2.msra.mxu0 0.0
  %139 = vmatprep.subr.mxu0 0.0
  %140 = vmatpush2.msra.mxu0 0.0
  %141 = vmatprep.subr.mxu0 0.0
  %142 = vmatpush2.msra.mxu0 0.0
  %143 = vmatprep.subr.mxu0 0.0
  %144 = vmatpush2.msra.mxu0 0.0
  %145 = vmatprep.subr.mxu0 0.0
  %146 = vmatpush2.msra.mxu0 0.0
  %147 = vmatprep.subr.mxu0 0.0
  %148 = vmatpush2.msra.mxu0 0.0
  %149 = vmatprep.subr.mxu0 0.0
  %150 = vmatpush2.msra.mxu0 0.0
  %151 = vmatprep.subr.mxu0 0.0
  %152 = vmatpush2.msra.mxu0 0.0
  %153 = vmatprep.subr.mxu0 0.0
  %154 = vmatpush2.msra.mxu0 0.0
  %155 = vmatprep.subr.mxu0 0.0
  %156 = vmatpush2.msra.mxu0 0.0
  %157 = vmatprep.mubr.f32.mxu0 0.0
  %158 = vmatmul.mubr.f32.gmra.mxu0 %v66
  %v159 = vpop.f32.mrf.mxu0
  %v160 = vadd.f32 %v62, %v159
  %v161 = vpop.f32.mrf.mxu0
  %162 = vmatprep.mubr.f32.mxu0 0.0
  %163 = vmatmul.mubr.f32.gmra.mxu0 %v69
  %v164 = vpop.f32.mrf.mxu0
  %v165 = vadd.f32 %v62, %v164
  %v166 = vpop.f32.mrf.mxu0
  %167 = vmatprep.mubr.f32.mxu0 0.0
  %168 = vmatmul.mubr.f32.gmra.mxu0 %v72
  %v169 = vpop.f32.mrf.mxu0
  %v170 = vadd.f32 %v62, %v169
  %v171 = vpop.f32.mrf.mxu0
  %172 = vmatprep.mubr.f32.mxu0 0.0
  %173 = vmatmul.mubr.f32.gmra.mxu0 %v75
  %v174 = vpop.f32.mrf.mxu0
  %v175 = vadd.f32 %v62, %v174
  %v176 = vpop.f32.mrf.mxu0
  %177 = vmatprep.mubr.f32.mxu0 0.0
  %178 = vmatmul.mubr.f32.gmra.mxu0 %v78
  %v179 = vpop.f32.mrf.mxu0
  %v180 = vadd.f32 %v62, %v179
  %v181 = vpop.f32.mrf.mxu0
  %182 = vmatprep.mubr.f32.mxu0 0.0
  %183 = vmatmul.mubr.f32.gmra.mxu0 %v81
  %v184 = vpop.f32.mrf.mxu0
  %v185 = vadd.f32 %v62, %v184
  %v186 = vpop.f32.mrf.mxu0
  %187 = vmatprep.mubr.f32.mxu0 0.0
  %188 = vmatmul.mubr.f32.gmra.mxu0 %v84
  %v189 = vpop.f32.mrf.mxu0
  %v190 = vadd.f32 %v62, %v189
  %v191 = vpop.f32.mrf.mxu0
  %192 = vmatprep.mubr.f32.mxu0 0.0
  %193 = vmatmul.mubr.f32.gmra.mxu0 %v87
  %v194 = vpop.f32.mrf.mxu0
  %v195 = vadd.f32 %v62, %v194
  %v196 = vpop.f32.mrf.mxu0
  %197 = vdwg.mxu0
  %v198 = vld [vmem:[%s2] sm:$0xff]
  %v199 = vld [vmem:[%s2 + $0x8] sm:$0xff]
  %v200 = vld [vmem:[%s2 + $0x10] sm:$0xff]
  %v201 = vld [vmem:[%s2 + $0x18] sm:$0xff]
  %v202 = vld [vmem:[%s4] sm:$0xff]
  %v203 = vld [vmem:[%s4 + $0x8] sm:$0xff]
  %v204 = vld [vmem:[%s4 + $0x10] sm:$0xff]
  %v205 = vld [vmem:[%s4 + $0x18] sm:$0xff]
  %v206 = vld [vmem:[%s5] sm:$0xff]
  %v207 = vld [vmem:[%s5 + $0x8] sm:$0xff]
  %v208 = vld [vmem:[%s5 + $0x10] sm:$0xff]
  %v209 = vld [vmem:[%s5 + $0x18] sm:$0xff]
  %v210 = vld [vmem:[%s6] sm:$0x1]
  %v212 = vlaneseq
  %v213 = vshrl.u32 %v212, 7
  %v214 = vsub.s32 0, %v213
  %v215 = vrot.slane %v210, %v214
  %vm217 = vcmask 261120
  %v219 = vsel %vm217, 0.0, 0
  %221 = vmatprep.subr.mxu0 0.0
  %222 = vmatpush1.msra.mxu0 0.0
  %223 = vmatprep.subr.mxu0 0.0
  %224 = vmatpush1.msra.mxu0 0.0
  %225 = vmatprep.subr.mxu0 0.0
  %226 = vmatpush1.msra.mxu0 0.0
  %227 = vmatprep.subr.mxu0 0.0
  %228 = vmatpush1.msra.mxu0 0.0
  %229 = vmatprep.subr.mxu0 0.0
  %230 = vmatpush1.msra.mxu0 0.0
  %231 = vmatprep.subr.mxu0 0.0
  %232 = vmatpush1.msra.mxu0 0.0
  %233 = vmatprep.subr.mxu0 0.0
  %234 = vmatpush1.msra.mxu0 0.0
  %235 = vmatprep.subr.mxu0 0.0
  %236 = vmatpush1.msra.mxu0 0.0
  %237 = vmatprep.subr.mxu0 0.0
  %238 = vmatpush1.msra.mxu0 0.0
  %239 = vmatprep.subr.mxu0 0.0
  %240 = vmatpush1.msra.mxu0 0.0
  %241 = vmatprep.subr.mxu0 0.0
  %242 = vmatpush1.msra.mxu0 0.0
  %243 = vmatprep.subr.mxu0 0.0
  %244 = vmatpush1.msra.mxu0 0.0
  %245 = vmatprep.subr.mxu0 0.0
  %246 = vmatpush1.msra.mxu0 %v209
  %247 = vmatprep.subr.mxu0 0.0
  %248 = vmatpush1.msra.mxu0 %v208
  %249 = vmatprep.subr.mxu0 0.0
  %250 = vmatpush1.msra.mxu0 %v207
  %251 = vmatprep.subr.mxu0 0.0
  %252 = vmatpush1.msra.mxu0 %v206
  %253 = vmatprep.subr.mxu0 0.0
  %254 = vmatpush2.msra.mxu0 0.0
  %255 = vmatprep.subr.mxu0 0.0
  %256 = vmatpush2.msra.mxu0 0.0
  %257 = vmatprep.subr.mxu0 0.0
  %258 = vmatpush2.msra.mxu0 0.0
  %259 = vmatprep.subr.mxu0 0.0
  %260 = vmatpush2.msra.mxu0 0.0
  %261 = vmatprep.subr.mxu0 0.0
  %262 = vmatpush2.msra.mxu0 0.0
  %263 = vmatprep.subr.mxu0 0.0
  %264 = vmatpush2.msra.mxu0 0.0
  %265 = vmatprep.subr.mxu0 0.0
  %266 = vmatpush2.msra.mxu0 0.0
  %267 = vmatprep.subr.mxu0 0.0
  %268 = vmatpush2.msra.mxu0 0.0
  %269 = vmatprep.subr.mxu0 0.0
  %270 = vmatpush2.msra.mxu0 0.0
  %271 = vmatprep.subr.mxu0 0.0
  %272 = vmatpush2.msra.mxu0 0.0
  %273 = vmatprep.subr.mxu0 0.0
  %274 = vmatpush2.msra.mxu0 0.0
  %275 = vmatprep.subr.mxu0 0.0
  %276 = vmatpush2.msra.mxu0 0.0
  %277 = vmatprep.subr.mxu0 0.0
  %278 = vmatpush2.msra.mxu0 0.0
  %279 = vmatprep.subr.mxu0 0.0
  %280 = vmatpush2.msra.mxu0 0.0
  %281 = vmatprep.subr.mxu0 0.0
  %282 = vmatpush2.msra.mxu0 0.0
  %283 = vmatprep.subr.mxu0 0.0
  %284 = vmatpush2.msra.mxu0 0.0
  %285 = vmatprep.mubr.f32.mxu0 0.0
  %286 = vmatmul.mubr.f32.gmra.mxu0 %v219
  %v287 = vpop.f32.mrf.mxu0
  %v288 = vadd.f32 %v215, %v287
  %v289 = vpop.f32.mrf.mxu0
  %290 = vdwg.mxu0
  %291 = vmatprep.subr.mxu0 0.0
  %292 = vmatpush1.msra.mxu0 0.0
  %293 = vmatprep.subr.mxu0 0.0
  %294 = vmatpush1.msra.mxu0 0.0
  %295 = vmatprep.subr.mxu0 0.0
  %296 = vmatpush1.msra.mxu0 0.0
  %297 = vmatprep.subr.mxu0 0.0
  %298 = vmatpush1.msra.mxu0 0.0
  %299 = vmatprep.subr.mxu0 0.0
  %300 = vmatpush1.msra.mxu0 0.0
  %301 = vmatprep.subr.mxu0 0.0
  %302 = vmatpush1.msra.mxu0 0.0
  %303 = vmatprep.subr.mxu0 0.0
  %304 = vmatpush1.msra.mxu0 0.0
  %305 = vmatprep.subr.mxu0 0.0
  %306 = vmatpush1.msra.mxu0 0.0
  %307 = vmatprep.subr.mxu0 0.0
  %308 = vmatpush1.msra.mxu0 0.0
  %309 = vmatprep.subr.mxu0 0.0
  %310 = vmatpush1.msra.mxu0 0.0
  %311 = vmatprep.subr.mxu0 0.0
  %312 = vmatpush1.msra.mxu0 0.0
  %313 = vmatprep.subr.mxu0 0.0
  %314 = vmatpush1.msra.mxu0 0.0
  %315 = vmatprep.subr.mxu0 0.0
  %316 = vmatpush1.msra.mxu0 %v201
  %317 = vmatprep.subr.mxu0 0.0
  %318 = vmatpush1.msra.mxu0 %v200
  %319 = vmatprep.subr.mxu0 0.0
  %320 = vmatpush1.msra.mxu0 %v199
  %321 = vmatprep.subr.mxu0 0.0
  %322 = vmatpush1.msra.mxu0 %v198
  %323 = vmatprep.subr.mxu0 0.0
  %324 = vmatpush2.msra.mxu0 0.0
  %325 = vmatprep.subr.mxu0 0.0
  %326 = vmatpush2.msra.mxu0 0.0
  %327 = vmatprep.subr.mxu0 0.0
  %328 = vmatpush2.msra.mxu0 0.0
  %329 = vmatprep.subr.mxu0 0.0
  %330 = vmatpush2.msra.mxu0 0.0
  %331 = vmatprep.subr.mxu0 0.0
  %332 = vmatpush2.msra.mxu0 0.0
  %333 = vmatprep.subr.mxu0 0.0
  %334 = vmatpush2.msra.mxu0 0.0
  %335 = vmatprep.subr.mxu0 0.0
  %336 = vmatpush2.msra.mxu0 0.0
  %337 = vmatprep.subr.mxu0 0.0
  %338 = vmatpush2.msra.mxu0 0.0
  %339 = vmatprep.subr.mxu0 0.0
  %340 = vmatpush2.msra.mxu0 0.0
  %341 = vmatprep.subr.mxu0 0.0
  %342 = vmatpush2.msra.mxu0 0.0
  %343 = vmatprep.subr.mxu0 0.0
  %344 = vmatpush2.msra.mxu0 0.0
  %345 = vmatprep.subr.mxu0 0.0
  %346 = vmatpush2.msra.mxu0 0.0
  %347 = vmatprep.subr.mxu0 0.0
  %348 = vmatpush2.msra.mxu0 0.0
  %349 = vmatprep.subr.mxu0 0.0
  %350 = vmatpush2.msra.mxu0 0.0
  %351 = vmatprep.subr.mxu0 0.0
  %352 = vmatpush2.msra.mxu0 0.0
  %353 = vmatprep.subr.mxu0 0.0
  %354 = vmatpush2.msra.mxu0 0.0
  %355 = vmatprep.mubr.f32.mxu0 0.0
  %356 = vmatmul.mubr.f32.gmra.mxu0 %v219
  %v357 = vpop.f32.mrf.mxu0
  %v358 = vadd.f32 0.0, %v357
  %v359 = vpop.f32.mrf.mxu0
  %360 = vdwg.mxu0
  %v361 = vadd.f32 %v160, %v358
  %v362 = vxor.u32 %v361, 2147483648
  %v363 = vmul.f32 %v362, 1.442695
  %v364 = vpow.pop %v363
  %v365 = vadd.f32 %v364, 1.0
  %v366 = vrcp.pop %v365
  %v367 = vmul.f32 1.0, %v366
  %v368 = vmul.f32 %v367, 2.0
  %v369 = vsub.f32 %v368, 1.0
  %v370 = vmul.f32 %v367, 0.0
  %372 = vrot.lane.b32.xlu0 %v369, 64
  %v373 = vpop.permute.xlu0 %372
  %v375 = vmul.f32 %v367, %v373
  %377 = vrot.lane.b32.xlu0 %v375, 32
  %v378 = vpop.permute.xlu0 %377
  %v380 = vadd.f32 %v370, %v378
  %v381 = vtanh.pop %v380
  %383 = vrot.lane.b32.xlu0 %v381, 64
  %v384 = vpop.permute.xlu0 %383
  %v386 = vmul.f32 %v367, %v384
  %388 = vrot.lane.b32.xlu0 %v386, 32
  %v389 = vpop.permute.xlu0 %388
  %v390 = vsel %vm217, %v389, 0
  %392 = vmatprep.subr.mxu0 0.0
  %393 = vmatpush1.msra.mxu0 0.0
  %394 = vmatprep.subr.mxu0 0.0
  %395 = vmatpush1.msra.mxu0 0.0
  %396 = vmatprep.subr.mxu0 0.0
  %397 = vmatpush1.msra.mxu0 0.0
  %398 = vmatprep.subr.mxu0 0.0
  %399 = vmatpush1.msra.mxu0 0.0
  %400 = vmatprep.subr.mxu0 0.0
  %401 = vmatpush1.msra.mxu0 0.0
  %402 = vmatprep.subr.mxu0 0.0
  %403 = vmatpush1.msra.mxu0 0.0
  %404 = vmatprep.subr.mxu0 0.0
  %405 = vmatpush1.msra.mxu0 0.0
  %406 = vmatprep.subr.mxu0 0.0
  %407 = vmatpush1.msra.mxu0 0.0
  %408 = vmatprep.subr.mxu0 0.0
  %409 = vmatpush1.msra.mxu0 0.0
  %410 = vmatprep.subr.mxu0 0.0
  %411 = vmatpush1.msra.mxu0 0.0
  %412 = vmatprep.subr.mxu0 0.0
  %413 = vmatpush1.msra.mxu0 0.0
  %414 = vmatprep.subr.mxu0 0.0
  %415 = vmatpush1.msra.mxu0 0.0
  %416 = vmatprep.subr.mxu0 0.0
  %417 = vmatpush1.msra.mxu0 %v205
  %418 = vmatprep.subr.mxu0 0.0
  %419 = vmatpush1.msra.mxu0 %v204
  %420 = vmatprep.subr.mxu0 0.0
  %421 = vmatpush1.msra.mxu0 %v203
  %422 = vmatprep.subr.mxu0 0.0
  %423 = vmatpush1.msra.mxu0 %v202
  %424 = vmatprep.subr.mxu0 0.0
  %425 = vmatpush2.msra.mxu0 0.0
  %426 = vmatprep.subr.mxu0 0.0
  %427 = vmatpush2.msra.mxu0 0.0
  %428 = vmatprep.subr.mxu0 0.0
  %429 = vmatpush2.msra.mxu0 0.0
  %430 = vmatprep.subr.mxu0 0.0
  %431 = vmatpush2.msra.mxu0 0.0
  %432 = vmatprep.subr.mxu0 0.0
  %433 = vmatpush2.msra.mxu0 0.0
  %434 = vmatprep.subr.mxu0 0.0
  %435 = vmatpush2.msra.mxu0 0.0
  %436 = vmatprep.subr.mxu0 0.0
  %437 = vmatpush2.msra.mxu0 0.0
  %438 = vmatprep.subr.mxu0 0.0
  %439 = vmatpush2.msra.mxu0 0.0
  %440 = vmatprep.subr.mxu0 0.0
  %441 = vmatpush2.msra.mxu0 0.0
  %442 = vmatprep.subr.mxu0 0.0
  %443 = vmatpush2.msra.mxu0 0.0
  %444 = vmatprep.subr.mxu0 0.0
  %445 = vmatpush2.msra.mxu0 0.0
  %446 = vmatprep.subr.mxu0 0.0
  %447 = vmatpush2.msra.mxu0 0.0
  %448 = vmatprep.subr.mxu0 0.0
  %449 = vmatpush2.msra.mxu0 0.0
  %450 = vmatprep.subr.mxu0 0.0
  %451 = vmatpush2.msra.mxu0 0.0
  %452 = vmatprep.subr.mxu0 0.0
  %453 = vmatpush2.msra.mxu0 0.0
  %454 = vmatprep.subr.mxu0 0.0
  %455 = vmatpush2.msra.mxu0 0.0
  %456 = vmatprep.mubr.f32.mxu0 0.0
  %457 = vmatmul.mubr.f32.gmra.mxu0 %v390
  %v458 = vpop.f32.mrf.mxu0
  %v459 = vadd.f32 %v288, %v458
  %v460 = vpop.f32.mrf.mxu0
  %461 = vdwg.mxu0
  %v462 = vxor.u32 %v459, 2147483648
  %v463 = vmul.f32 %v462, 1.442695
  %v464 = vpow.pop %v463
  %v465 = vadd.f32 %v464, 1.0
  %v466 = vrcp.pop %v465
  %v467 = vmul.f32 1.0, %v466
  %v468 = vmul.f32 %v467, 2.0
  %v469 = vsub.f32 %v468, 1.0
  %v470 = vmul.f32 %v467, 0.0
  %472 = vrot.lane.b32.xlu0 %v469, 64
  %v473 = vpop.permute.xlu0 %472
  %v475 = vmul.f32 %v467, %v473
  %477 = vrot.lane.b32.xlu0 %v475, 32
  %v478 = vpop.permute.xlu0 %477
  %v480 = vadd.f32 %v470, %v478
  %v481 = vtanh.pop %v480
  %483 = vrot.lane.b32.xlu0 %v481, 64
  %v484 = vpop.permute.xlu0 %483
  %v486 = vmul.f32 %v467, %v484
  %488 = vrot.lane.b32.xlu0 %v486, 32
  %v489 = vpop.permute.xlu0 %488
  %v490 = vsel %vm217, %v489, 0
  %492 = vmatprep.subr.mxu0 0.0
  %493 = vmatpush1.msra.mxu0 0.0
  %494 = vmatprep.subr.mxu0 0.0
  %495 = vmatpush1.msra.mxu0 0.0
  %496 = vmatprep.subr.mxu0 0.0
  %497 = vmatpush1.msra.mxu0 0.0
  %498 = vmatprep.subr.mxu0 0.0
  %499 = vmatpush1.msra.mxu0 0.0
  %500 = vmatprep.subr.mxu0 0.0
  %501 = vmatpush1.msra.mxu0 0.0
  %502 = vmatprep.subr.mxu0 0.0
  %503 = vmatpush1.msra.mxu0 0.0
  %504 = vmatprep.subr.mxu0 0.0
  %505 = vmatpush1.msra.mxu0 0.0
  %506 = vmatprep.subr.mxu0 0.0
  %507 = vmatpush1.msra.mxu0 0.0
  %508 = vmatprep.subr.mxu0 0.0
  %509 = vmatpush1.msra.mxu0 0.0
  %510 = vmatprep.subr.mxu0 0.0
  %511 = vmatpush1.msra.mxu0 0.0
  %512 = vmatprep.subr.mxu0 0.0
  %513 = vmatpush1.msra.mxu0 0.0
  %514 = vmatprep.subr.mxu0 0.0
  %515 = vmatpush1.msra.mxu0 0.0
  %516 = vmatprep.subr.mxu0 0.0
  %517 = vmatpush1.msra.mxu0 %v209
  %518 = vmatprep.subr.mxu0 0.0
  %519 = vmatpush1.msra.mxu0 %v208
  %520 = vmatprep.subr.mxu0 0.0
  %521 = vmatpush1.msra.mxu0 %v207
  %522 = vmatprep.subr.mxu0 0.0
  %523 = vmatpush1.msra.mxu0 %v206
  %524 = vmatprep.subr.mxu0 0.0
  %525 = vmatpush2.msra.mxu0 0.0
  %526 = vmatprep.subr.mxu0 0.0
  %527 = vmatpush2.msra.mxu0 0.0
  %528 = vmatprep.subr.mxu0 0.0
  %529 = vmatpush2.msra.mxu0 0.0
  %530 = vmatprep.subr.mxu0 0.0
  %531 = vmatpush2.msra.mxu0 0.0
  %532 = vmatprep.subr.mxu0 0.0
  %533 = vmatpush2.msra.mxu0 0.0
  %534 = vmatprep.subr.mxu0 0.0
  %535 = vmatpush2.msra.mxu0 0.0
  %536 = vmatprep.subr.mxu0 0.0
  %537 = vmatpush2.msra.mxu0 0.0
  %538 = vmatprep.subr.mxu0 0.0
  %539 = vmatpush2.msra.mxu0 0.0
  %540 = vmatprep.subr.mxu0 0.0
  %541 = vmatpush2.msra.mxu0 0.0
  %542 = vmatprep.subr.mxu0 0.0
  %543 = vmatpush2.msra.mxu0 0.0
  %544 = vmatprep.subr.mxu0 0.0
  %545 = vmatpush2.msra.mxu0 0.0
  %546 = vmatprep.subr.mxu0 0.0
  %547 = vmatpush2.msra.mxu0 0.0
  %548 = vmatprep.subr.mxu0 0.0
  %549 = vmatpush2.msra.mxu0 0.0
  %550 = vmatprep.subr.mxu0 0.0
  %551 = vmatpush2.msra.mxu0 0.0
  %552 = vmatprep.subr.mxu0 0.0
  %553 = vmatpush2.msra.mxu0 0.0
  %554 = vmatprep.subr.mxu0 0.0
  %555 = vmatpush2.msra.mxu0 0.0
  %556 = vmatprep.mubr.f32.mxu0 0.0
  %557 = vmatmul.mubr.f32.gmra.mxu0 %v490
  %v558 = vpop.f32.mrf.mxu0
  %v559 = vadd.f32 %v215, %v558
  %v560 = vpop.f32.mrf.mxu0
  %561 = vdwg.mxu0
  %562 = vmatprep.subr.mxu0 0.0
  %563 = vmatpush1.msra.mxu0 0.0
  %564 = vmatprep.subr.mxu0 0.0
  %565 = vmatpush1.msra.mxu0 0.0
  %566 = vmatprep.subr.mxu0 0.0
  %567 = vmatpush1.msra.mxu0 0.0
  %568 = vmatprep.subr.mxu0 0.0
  %569 = vmatpush1.msra.mxu0 0.0
  %570 = vmatprep.subr.mxu0 0.0
  %571 = vmatpush1.msra.mxu0 0.0
  %572 = vmatprep.subr.mxu0 0.0
  %573 = vmatpush1.msra.mxu0 0.0
  %574 = vmatprep.subr.mxu0 0.0
  %575 = vmatpush1.msra.mxu0 0.0
  %576 = vmatprep.subr.mxu0 0.0
  %577 = vmatpush1.msra.mxu0 0.0
  %578 = vmatprep.subr.mxu0 0.0
  %579 = vmatpush1.msra.mxu0 0.0
  %580 = vmatprep.subr.mxu0 0.0
  %581 = vmatpush1.msra.mxu0 0.0
  %582 = vmatprep.subr.mxu0 0.0
  %583 = vmatpush1.msra.mxu0 0.0
  %584 = vmatprep.subr.mxu0 0.0
  %585 = vmatpush1.msra.mxu0 0.0
  %586 = vmatprep.subr.mxu0 0.0
  %587 = vmatpush1.msra.mxu0 %v201
  %588 = vmatprep.subr.mxu0 0.0
  %589 = vmatpush1.msra.mxu0 %v200
  %590 = vmatprep.subr.mxu0 0.0
  %591 = vmatpush1.msra.mxu0 %v199
  %592 = vmatprep.subr.mxu0 0.0
  %593 = vmatpush1.msra.mxu0 %v198
  %594 = vmatprep.subr.mxu0 0.0
  %595 = vmatpush2.msra.mxu0 0.0
  %596 = vmatprep.subr.mxu0 0.0
  %597 = vmatpush2.msra.mxu0 0.0
  %598 = vmatprep.subr.mxu0 0.0
  %599 = vmatpush2.msra.mxu0 0.0
  %600 = vmatprep.subr.mxu0 0.0
  %601 = vmatpush2.msra.mxu0 0.0
  %602 = vmatprep.subr.mxu0 0.0
  %603 = vmatpush2.msra.mxu0 0.0
  %604 = vmatprep.subr.mxu0 0.0
  %605 = vmatpush2.msra.mxu0 0.0
  %606 = vmatprep.subr.mxu0 0.0
  %607 = vmatpush2.msra.mxu0 0.0
  %608 = vmatprep.subr.mxu0 0.0
  %609 = vmatpush2.msra.mxu0 0.0
  %610 = vmatprep.subr.mxu0 0.0
  %611 = vmatpush2.msra.mxu0 0.0
  %612 = vmatprep.subr.mxu0 0.0
  %613 = vmatpush2.msra.mxu0 0.0
  %614 = vmatprep.subr.mxu0 0.0
  %615 = vmatpush2.msra.mxu0 0.0
  %616 = vmatprep.subr.mxu0 0.0
  %617 = vmatpush2.msra.mxu0 0.0
  %618 = vmatprep.subr.mxu0 0.0
  %619 = vmatpush2.msra.mxu0 0.0
  %620 = vmatprep.subr.mxu0 0.0
  %621 = vmatpush2.msra.mxu0 0.0
  %622 = vmatprep.subr.mxu0 0.0
  %623 = vmatpush2.msra.mxu0 0.0
  %624 = vmatprep.subr.mxu0 0.0
  %625 = vmatpush2.msra.mxu0 0.0
  %626 = vmatprep.mubr.f32.mxu0 0.0
  %627 = vmatmul.mubr.f32.gmra.mxu0 %v390
  %v628 = vpop.f32.mrf.mxu0
  %v629 = vadd.f32 0.0, %v628
  %v630 = vpop.f32.mrf.mxu0
  %631 = vdwg.mxu0
  %v632 = vadd.f32 %v165, %v629
  %v633 = vxor.u32 %v632, 2147483648
  %v634 = vmul.f32 %v633, 1.442695
  %v635 = vpow.pop %v634
  %v636 = vadd.f32 %v635, 1.0
  %v637 = vrcp.pop %v636
  %v638 = vmul.f32 1.0, %v637
  %v639 = vmul.f32 %v638, 2.0
  %v640 = vsub.f32 %v639, 1.0
  %v641 = vmul.f32 %v638, %v380
  %643 = vrot.lane.b32.xlu0 %v640, 64
  %v644 = vpop.permute.xlu0 %643
  %v646 = vmul.f32 %v638, %v644
  %648 = vrot.lane.b32.xlu0 %v646, 32
  %v649 = vpop.permute.xlu0 %648
  %v651 = vadd.f32 %v641, %v649
  %v652 = vtanh.pop %v651
  %654 = vrot.lane.b32.xlu0 %v652, 64
  %v655 = vpop.permute.xlu0 %654
  %v657 = vmul.f32 %v638, %v655
  %659 = vrot.lane.b32.xlu0 %v657, 32
  %v660 = vpop.permute.xlu0 %659
  %v661 = vsel %vm217, %v660, 0
  %663 = vmatprep.subr.mxu0 0.0
  %664 = vmatpush1.msra.mxu0 0.0
  %665 = vmatprep.subr.mxu0 0.0
  %666 = vmatpush1.msra.mxu0 0.0
  %667 = vmatprep.subr.mxu0 0.0
  %668 = vmatpush1.msra.mxu0 0.0
  %669 = vmatprep.subr.mxu0 0.0
  %670 = vmatpush1.msra.mxu0 0.0
  %671 = vmatprep.subr.mxu0 0.0
  %672 = vmatpush1.msra.mxu0 0.0
  %673 = vmatprep.subr.mxu0 0.0
  %674 = vmatpush1.msra.mxu0 0.0
  %675 = vmatprep.subr.mxu0 0.0
  %676 = vmatpush1.msra.mxu0 0.0
  %677 = vmatprep.subr.mxu0 0.0
  %678 = vmatpush1.msra.mxu0 0.0
  %679 = vmatprep.subr.mxu0 0.0
  %680 = vmatpush1.msra.mxu0 0.0
  %681 = vmatprep.subr.mxu0 0.0
  %682 = vmatpush1.msra.mxu0 0.0
  %683 = vmatprep.subr.mxu0 0.0
  %684 = vmatpush1.msra.mxu0 0.0
  %685 = vmatprep.subr.mxu0 0.0
  %686 = vmatpush1.msra.mxu0 0.0
  %687 = vmatprep.subr.mxu0 0.0
  %688 = vmatpush1.msra.mxu0 %v205
  %689 = vmatprep.subr.mxu0 0.0
  %690 = vmatpush1.msra.mxu0 %v204
  %691 = vmatprep.subr.mxu0 0.0
  %692 = vmatpush1.msra.mxu0 %v203
  %693 = vmatprep.subr.mxu0 0.0
  %694 = vmatpush1.msra.mxu0 %v202
  %695 = vmatprep.subr.mxu0 0.0
  %696 = vmatpush2.msra.mxu0 0.0
  %697 = vmatprep.subr.mxu0 0.0
  %698 = vmatpush2.msra.mxu0 0.0
  %699 = vmatprep.subr.mxu0 0.0
  %700 = vmatpush2.msra.mxu0 0.0
  %701 = vmatprep.subr.mxu0 0.0
  %702 = vmatpush2.msra.mxu0 0.0
  %703 = vmatprep.subr.mxu0 0.0
  %704 = vmatpush2.msra.mxu0 0.0
  %705 = vmatprep.subr.mxu0 0.0
  %706 = vmatpush2.msra.mxu0 0.0
  %707 = vmatprep.subr.mxu0 0.0
  %708 = vmatpush2.msra.mxu0 0.0
  %709 = vmatprep.subr.mxu0 0.0
  %710 = vmatpush2.msra.mxu0 0.0
  %711 = vmatprep.subr.mxu0 0.0
  %712 = vmatpush2.msra.mxu0 0.0
  %713 = vmatprep.subr.mxu0 0.0
  %714 = vmatpush2.msra.mxu0 0.0
  %715 = vmatprep.subr.mxu0 0.0
  %716 = vmatpush2.msra.mxu0 0.0
  %717 = vmatprep.subr.mxu0 0.0
  %718 = vmatpush2.msra.mxu0 0.0
  %719 = vmatprep.subr.mxu0 0.0
  %720 = vmatpush2.msra.mxu0 0.0
  %721 = vmatprep.subr.mxu0 0.0
  %722 = vmatpush2.msra.mxu0 0.0
  %723 = vmatprep.subr.mxu0 0.0
  %724 = vmatpush2.msra.mxu0 0.0
  %725 = vmatprep.subr.mxu0 0.0
  %726 = vmatpush2.msra.mxu0 0.0
  %727 = vmatprep.mubr.f32.mxu0 0.0
  %728 = vmatmul.mubr.f32.gmra.mxu0 %v661
  %v729 = vpop.f32.mrf.mxu0
  %v730 = vadd.f32 %v559, %v729
  %v731 = vpop.f32.mrf.mxu0
  %732 = vdwg.mxu0
  %v733 = vxor.u32 %v730, 2147483648
  %v734 = vmul.f32 %v733, 1.442695
  %v735 = vpow.pop %v734
  %v736 = vadd.f32 %v735, 1.0
  %v737 = vrcp.pop %v736
  %v738 = vmul.f32 1.0, %v737
  %v739 = vmul.f32 %v738, 2.0
  %v740 = vsub.f32 %v739, 1.0
  %v741 = vmul.f32 %v738, %v480
  %743 = vrot.lane.b32.xlu0 %v740, 64
  %v744 = vpop.permute.xlu0 %743
  %v746 = vmul.f32 %v738, %v744
  %748 = vrot.lane.b32.xlu0 %v746, 32
  %v749 = vpop.permute.xlu0 %748
  %v751 = vadd.f32 %v741, %v749
  %v752 = vtanh.pop %v751
  %754 = vrot.lane.b32.xlu0 %v752, 64
  %v755 = vpop.permute.xlu0 %754
  %v757 = vmul.f32 %v738, %v755
  %759 = vrot.lane.b32.xlu0 %v757, 32
  %v760 = vpop.permute.xlu0 %759
  %v761 = vsel %vm217, %v760, 0
  %763 = vmatprep.subr.mxu0 0.0
  %764 = vmatpush1.msra.mxu0 0.0
  %765 = vmatprep.subr.mxu0 0.0
  %766 = vmatpush1.msra.mxu0 0.0
  %767 = vmatprep.subr.mxu0 0.0
  %768 = vmatpush1.msra.mxu0 0.0
  %769 = vmatprep.subr.mxu0 0.0
  %770 = vmatpush1.msra.mxu0 0.0
  %771 = vmatprep.subr.mxu0 0.0
  %772 = vmatpush1.msra.mxu0 0.0
  %773 = vmatprep.subr.mxu0 0.0
  %774 = vmatpush1.msra.mxu0 0.0
  %775 = vmatprep.subr.mxu0 0.0
  %776 = vmatpush1.msra.mxu0 0.0
  %777 = vmatprep.subr.mxu0 0.0
  %778 = vmatpush1.msra.mxu0 0.0
  %779 = vmatprep.subr.mxu0 0.0
  %780 = vmatpush1.msra.mxu0 0.0
  %781 = vmatprep.subr.mxu0 0.0
  %782 = vmatpush1.msra.mxu0 0.0
  %783 = vmatprep.subr.mxu0 0.0
  %784 = vmatpush1.msra.mxu0 0.0
  %785 = vmatprep.subr.mxu0 0.0
  %786 = vmatpush1.msra.mxu0 0.0
  %787 = vmatprep.subr.mxu0 0.0
  %788 = vmatpush1.msra.mxu0 %v209
  %789 = vmatprep.subr.mxu0 0.0
  %790 = vmatpush1.msra.mxu0 %v208
  %791 = vmatprep.subr.mxu0 0.0
  %792 = vmatpush1.msra.mxu0 %v207
  %793 = vmatprep.subr.mxu0 0.0
  %794 = vmatpush1.msra.mxu0 %v206
  %795 = vmatprep.subr.mxu0 0.0
  %796 = vmatpush2.msra.mxu0 0.0
  %797 = vmatprep.subr.mxu0 0.0
  %798 = vmatpush2.msra.mxu0 0.0
  %799 = vmatprep.subr.mxu0 0.0
  %800 = vmatpush2.msra.mxu0 0.0
  %801 = vmatprep.subr.mxu0 0.0
  %802 = vmatpush2.msra.mxu0 0.0
  %803 = vmatprep.subr.mxu0 0.0
  %804 = vmatpush2.msra.mxu0 0.0
  %805 = vmatprep.subr.mxu0 0.0
  %806 = vmatpush2.msra.mxu0 0.0
  %807 = vmatprep.subr.mxu0 0.0
  %808 = vmatpush2.msra.mxu0 0.0
  %809 = vmatprep.subr.mxu0 0.0
  %810 = vmatpush2.msra.mxu0 0.0
  %811 = vmatprep.subr.mxu0 0.0
  %812 = vmatpush2.msra.mxu0 0.0
  %813 = vmatprep.subr.mxu0 0.0
  %814 = vmatpush2.msra.mxu0 0.0
  %815 = vmatprep.subr.mxu0 0.0
  %816 = vmatpush2.msra.mxu0 0.0
  %817 = vmatprep.subr.mxu0 0.0
  %818 = vmatpush2.msra.mxu0 0.0
  %819 = vmatprep.subr.mxu0 0.0
  %820 = vmatpush2.msra.mxu0 0.0
  %821 = vmatprep.subr.mxu0 0.0
  %822 = vmatpush2.msra.mxu0 0.0
  %823 = vmatprep.subr.mxu0 0.0
  %824 = vmatpush2.msra.mxu0 0.0
  %825 = vmatprep.subr.mxu0 0.0
  %826 = vmatpush2.msra.mxu0 0.0
  %827 = vmatprep.mubr.f32.mxu0 0.0
  %828 = vmatmul.mubr.f32.gmra.mxu0 %v761
  %v829 = vpop.f32.mrf.mxu0
  %v830 = vadd.f32 %v215, %v829
  %v831 = vpop.f32.mrf.mxu0
  %832 = vdwg.mxu0
  %833 = vmatprep.subr.mxu0 0.0
  %834 = vmatpush1.msra.mxu0 0.0
  %835 = vmatprep.subr.mxu0 0.0
  %836 = vmatpush1.msra.mxu0 0.0
  %837 = vmatprep.subr.mxu0 0.0
  %838 = vmatpush1.msra.mxu0 0.0
  %839 = vmatprep.subr.mxu0 0.0
  %840 = vmatpush1.msra.mxu0 0.0
  %841 = vmatprep.subr.mxu0 0.0
  %842 = vmatpush1.msra.mxu0 0.0
  %843 = vmatprep.subr.mxu0 0.0
  %844 = vmatpush1.msra.mxu0 0.0
  %845 = vmatprep.subr.mxu0 0.0
  %846 = vmatpush1.msra.mxu0 0.0
  %847 = vmatprep.subr.mxu0 0.0
  %848 = vmatpush1.msra.mxu0 0.0
  %849 = vmatprep.subr.mxu0 0.0
  %850 = vmatpush1.msra.mxu0 0.0
  %851 = vmatprep.subr.mxu0 0.0
  %852 = vmatpush1.msra.mxu0 0.0
  %853 = vmatprep.subr.mxu0 0.0
  %854 = vmatpush1.msra.mxu0 0.0
  %855 = vmatprep.subr.mxu0 0.0
  %856 = vmatpush1.msra.mxu0 0.0
  %857 = vmatprep.subr.mxu0 0.0
  %858 = vmatpush1.msra.mxu0 %v201
  %859 = vmatprep.subr.mxu0 0.0
  %860 = vmatpush1.msra.mxu0 %v200
  %861 = vmatprep.subr.mxu0 0.0
  %862 = vmatpush1.msra.mxu0 %v199
  %863 = vmatprep.subr.mxu0 0.0
  %864 = vmatpush1.msra.mxu0 %v198
  %865 = vmatprep.subr.mxu0 0.0
  %866 = vmatpush2.msra.mxu0 0.0
  %867 = vmatprep.subr.mxu0 0.0
  %868 = vmatpush2.msra.mxu0 0.0
  %869 = vmatprep.subr.mxu0 0.0
  %870 = vmatpush2.msra.mxu0 0.0
  %871 = vmatprep.subr.mxu0 0.0
  %872 = vmatpush2.msra.mxu0 0.0
  %873 = vmatprep.subr.mxu0 0.0
  %874 = vmatpush2.msra.mxu0 0.0
  %875 = vmatprep.subr.mxu0 0.0
  %876 = vmatpush2.msra.mxu0 0.0
  %877 = vmatprep.subr.mxu0 0.0
  %878 = vmatpush2.msra.mxu0 0.0
  %879 = vmatprep.subr.mxu0 0.0
  %880 = vmatpush2.msra.mxu0 0.0
  %881 = vmatprep.subr.mxu0 0.0
  %882 = vmatpush2.msra.mxu0 0.0
  %883 = vmatprep.subr.mxu0 0.0
  %884 = vmatpush2.msra.mxu0 0.0
  %885 = vmatprep.subr.mxu0 0.0
  %886 = vmatpush2.msra.mxu0 0.0
  %887 = vmatprep.subr.mxu0 0.0
  %888 = vmatpush2.msra.mxu0 0.0
  %889 = vmatprep.subr.mxu0 0.0
  %890 = vmatpush2.msra.mxu0 0.0
  %891 = vmatprep.subr.mxu0 0.0
  %892 = vmatpush2.msra.mxu0 0.0
  %893 = vmatprep.subr.mxu0 0.0
  %894 = vmatpush2.msra.mxu0 0.0
  %895 = vmatprep.subr.mxu0 0.0
  %896 = vmatpush2.msra.mxu0 0.0
  %897 = vmatprep.mubr.f32.mxu0 0.0
  %898 = vmatmul.mubr.f32.gmra.mxu0 %v661
  %v899 = vpop.f32.mrf.mxu0
  %v900 = vadd.f32 0.0, %v899
  %v901 = vpop.f32.mrf.mxu0
  %902 = vdwg.mxu0
  %v903 = vadd.f32 %v170, %v900
  %v904 = vxor.u32 %v903, 2147483648
  %v905 = vmul.f32 %v904, 1.442695
  %v906 = vpow.pop %v905
  %v907 = vadd.f32 %v906, 1.0
  %v908 = vrcp.pop %v907
  %v909 = vmul.f32 1.0, %v908
  %v910 = vmul.f32 %v909, 2.0
  %v911 = vsub.f32 %v910, 1.0
  %v912 = vmul.f32 %v909, %v651
  %914 = vrot.lane.b32.xlu0 %v911, 64
  %v915 = vpop.permute.xlu0 %914
  %v917 = vmul.f32 %v909, %v915
  %919 = vrot.lane.b32.xlu0 %v917, 32
  %v920 = vpop.permute.xlu0 %919
  %v922 = vadd.f32 %v912, %v920
  %v923 = vtanh.pop %v922
  %925 = vrot.lane.b32.xlu0 %v923, 64
  %v926 = vpop.permute.xlu0 %925
  %v928 = vmul.f32 %v909, %v926
  %930 = vrot.lane.b32.xlu0 %v928, 32
  %v931 = vpop.permute.xlu0 %930
  %v932 = vsel %vm217, %v931, 0
  %934 = vmatprep.subr.mxu0 0.0
  %935 = vmatpush1.msra.mxu0 0.0
  %936 = vmatprep.subr.mxu0 0.0
  %937 = vmatpush1.msra.mxu0 0.0
  %938 = vmatprep.subr.mxu0 0.0
  %939 = vmatpush1.msra.mxu0 0.0
  %940 = vmatprep.subr.mxu0 0.0
  %941 = vmatpush1.msra.mxu0 0.0
  %942 = vmatprep.subr.mxu0 0.0
  %943 = vmatpush1.msra.mxu0 0.0
  %944 = vmatprep.subr.mxu0 0.0
  %945 = vmatpush1.msra.mxu0 0.0
  %946 = vmatprep.subr.mxu0 0.0
  %947 = vmatpush1.msra.mxu0 0.0
  %948 = vmatprep.subr.mxu0 0.0
  %949 = vmatpush1.msra.mxu0 0.0
  %950 = vmatprep.subr.mxu0 0.0
  %951 = vmatpush1.msra.mxu0 0.0
  %952 = vmatprep.subr.mxu0 0.0
  %953 = vmatpush1.msra.mxu0 0.0
  %954 = vmatprep.subr.mxu0 0.0
  %955 = vmatpush1.msra.mxu0 0.0
  %956 = vmatprep.subr.mxu0 0.0
  %957 = vmatpush1.msra.mxu0 0.0
  %958 = vmatprep.subr.mxu0 0.0
  %959 = vmatpush1.msra.mxu0 %v205
  %960 = vmatprep.subr.mxu0 0.0
  %961 = vmatpush1.msra.mxu0 %v204
  %962 = vmatprep.subr.mxu0 0.0
  %963 = vmatpush1.msra.mxu0 %v203
  %964 = vmatprep.subr.mxu0 0.0
  %965 = vmatpush1.msra.mxu0 %v202
  %966 = vmatprep.subr.mxu0 0.0
  %967 = vmatpush2.msra.mxu0 0.0
  %968 = vmatprep.subr.mxu0 0.0
  %969 = vmatpush2.msra.mxu0 0.0
  %970 = vmatprep.subr.mxu0 0.0
  %971 = vmatpush2.msra.mxu0 0.0
  %972 = vmatprep.subr.mxu0 0.0
  %973 = vmatpush2.msra.mxu0 0.0
  %974 = vmatprep.subr.mxu0 0.0
  %975 = vmatpush2.msra.mxu0 0.0
  %976 = vmatprep.subr.mxu0 0.0
  %977 = vmatpush2.msra.mxu0 0.0
  %978 = vmatprep.subr.mxu0 0.0
  %979 = vmatpush2.msra.mxu0 0.0
  %980 = vmatprep.subr.mxu0 0.0
  %981 = vmatpush2.msra.mxu0 0.0
  %982 = vmatprep.subr.mxu0 0.0
  %983 = vmatpush2.msra.mxu0 0.0
  %984 = vmatprep.subr.mxu0 0.0
  %985 = vmatpush2.msra.mxu0 0.0
  %986 = vmatprep.subr.mxu0 0.0
  %987 = vmatpush2.msra.mxu0 0.0
  %988 = vmatprep.subr.mxu0 0.0
  %989 = vmatpush2.msra.mxu0 0.0
  %990 = vmatprep.subr.mxu0 0.0
  %991 = vmatpush2.msra.mxu0 0.0
  %992 = vmatprep.subr.mxu0 0.0
  %993 = vmatpush2.msra.mxu0 0.0
  %994 = vmatprep.subr.mxu0 0.0
  %995 = vmatpush2.msra.mxu0 0.0
  %996 = vmatprep.subr.mxu0 0.0
  %997 = vmatpush2.msra.mxu0 0.0
  %998 = vmatprep.mubr.f32.mxu0 0.0
  %999 = vmatmul.mubr.f32.gmra.mxu0 %v932
  %v1000 = vpop.f32.mrf.mxu0
  %v1001 = vadd.f32 %v830, %v1000
  %v1002 = vpop.f32.mrf.mxu0
  %1003 = vdwg.mxu0
  %v1004 = vxor.u32 %v1001, 2147483648
  %v1005 = vmul.f32 %v1004, 1.442695
  %v1006 = vpow.pop %v1005
  %v1007 = vadd.f32 %v1006, 1.0
  %v1008 = vrcp.pop %v1007
  %v1009 = vmul.f32 1.0, %v1008
  %v1010 = vmul.f32 %v1009, 2.0
  %v1011 = vsub.f32 %v1010, 1.0
  %v1012 = vmul.f32 %v1009, %v751
  %1014 = vrot.lane.b32.xlu0 %v1011, 64
  %v1015 = vpop.permute.xlu0 %1014
  %v1017 = vmul.f32 %v1009, %v1015
  %1019 = vrot.lane.b32.xlu0 %v1017, 32
  %v1020 = vpop.permute.xlu0 %1019
  %v1022 = vadd.f32 %v1012, %v1020
  %v1023 = vtanh.pop %v1022
  %1025 = vrot.lane.b32.xlu0 %v1023, 64
  %v1026 = vpop.permute.xlu0 %1025
  %v1028 = vmul.f32 %v1009, %v1026
  %1030 = vrot.lane.b32.xlu0 %v1028, 32
  %v1031 = vpop.permute.xlu0 %1030
  %v1032 = vsel %vm217, %v1031, 0
  %1034 = vmatprep.subr.mxu0 0.0
  %1035 = vmatpush1.msra.mxu0 0.0
  %1036 = vmatprep.subr.mxu0 0.0
  %1037 = vmatpush1.msra.mxu0 0.0
  %1038 = vmatprep.subr.mxu0 0.0
  %1039 = vmatpush1.msra.mxu0 0.0
  %1040 = vmatprep.subr.mxu0 0.0
  %1041 = vmatpush1.msra.mxu0 0.0
  %1042 = vmatprep.subr.mxu0 0.0
  %1043 = vmatpush1.msra.mxu0 0.0
  %1044 = vmatprep.subr.mxu0 0.0
  %1045 = vmatpush1.msra.mxu0 0.0
  %1046 = vmatprep.subr.mxu0 0.0
  %1047 = vmatpush1.msra.mxu0 0.0
  %1048 = vmatprep.subr.mxu0 0.0
  %1049 = vmatpush1.msra.mxu0 0.0
  %1050 = vmatprep.subr.mxu0 0.0
  %1051 = vmatpush1.msra.mxu0 0.0
  %1052 = vmatprep.subr.mxu0 0.0
  %1053 = vmatpush1.msra.mxu0 0.0
  %1054 = vmatprep.subr.mxu0 0.0
  %1055 = vmatpush1.msra.mxu0 0.0
  %1056 = vmatprep.subr.mxu0 0.0
  %1057 = vmatpush1.msra.mxu0 0.0
  %1058 = vmatprep.subr.mxu0 0.0
  %1059 = vmatpush1.msra.mxu0 %v209
  %1060 = vmatprep.subr.mxu0 0.0
  %1061 = vmatpush1.msra.mxu0 %v208
  %1062 = vmatprep.subr.mxu0 0.0
  %1063 = vmatpush1.msra.mxu0 %v207
  %1064 = vmatprep.subr.mxu0 0.0
  %1065 = vmatpush1.msra.mxu0 %v206
  %1066 = vmatprep.subr.mxu0 0.0
  %1067 = vmatpush2.msra.mxu0 0.0
  %1068 = vmatprep.subr.mxu0 0.0
  %1069 = vmatpush2.msra.mxu0 0.0
  %1070 = vmatprep.subr.mxu0 0.0
  %1071 = vmatpush2.msra.mxu0 0.0
  %1072 = vmatprep.subr.mxu0 0.0
  %1073 = vmatpush2.msra.mxu0 0.0
  %1074 = vmatprep.subr.mxu0 0.0
  %1075 = vmatpush2.msra.mxu0 0.0
  %1076 = vmatprep.subr.mxu0 0.0
  %1077 = vmatpush2.msra.mxu0 0.0
  %1078 = vmatprep.subr.mxu0 0.0
  %1079 = vmatpush2.msra.mxu0 0.0
  %1080 = vmatprep.subr.mxu0 0.0
  %1081 = vmatpush2.msra.mxu0 0.0
  %1082 = vmatprep.subr.mxu0 0.0
  %1083 = vmatpush2.msra.mxu0 0.0
  %1084 = vmatprep.subr.mxu0 0.0
  %1085 = vmatpush2.msra.mxu0 0.0
  %1086 = vmatprep.subr.mxu0 0.0
  %1087 = vmatpush2.msra.mxu0 0.0
  %1088 = vmatprep.subr.mxu0 0.0
  %1089 = vmatpush2.msra.mxu0 0.0
  %1090 = vmatprep.subr.mxu0 0.0
  %1091 = vmatpush2.msra.mxu0 0.0
  %1092 = vmatprep.subr.mxu0 0.0
  %1093 = vmatpush2.msra.mxu0 0.0
  %1094 = vmatprep.subr.mxu0 0.0
  %1095 = vmatpush2.msra.mxu0 0.0
  %1096 = vmatprep.subr.mxu0 0.0
  %1097 = vmatpush2.msra.mxu0 0.0
  %1098 = vmatprep.mubr.f32.mxu0 0.0
  %1099 = vmatmul.mubr.f32.gmra.mxu0 %v1032
  %v1100 = vpop.f32.mrf.mxu0
  %v1101 = vadd.f32 %v215, %v1100
  %v1102 = vpop.f32.mrf.mxu0
  %1103 = vdwg.mxu0
  %1104 = vmatprep.subr.mxu0 0.0
  %1105 = vmatpush1.msra.mxu0 0.0
  %1106 = vmatprep.subr.mxu0 0.0
  %1107 = vmatpush1.msra.mxu0 0.0
  %1108 = vmatprep.subr.mxu0 0.0
  %1109 = vmatpush1.msra.mxu0 0.0
  %1110 = vmatprep.subr.mxu0 0.0
  %1111 = vmatpush1.msra.mxu0 0.0
  %1112 = vmatprep.subr.mxu0 0.0
  %1113 = vmatpush1.msra.mxu0 0.0
  %1114 = vmatprep.subr.mxu0 0.0
  %1115 = vmatpush1.msra.mxu0 0.0
  %1116 = vmatprep.subr.mxu0 0.0
  %1117 = vmatpush1.msra.mxu0 0.0
  %1118 = vmatprep.subr.mxu0 0.0
  %1119 = vmatpush1.msra.mxu0 0.0
  %1120 = vmatprep.subr.mxu0 0.0
  %1121 = vmatpush1.msra.mxu0 0.0
  %1122 = vmatprep.subr.mxu0 0.0
  %1123 = vmatpush1.msra.mxu0 0.0
  %1124 = vmatprep.subr.mxu0 0.0
  %1125 = vmatpush1.msra.mxu0 0.0
  %1126 = vmatprep.subr.mxu0 0.0
  %1127 = vmatpush1.msra.mxu0 0.0
  %1128 = vmatprep.subr.mxu0 0.0
  %1129 = vmatpush1.msra.mxu0 %v201
  %1130 = vmatprep.subr.mxu0 0.0
  %1131 = vmatpush1.msra.mxu0 %v200
  %1132 = vmatprep.subr.mxu0 0.0
  %1133 = vmatpush1.msra.mxu0 %v199
  %1134 = vmatprep.subr.mxu0 0.0
  %1135 = vmatpush1.msra.mxu0 %v198
  %1136 = vmatprep.subr.mxu0 0.0
  %1137 = vmatpush2.msra.mxu0 0.0
  %1138 = vmatprep.subr.mxu0 0.0
  %1139 = vmatpush2.msra.mxu0 0.0
  %1140 = vmatprep.subr.mxu0 0.0
  %1141 = vmatpush2.msra.mxu0 0.0
  %1142 = vmatprep.subr.mxu0 0.0
  %1143 = vmatpush2.msra.mxu0 0.0
  %1144 = vmatprep.subr.mxu0 0.0
  %1145 = vmatpush2.msra.mxu0 0.0
  %1146 = vmatprep.subr.mxu0 0.0
  %1147 = vmatpush2.msra.mxu0 0.0
  %1148 = vmatprep.subr.mxu0 0.0
  %1149 = vmatpush2.msra.mxu0 0.0
  %1150 = vmatprep.subr.mxu0 0.0
  %1151 = vmatpush2.msra.mxu0 0.0
  %1152 = vmatprep.subr.mxu0 0.0
  %1153 = vmatpush2.msra.mxu0 0.0
  %1154 = vmatprep.subr.mxu0 0.0
  %1155 = vmatpush2.msra.mxu0 0.0
  %1156 = vmatprep.subr.mxu0 0.0
  %1157 = vmatpush2.msra.mxu0 0.0
  %1158 = vmatprep.subr.mxu0 0.0
  %1159 = vmatpush2.msra.mxu0 0.0
  %1160 = vmatprep.subr.mxu0 0.0
  %1161 = vmatpush2.msra.mxu0 0.0
  %1162 = vmatprep.subr.mxu0 0.0
  %1163 = vmatpush2.msra.mxu0 0.0
  %1164 = vmatprep.subr.mxu0 0.0
  %1165 = vmatpush2.msra.mxu0 0.0
  %1166 = vmatprep.subr.mxu0 0.0
  %1167 = vmatpush2.msra.mxu0 0.0
  %1168 = vmatprep.mubr.f32.mxu0 0.0
  %1169 = vmatmul.mubr.f32.gmra.mxu0 %v932
  %v1170 = vpop.f32.mrf.mxu0
  %v1171 = vadd.f32 0.0, %v1170
  %v1172 = vpop.f32.mrf.mxu0
  %1173 = vdwg.mxu0
  %v1174 = vadd.f32 %v175, %v1171
  %v1175 = vxor.u32 %v1174, 2147483648
  %v1176 = vmul.f32 %v1175, 1.442695
  %v1177 = vpow.pop %v1176
  %v1178 = vadd.f32 %v1177, 1.0
  %v1179 = vrcp.pop %v1178
  %v1180 = vmul.f32 1.0, %v1179
  %v1181 = vmul.f32 %v1180, 2.0
  %v1182 = vsub.f32 %v1181, 1.0
  %v1183 = vmul.f32 %v1180, %v922
  %1185 = vrot.lane.b32.xlu0 %v1182, 64
  %v1186 = vpop.permute.xlu0 %1185
  %v1188 = vmul.f32 %v1180, %v1186
  %1190 = vrot.lane.b32.xlu0 %v1188, 32
  %v1191 = vpop.permute.xlu0 %1190
  %v1193 = vadd.f32 %v1183, %v1191
  %v1194 = vtanh.pop %v1193
  %1196 = vrot.lane.b32.xlu0 %v1194, 64
  %v1197 = vpop.permute.xlu0 %1196
  %v1199 = vmul.f32 %v1180, %v1197
  %1201 = vrot.lane.b32.xlu0 %v1199, 32
  %v1202 = vpop.permute.xlu0 %1201
  %v1203 = vsel %vm217, %v1202, 0
  %1205 = vmatprep.subr.mxu0 0.0
  %1206 = vmatpush1.msra.mxu0 0.0
  %1207 = vmatprep.subr.mxu0 0.0
  %1208 = vmatpush1.msra.mxu0 0.0
  %1209 = vmatprep.subr.mxu0 0.0
  %1210 = vmatpush1.msra.mxu0 0.0
  %1211 = vmatprep.subr.mxu0 0.0
  %1212 = vmatpush1.msra.mxu0 0.0
  %1213 = vmatprep.subr.mxu0 0.0
  %1214 = vmatpush1.msra.mxu0 0.0
  %1215 = vmatprep.subr.mxu0 0.0
  %1216 = vmatpush1.msra.mxu0 0.0
  %1217 = vmatprep.subr.mxu0 0.0
  %1218 = vmatpush1.msra.mxu0 0.0
  %1219 = vmatprep.subr.mxu0 0.0
  %1220 = vmatpush1.msra.mxu0 0.0
  %1221 = vmatprep.subr.mxu0 0.0
  %1222 = vmatpush1.msra.mxu0 0.0
  %1223 = vmatprep.subr.mxu0 0.0
  %1224 = vmatpush1.msra.mxu0 0.0
  %1225 = vmatprep.subr.mxu0 0.0
  %1226 = vmatpush1.msra.mxu0 0.0
  %1227 = vmatprep.subr.mxu0 0.0
  %1228 = vmatpush1.msra.mxu0 0.0
  %1229 = vmatprep.subr.mxu0 0.0
  %1230 = vmatpush1.msra.mxu0 %v205
  %1231 = vmatprep.subr.mxu0 0.0
  %1232 = vmatpush1.msra.mxu0 %v204
  %1233 = vmatprep.subr.mxu0 0.0
  %1234 = vmatpush1.msra.mxu0 %v203
  %1235 = vmatprep.subr.mxu0 0.0
  %1236 = vmatpush1.msra.mxu0 %v202
  %1237 = vmatprep.subr.mxu0 0.0
  %1238 = vmatpush2.msra.mxu0 0.0
  %1239 = vmatprep.subr.mxu0 0.0
  %1240 = vmatpush2.msra.mxu0 0.0
  %1241 = vmatprep.subr.mxu0 0.0
  %1242 = vmatpush2.msra.mxu0 0.0
  %1243 = vmatprep.subr.mxu0 0.0
  %1244 = vmatpush2.msra.mxu0 0.0
  %1245 = vmatprep.subr.mxu0 0.0
  %1246 = vmatpush2.msra.mxu0 0.0
  %1247 = vmatprep.subr.mxu0 0.0
  %1248 = vmatpush2.msra.mxu0 0.0
  %1249 = vmatprep.subr.mxu0 0.0
  %1250 = vmatpush2.msra.mxu0 0.0
  %1251 = vmatprep.subr.mxu0 0.0
  %1252 = vmatpush2.msra.mxu0 0.0
  %1253 = vmatprep.subr.mxu0 0.0
  %1254 = vmatpush2.msra.mxu0 0.0
  %1255 = vmatprep.subr.mxu0 0.0
  %1256 = vmatpush2.msra.mxu0 0.0
  %1257 = vmatprep.subr.mxu0 0.0
  %1258 = vmatpush2.msra.mxu0 0.0
  %1259 = vmatprep.subr.mxu0 0.0
  %1260 = vmatpush2.msra.mxu0 0.0
  %1261 = vmatprep.subr.mxu0 0.0
  %1262 = vmatpush2.msra.mxu0 0.0
  %1263 = vmatprep.subr.mxu0 0.0
  %1264 = vmatpush2.msra.mxu0 0.0
  %1265 = vmatprep.subr.mxu0 0.0
  %1266 = vmatpush2.msra.mxu0 0.0
  %1267 = vmatprep.subr.mxu0 0.0
  %1268 = vmatpush2.msra.mxu0 0.0
  %1269 = vmatprep.mubr.f32.mxu0 0.0
  %1270 = vmatmul.mubr.f32.gmra.mxu0 %v1203
  %v1271 = vpop.f32.mrf.mxu0
  %v1272 = vadd.f32 %v1101, %v1271
  %v1273 = vpop.f32.mrf.mxu0
  %1274 = vdwg.mxu0
  %v1275 = vxor.u32 %v1272, 2147483648
  %v1276 = vmul.f32 %v1275, 1.442695
  %v1277 = vpow.pop %v1276
  %v1278 = vadd.f32 %v1277, 1.0
  %v1279 = vrcp.pop %v1278
  %v1280 = vmul.f32 1.0, %v1279
  %v1281 = vmul.f32 %v1280, 2.0
  %v1282 = vsub.f32 %v1281, 1.0
  %v1283 = vmul.f32 %v1280, %v1022
  %1285 = vrot.lane.b32.xlu0 %v1282, 64
  %v1286 = vpop.permute.xlu0 %1285
  %v1288 = vmul.f32 %v1280, %v1286
  %1290 = vrot.lane.b32.xlu0 %v1288, 32
  %v1291 = vpop.permute.xlu0 %1290
  %v1293 = vadd.f32 %v1283, %v1291
  %v1294 = vtanh.pop %v1293
  %1296 = vrot.lane.b32.xlu0 %v1294, 64
  %v1297 = vpop.permute.xlu0 %1296
  %v1299 = vmul.f32 %v1280, %v1297
  %1301 = vrot.lane.b32.xlu0 %v1299, 32
  %v1302 = vpop.permute.xlu0 %1301
  %v1303 = vsel %vm217, %v1302, 0
  %1305 = vmatprep.subr.mxu0 0.0
  %1306 = vmatpush1.msra.mxu0 0.0
  %1307 = vmatprep.subr.mxu0 0.0
  %1308 = vmatpush1.msra.mxu0 0.0
  %1309 = vmatprep.subr.mxu0 0.0
  %1310 = vmatpush1.msra.mxu0 0.0
  %1311 = vmatprep.subr.mxu0 0.0
  %1312 = vmatpush1.msra.mxu0 0.0
  %1313 = vmatprep.subr.mxu0 0.0
  %1314 = vmatpush1.msra.mxu0 0.0
  %1315 = vmatprep.subr.mxu0 0.0
  %1316 = vmatpush1.msra.mxu0 0.0
  %1317 = vmatprep.subr.mxu0 0.0
  %1318 = vmatpush1.msra.mxu0 0.0
  %1319 = vmatprep.subr.mxu0 0.0
  %1320 = vmatpush1.msra.mxu0 0.0
  %1321 = vmatprep.subr.mxu0 0.0
  %1322 = vmatpush1.msra.mxu0 0.0
  %1323 = vmatprep.subr.mxu0 0.0
  %1324 = vmatpush1.msra.mxu0 0.0
  %1325 = vmatprep.subr.mxu0 0.0
  %1326 = vmatpush1.msra.mxu0 0.0
  %1327 = vmatprep.subr.mxu0 0.0
  %1328 = vmatpush1.msra.mxu0 0.0
  %1329 = vmatprep.subr.mxu0 0.0
  %1330 = vmatpush1.msra.mxu0 %v209
  %1331 = vmatprep.subr.mxu0 0.0
  %1332 = vmatpush1.msra.mxu0 %v208
  %1333 = vmatprep.subr.mxu0 0.0
  %1334 = vmatpush1.msra.mxu0 %v207
  %1335 = vmatprep.subr.mxu0 0.0
  %1336 = vmatpush1.msra.mxu0 %v206
  %1337 = vmatprep.subr.mxu0 0.0
  %1338 = vmatpush2.msra.mxu0 0.0
  %1339 = vmatprep.subr.mxu0 0.0
  %1340 = vmatpush2.msra.mxu0 0.0
  %1341 = vmatprep.subr.mxu0 0.0
  %1342 = vmatpush2.msra.mxu0 0.0
  %1343 = vmatprep.subr.mxu0 0.0
  %1344 = vmatpush2.msra.mxu0 0.0
  %1345 = vmatprep.subr.mxu0 0.0
  %1346 = vmatpush2.msra.mxu0 0.0
  %1347 = vmatprep.subr.mxu0 0.0
  %1348 = vmatpush2.msra.mxu0 0.0
  %1349 = vmatprep.subr.mxu0 0.0
  %1350 = vmatpush2.msra.mxu0 0.0
  %1351 = vmatprep.subr.mxu0 0.0
  %1352 = vmatpush2.msra.mxu0 0.0
  %1353 = vmatprep.subr.mxu0 0.0
  %1354 = vmatpush2.msra.mxu0 0.0
  %1355 = vmatprep.subr.mxu0 0.0
  %1356 = vmatpush2.msra.mxu0 0.0
  %1357 = vmatprep.subr.mxu0 0.0
  %1358 = vmatpush2.msra.mxu0 0.0
  %1359 = vmatprep.subr.mxu0 0.0
  %1360 = vmatpush2.msra.mxu0 0.0
  %1361 = vmatprep.subr.mxu0 0.0
  %1362 = vmatpush2.msra.mxu0 0.0
  %1363 = vmatprep.subr.mxu0 0.0
  %1364 = vmatpush2.msra.mxu0 0.0
  %1365 = vmatprep.subr.mxu0 0.0
  %1366 = vmatpush2.msra.mxu0 0.0
  %1367 = vmatprep.subr.mxu0 0.0
  %1368 = vmatpush2.msra.mxu0 0.0
  %1369 = vmatprep.mubr.f32.mxu0 0.0
  %1370 = vmatmul.mubr.f32.gmra.mxu0 %v1303
  %v1371 = vpop.f32.mrf.mxu0
  %v1372 = vadd.f32 %v215, %v1371
  %v1373 = vpop.f32.mrf.mxu0
  %1374 = vdwg.mxu0
  %1375 = vmatprep.subr.mxu0 0.0
  %1376 = vmatpush1.msra.mxu0 0.0
  %1377 = vmatprep.subr.mxu0 0.0
  %1378 = vmatpush1.msra.mxu0 0.0
  %1379 = vmatprep.subr.mxu0 0.0
  %1380 = vmatpush1.msra.mxu0 0.0
  %1381 = vmatprep.subr.mxu0 0.0
  %1382 = vmatpush1.msra.mxu0 0.0
  %1383 = vmatprep.subr.mxu0 0.0
  %1384 = vmatpush1.msra.mxu0 0.0
  %1385 = vmatprep.subr.mxu0 0.0
  %1386 = vmatpush1.msra.mxu0 0.0
  %1387 = vmatprep.subr.mxu0 0.0
  %1388 = vmatpush1.msra.mxu0 0.0
  %1389 = vmatprep.subr.mxu0 0.0
  %1390 = vmatpush1.msra.mxu0 0.0
  %1391 = vmatprep.subr.mxu0 0.0
  %1392 = vmatpush1.msra.mxu0 0.0
  %1393 = vmatprep.subr.mxu0 0.0
  %1394 = vmatpush1.msra.mxu0 0.0
  %1395 = vmatprep.subr.mxu0 0.0
  %1396 = vmatpush1.msra.mxu0 0.0
  %1397 = vmatprep.subr.mxu0 0.0
  %1398 = vmatpush1.msra.mxu0 0.0
  %1399 = vmatprep.subr.mxu0 0.0
  %1400 = vmatpush1.msra.mxu0 %v201
  %1401 = vmatprep.subr.mxu0 0.0
  %1402 = vmatpush1.msra.mxu0 %v200
  %1403 = vmatprep.subr.mxu0 0.0
  %1404 = vmatpush1.msra.mxu0 %v199
  %1405 = vmatprep.subr.mxu0 0.0
  %1406 = vmatpush1.msra.mxu0 %v198
  %1407 = vmatprep.subr.mxu0 0.0
  %1408 = vmatpush2.msra.mxu0 0.0
  %1409 = vmatprep.subr.mxu0 0.0
  %1410 = vmatpush2.msra.mxu0 0.0
  %1411 = vmatprep.subr.mxu0 0.0
  %1412 = vmatpush2.msra.mxu0 0.0
  %1413 = vmatprep.subr.mxu0 0.0
  %1414 = vmatpush2.msra.mxu0 0.0
  %1415 = vmatprep.subr.mxu0 0.0
  %1416 = vmatpush2.msra.mxu0 0.0
  %1417 = vmatprep.subr.mxu0 0.0
  %1418 = vmatpush2.msra.mxu0 0.0
  %1419 = vmatprep.subr.mxu0 0.0
  %1420 = vmatpush2.msra.mxu0 0.0
  %1421 = vmatprep.subr.mxu0 0.0
  %1422 = vmatpush2.msra.mxu0 0.0
  %1423 = vmatprep.subr.mxu0 0.0
  %1424 = vmatpush2.msra.mxu0 0.0
  %1425 = vmatprep.subr.mxu0 0.0
  %1426 = vmatpush2.msra.mxu0 0.0
  %1427 = vmatprep.subr.mxu0 0.0
  %1428 = vmatpush2.msra.mxu0 0.0
  %1429 = vmatprep.subr.mxu0 0.0
  %1430 = vmatpush2.msra.mxu0 0.0
  %1431 = vmatprep.subr.mxu0 0.0
  %1432 = vmatpush2.msra.mxu0 0.0
  %1433 = vmatprep.subr.mxu0 0.0
  %1434 = vmatpush2.msra.mxu0 0.0
  %1435 = vmatprep.subr.mxu0 0.0
  %1436 = vmatpush2.msra.mxu0 0.0
  %1437 = vmatprep.subr.mxu0 0.0
  %1438 = vmatpush2.msra.mxu0 0.0
  %1439 = vmatprep.mubr.f32.mxu0 0.0
  %1440 = vmatmul.mubr.f32.gmra.mxu0 %v1203
  %v1441 = vpop.f32.mrf.mxu0
  %v1442 = vadd.f32 0.0, %v1441
  %v1443 = vpop.f32.mrf.mxu0
  %1444 = vdwg.mxu0
  %v1445 = vadd.f32 %v180, %v1442
  %v1446 = vxor.u32 %v1445, 2147483648
  %v1447 = vmul.f32 %v1446, 1.442695
  %v1448 = vpow.pop %v1447
  %v1449 = vadd.f32 %v1448, 1.0
  %v1450 = vrcp.pop %v1449
  %v1451 = vmul.f32 1.0, %v1450
  %v1452 = vmul.f32 %v1451, 2.0
  %v1453 = vsub.f32 %v1452, 1.0
  %v1454 = vmul.f32 %v1451, %v1193
  %1456 = vrot.lane.b32.xlu0 %v1453, 64
  %v1457 = vpop.permute.xlu0 %1456
  %v1459 = vmul.f32 %v1451, %v1457
  %1461 = vrot.lane.b32.xlu0 %v1459, 32
  %v1462 = vpop.permute.xlu0 %1461
  %v1464 = vadd.f32 %v1454, %v1462
  %v1465 = vtanh.pop %v1464
  %1467 = vrot.lane.b32.xlu0 %v1465, 64
  %v1468 = vpop.permute.xlu0 %1467
  %v1470 = vmul.f32 %v1451, %v1468
  %1472 = vrot.lane.b32.xlu0 %v1470, 32
  %v1473 = vpop.permute.xlu0 %1472
  %v1474 = vsel %vm217, %v1473, 0
  %1476 = vmatprep.subr.mxu0 0.0
  %1477 = vmatpush1.msra.mxu0 0.0
  %1478 = vmatprep.subr.mxu0 0.0
  %1479 = vmatpush1.msra.mxu0 0.0
  %1480 = vmatprep.subr.mxu0 0.0
  %1481 = vmatpush1.msra.mxu0 0.0
  %1482 = vmatprep.subr.mxu0 0.0
  %1483 = vmatpush1.msra.mxu0 0.0
  %1484 = vmatprep.subr.mxu0 0.0
  %1485 = vmatpush1.msra.mxu0 0.0
  %1486 = vmatprep.subr.mxu0 0.0
  %1487 = vmatpush1.msra.mxu0 0.0
  %1488 = vmatprep.subr.mxu0 0.0
  %1489 = vmatpush1.msra.mxu0 0.0
  %1490 = vmatprep.subr.mxu0 0.0
  %1491 = vmatpush1.msra.mxu0 0.0
  %1492 = vmatprep.subr.mxu0 0.0
  %1493 = vmatpush1.msra.mxu0 0.0
  %1494 = vmatprep.subr.mxu0 0.0
  %1495 = vmatpush1.msra.mxu0 0.0
  %1496 = vmatprep.subr.mxu0 0.0
  %1497 = vmatpush1.msra.mxu0 0.0
  %1498 = vmatprep.subr.mxu0 0.0
  %1499 = vmatpush1.msra.mxu0 0.0
  %1500 = vmatprep.subr.mxu0 0.0
  %1501 = vmatpush1.msra.mxu0 %v205
  %1502 = vmatprep.subr.mxu0 0.0
  %1503 = vmatpush1.msra.mxu0 %v204
  %1504 = vmatprep.subr.mxu0 0.0
  %1505 = vmatpush1.msra.mxu0 %v203
  %1506 = vmatprep.subr.mxu0 0.0
  %1507 = vmatpush1.msra.mxu0 %v202
  %1508 = vmatprep.subr.mxu0 0.0
  %1509 = vmatpush2.msra.mxu0 0.0
  %1510 = vmatprep.subr.mxu0 0.0
  %1511 = vmatpush2.msra.mxu0 0.0
  %1512 = vmatprep.subr.mxu0 0.0
  %1513 = vmatpush2.msra.mxu0 0.0
  %1514 = vmatprep.subr.mxu0 0.0
  %1515 = vmatpush2.msra.mxu0 0.0
  %1516 = vmatprep.subr.mxu0 0.0
  %1517 = vmatpush2.msra.mxu0 0.0
  %1518 = vmatprep.subr.mxu0 0.0
  %1519 = vmatpush2.msra.mxu0 0.0
  %1520 = vmatprep.subr.mxu0 0.0
  %1521 = vmatpush2.msra.mxu0 0.0
  %1522 = vmatprep.subr.mxu0 0.0
  %1523 = vmatpush2.msra.mxu0 0.0
  %1524 = vmatprep.subr.mxu0 0.0
  %1525 = vmatpush2.msra.mxu0 0.0
  %1526 = vmatprep.subr.mxu0 0.0
  %1527 = vmatpush2.msra.mxu0 0.0
  %1528 = vmatprep.subr.mxu0 0.0
  %1529 = vmatpush2.msra.mxu0 0.0
  %1530 = vmatprep.subr.mxu0 0.0
  %1531 = vmatpush2.msra.mxu0 0.0
  %1532 = vmatprep.subr.mxu0 0.0
  %1533 = vmatpush2.msra.mxu0 0.0
  %1534 = vmatprep.subr.mxu0 0.0
  %1535 = vmatpush2.msra.mxu0 0.0
  %1536 = vmatprep.subr.mxu0 0.0
  %1537 = vmatpush2.msra.mxu0 0.0
  %1538 = vmatprep.subr.mxu0 0.0
  %1539 = vmatpush2.msra.mxu0 0.0
  %1540 = vmatprep.mubr.f32.mxu0 0.0
  %1541 = vmatmul.mubr.f32.gmra.mxu0 %v1474
  %v1542 = vpop.f32.mrf.mxu0
  %v1543 = vadd.f32 %v1372, %v1542
  %v1544 = vpop.f32.mrf.mxu0
  %1545 = vdwg.mxu0
  %v1546 = vxor.u32 %v1543, 2147483648
  %v1547 = vmul.f32 %v1546, 1.442695
  %v1548 = vpow.pop %v1547
  %v1549 = vadd.f32 %v1548, 1.0
  %v1550 = vrcp.pop %v1549
  %v1551 = vmul.f32 1.0, %v1550
  %v1552 = vmul.f32 %v1551, 2.0
  %v1553 = vsub.f32 %v1552, 1.0
  %v1554 = vmul.f32 %v1551, %v1293
  %1556 = vrot.lane.b32.xlu0 %v1553, 64
  %v1557 = vpop.permute.xlu0 %1556
  %v1559 = vmul.f32 %v1551, %v1557
  %1561 = vrot.lane.b32.xlu0 %v1559, 32
  %v1562 = vpop.permute.xlu0 %1561
  %v1564 = vadd.f32 %v1554, %v1562
  %v1565 = vtanh.pop %v1564
  %1567 = vrot.lane.b32.xlu0 %v1565, 64
  %v1568 = vpop.permute.xlu0 %1567
  %v1570 = vmul.f32 %v1551, %v1568
  %1572 = vrot.lane.b32.xlu0 %v1570, 32
  %v1573 = vpop.permute.xlu0 %1572
  %v1574 = vsel %vm217, %v1573, 0
  %1576 = vmatprep.subr.mxu0 0.0
  %1577 = vmatpush1.msra.mxu0 0.0
  %1578 = vmatprep.subr.mxu0 0.0
  %1579 = vmatpush1.msra.mxu0 0.0
  %1580 = vmatprep.subr.mxu0 0.0
  %1581 = vmatpush1.msra.mxu0 0.0
  %1582 = vmatprep.subr.mxu0 0.0
  %1583 = vmatpush1.msra.mxu0 0.0
  %1584 = vmatprep.subr.mxu0 0.0
  %1585 = vmatpush1.msra.mxu0 0.0
  %1586 = vmatprep.subr.mxu0 0.0
  %1587 = vmatpush1.msra.mxu0 0.0
  %1588 = vmatprep.subr.mxu0 0.0
  %1589 = vmatpush1.msra.mxu0 0.0
  %1590 = vmatprep.subr.mxu0 0.0
  %1591 = vmatpush1.msra.mxu0 0.0
  %1592 = vmatprep.subr.mxu0 0.0
  %1593 = vmatpush1.msra.mxu0 0.0
  %1594 = vmatprep.subr.mxu0 0.0
  %1595 = vmatpush1.msra.mxu0 0.0
  %1596 = vmatprep.subr.mxu0 0.0
  %1597 = vmatpush1.msra.mxu0 0.0
  %1598 = vmatprep.subr.mxu0 0.0
  %1599 = vmatpush1.msra.mxu0 0.0
  %1600 = vmatprep.subr.mxu0 0.0
  %1601 = vmatpush1.msra.mxu0 %v209
  %1602 = vmatprep.subr.mxu0 0.0
  %1603 = vmatpush1.msra.mxu0 %v208
  %1604 = vmatprep.subr.mxu0 0.0
  %1605 = vmatpush1.msra.mxu0 %v207
  %1606 = vmatprep.subr.mxu0 0.0
  %1607 = vmatpush1.msra.mxu0 %v206
  %1608 = vmatprep.subr.mxu0 0.0
  %1609 = vmatpush2.msra.mxu0 0.0
  %1610 = vmatprep.subr.mxu0 0.0
  %1611 = vmatpush2.msra.mxu0 0.0
  %1612 = vmatprep.subr.mxu0 0.0
  %1613 = vmatpush2.msra.mxu0 0.0
  %1614 = vmatprep.subr.mxu0 0.0
  %1615 = vmatpush2.msra.mxu0 0.0
  %1616 = vmatprep.subr.mxu0 0.0
  %1617 = vmatpush2.msra.mxu0 0.0
  %1618 = vmatprep.subr.mxu0 0.0
  %1619 = vmatpush2.msra.mxu0 0.0
  %1620 = vmatprep.subr.mxu0 0.0
  %1621 = vmatpush2.msra.mxu0 0.0
  %1622 = vmatprep.subr.mxu0 0.0
  %1623 = vmatpush2.msra.mxu0 0.0
  %1624 = vmatprep.subr.mxu0 0.0
  %1625 = vmatpush2.msra.mxu0 0.0
  %1626 = vmatprep.subr.mxu0 0.0
  %1627 = vmatpush2.msra.mxu0 0.0
  %1628 = vmatprep.subr.mxu0 0.0
  %1629 = vmatpush2.msra.mxu0 0.0
  %1630 = vmatprep.subr.mxu0 0.0
  %1631 = vmatpush2.msra.mxu0 0.0
  %1632 = vmatprep.subr.mxu0 0.0
  %1633 = vmatpush2.msra.mxu0 0.0
  %1634 = vmatprep.subr.mxu0 0.0
  %1635 = vmatpush2.msra.mxu0 0.0
  %1636 = vmatprep.subr.mxu0 0.0
  %1637 = vmatpush2.msra.mxu0 0.0
  %1638 = vmatprep.subr.mxu0 0.0
  %1639 = vmatpush2.msra.mxu0 0.0
  %1640 = vmatprep.mubr.f32.mxu0 0.0
  %1641 = vmatmul.mubr.f32.gmra.mxu0 %v1574
  %v1642 = vpop.f32.mrf.mxu0
  %v1643 = vadd.f32 %v215, %v1642
  %v1644 = vpop.f32.mrf.mxu0
  %1645 = vdwg.mxu0
  %1646 = vmatprep.subr.mxu0 0.0
  %1647 = vmatpush1.msra.mxu0 0.0
  %1648 = vmatprep.subr.mxu0 0.0
  %1649 = vmatpush1.msra.mxu0 0.0
  %1650 = vmatprep.subr.mxu0 0.0
  %1651 = vmatpush1.msra.mxu0 0.0
  %1652 = vmatprep.subr.mxu0 0.0
  %1653 = vmatpush1.msra.mxu0 0.0
  %1654 = vmatprep.subr.mxu0 0.0
  %1655 = vmatpush1.msra.mxu0 0.0
  %1656 = vmatprep.subr.mxu0 0.0
  %1657 = vmatpush1.msra.mxu0 0.0
  %1658 = vmatprep.subr.mxu0 0.0
  %1659 = vmatpush1.msra.mxu0 0.0
  %1660 = vmatprep.subr.mxu0 0.0
  %1661 = vmatpush1.msra.mxu0 0.0
  %1662 = vmatprep.subr.mxu0 0.0
  %1663 = vmatpush1.msra.mxu0 0.0
  %1664 = vmatprep.subr.mxu0 0.0
  %1665 = vmatpush1.msra.mxu0 0.0
  %1666 = vmatprep.subr.mxu0 0.0
  %1667 = vmatpush1.msra.mxu0 0.0
  %1668 = vmatprep.subr.mxu0 0.0
  %1669 = vmatpush1.msra.mxu0 0.0
  %1670 = vmatprep.subr.mxu0 0.0
  %1671 = vmatpush1.msra.mxu0 %v201
  %1672 = vmatprep.subr.mxu0 0.0
  %1673 = vmatpush1.msra.mxu0 %v200
  %1674 = vmatprep.subr.mxu0 0.0
  %1675 = vmatpush1.msra.mxu0 %v199
  %1676 = vmatprep.subr.mxu0 0.0
  %1677 = vmatpush1.msra.mxu0 %v198
  %1678 = vmatprep.subr.mxu0 0.0
  %1679 = vmatpush2.msra.mxu0 0.0
  %1680 = vmatprep.subr.mxu0 0.0
  %1681 = vmatpush2.msra.mxu0 0.0
  %1682 = vmatprep.subr.mxu0 0.0
  %1683 = vmatpush2.msra.mxu0 0.0
  %1684 = vmatprep.subr.mxu0 0.0
  %1685 = vmatpush2.msra.mxu0 0.0
  %1686 = vmatprep.subr.mxu0 0.0
  %1687 = vmatpush2.msra.mxu0 0.0
  %1688 = vmatprep.subr.mxu0 0.0
  %1689 = vmatpush2.msra.mxu0 0.0
  %1690 = vmatprep.subr.mxu0 0.0
  %1691 = vmatpush2.msra.mxu0 0.0
  %1692 = vmatprep.subr.mxu0 0.0
  %1693 = vmatpush2.msra.mxu0 0.0
  %1694 = vmatprep.subr.mxu0 0.0
  %1695 = vmatpush2.msra.mxu0 0.0
  %1696 = vmatprep.subr.mxu0 0.0
  %1697 = vmatpush2.msra.mxu0 0.0
  %1698 = vmatprep.subr.mxu0 0.0
  %1699 = vmatpush2.msra.mxu0 0.0
  %1700 = vmatprep.subr.mxu0 0.0
  %1701 = vmatpush2.msra.mxu0 0.0
  %1702 = vmatprep.subr.mxu0 0.0
  %1703 = vmatpush2.msra.mxu0 0.0
  %1704 = vmatprep.subr.mxu0 0.0
  %1705 = vmatpush2.msra.mxu0 0.0
  %1706 = vmatprep.subr.mxu0 0.0
  %1707 = vmatpush2.msra.mxu0 0.0
  %1708 = vmatprep.subr.mxu0 0.0
  %1709 = vmatpush2.msra.mxu0 0.0
  %1710 = vmatprep.mubr.f32.mxu0 0.0
  %1711 = vmatmul.mubr.f32.gmra.mxu0 %v1474
  %v1712 = vpop.f32.mrf.mxu0
  %v1713 = vadd.f32 0.0, %v1712
  %v1714 = vpop.f32.mrf.mxu0
  %1715 = vdwg.mxu0
  %v1716 = vadd.f32 %v185, %v1713
  %v1717 = vxor.u32 %v1716, 2147483648
  %v1718 = vmul.f32 %v1717, 1.442695
  %v1719 = vpow.pop %v1718
  %v1720 = vadd.f32 %v1719, 1.0
  %v1721 = vrcp.pop %v1720
  %v1722 = vmul.f32 1.0, %v1721
  %v1723 = vmul.f32 %v1722, 2.0
  %v1724 = vsub.f32 %v1723, 1.0
  %v1725 = vmul.f32 %v1722, %v1464
  %1727 = vrot.lane.b32.xlu0 %v1724, 64
  %v1728 = vpop.permute.xlu0 %1727
  %v1730 = vmul.f32 %v1722, %v1728
  %1732 = vrot.lane.b32.xlu0 %v1730, 32
  %v1733 = vpop.permute.xlu0 %1732
  %v1735 = vadd.f32 %v1725, %v1733
  %v1736 = vtanh.pop %v1735
  %1738 = vrot.lane.b32.xlu0 %v1736, 64
  %v1739 = vpop.permute.xlu0 %1738
  %v1741 = vmul.f32 %v1722, %v1739
  %1743 = vrot.lane.b32.xlu0 %v1741, 32
  %v1744 = vpop.permute.xlu0 %1743
  %v1745 = vsel %vm217, %v1744, 0
  %1747 = vmatprep.subr.mxu0 0.0
  %1748 = vmatpush1.msra.mxu0 0.0
  %1749 = vmatprep.subr.mxu0 0.0
  %1750 = vmatpush1.msra.mxu0 0.0
  %1751 = vmatprep.subr.mxu0 0.0
  %1752 = vmatpush1.msra.mxu0 0.0
  %1753 = vmatprep.subr.mxu0 0.0
  %1754 = vmatpush1.msra.mxu0 0.0
  %1755 = vmatprep.subr.mxu0 0.0
  %1756 = vmatpush1.msra.mxu0 0.0
  %1757 = vmatprep.subr.mxu0 0.0
  %1758 = vmatpush1.msra.mxu0 0.0
  %1759 = vmatprep.subr.mxu0 0.0
  %1760 = vmatpush1.msra.mxu0 0.0
  %1761 = vmatprep.subr.mxu0 0.0
  %1762 = vmatpush1.msra.mxu0 0.0
  %1763 = vmatprep.subr.mxu0 0.0
  %1764 = vmatpush1.msra.mxu0 0.0
  %1765 = vmatprep.subr.mxu0 0.0
  %1766 = vmatpush1.msra.mxu0 0.0
  %1767 = vmatprep.subr.mxu0 0.0
  %1768 = vmatpush1.msra.mxu0 0.0
  %1769 = vmatprep.subr.mxu0 0.0
  %1770 = vmatpush1.msra.mxu0 0.0
  %1771 = vmatprep.subr.mxu0 0.0
  %1772 = vmatpush1.msra.mxu0 %v205
  %1773 = vmatprep.subr.mxu0 0.0
  %1774 = vmatpush1.msra.mxu0 %v204
  %1775 = vmatprep.subr.mxu0 0.0
  %1776 = vmatpush1.msra.mxu0 %v203
  %1777 = vmatprep.subr.mxu0 0.0
  %1778 = vmatpush1.msra.mxu0 %v202
  %1779 = vmatprep.subr.mxu0 0.0
  %1780 = vmatpush2.msra.mxu0 0.0
  %1781 = vmatprep.subr.mxu0 0.0
  %1782 = vmatpush2.msra.mxu0 0.0
  %1783 = vmatprep.subr.mxu0 0.0
  %1784 = vmatpush2.msra.mxu0 0.0
  %1785 = vmatprep.subr.mxu0 0.0
  %1786 = vmatpush2.msra.mxu0 0.0
  %1787 = vmatprep.subr.mxu0 0.0
  %1788 = vmatpush2.msra.mxu0 0.0
  %1789 = vmatprep.subr.mxu0 0.0
  %1790 = vmatpush2.msra.mxu0 0.0
  %1791 = vmatprep.subr.mxu0 0.0
  %1792 = vmatpush2.msra.mxu0 0.0
  %1793 = vmatprep.subr.mxu0 0.0
  %1794 = vmatpush2.msra.mxu0 0.0
  %1795 = vmatprep.subr.mxu0 0.0
  %1796 = vmatpush2.msra.mxu0 0.0
  %1797 = vmatprep.subr.mxu0 0.0
  %1798 = vmatpush2.msra.mxu0 0.0
  %1799 = vmatprep.subr.mxu0 0.0
  %1800 = vmatpush2.msra.mxu0 0.0
  %1801 = vmatprep.subr.mxu0 0.0
  %1802 = vmatpush2.msra.mxu0 0.0
  %1803 = vmatprep.subr.mxu0 0.0
  %1804 = vmatpush2.msra.mxu0 0.0
  %1805 = vmatprep.subr.mxu0 0.0
  %1806 = vmatpush2.msra.mxu0 0.0
  %1807 = vmatprep.subr.mxu0 0.0
  %1808 = vmatpush2.msra.mxu0 0.0
  %1809 = vmatprep.subr.mxu0 0.0
  %1810 = vmatpush2.msra.mxu0 0.0
  %1811 = vmatprep.mubr.f32.mxu0 0.0
  %1812 = vmatmul.mubr.f32.gmra.mxu0 %v1745
  %v1813 = vpop.f32.mrf.mxu0
  %v1814 = vadd.f32 %v1643, %v1813
  %v1815 = vpop.f32.mrf.mxu0
  %1816 = vdwg.mxu0
  %v1817 = vxor.u32 %v1814, 2147483648
  %v1818 = vmul.f32 %v1817, 1.442695
  %v1819 = vpow.pop %v1818
  %v1820 = vadd.f32 %v1819, 1.0
  %v1821 = vrcp.pop %v1820
  %v1822 = vmul.f32 1.0, %v1821
  %v1823 = vmul.f32 %v1822, 2.0
  %v1824 = vsub.f32 %v1823, 1.0
  %v1825 = vmul.f32 %v1822, %v1564
  %1827 = vrot.lane.b32.xlu0 %v1824, 64
  %v1828 = vpop.permute.xlu0 %1827
  %v1830 = vmul.f32 %v1822, %v1828
  %1832 = vrot.lane.b32.xlu0 %v1830, 32
  %v1833 = vpop.permute.xlu0 %1832
  %v1835 = vadd.f32 %v1825, %v1833
  %v1836 = vtanh.pop %v1835
  %1838 = vrot.lane.b32.xlu0 %v1836, 64
  %v1839 = vpop.permute.xlu0 %1838
  %v1841 = vmul.f32 %v1822, %v1839
  %1843 = vrot.lane.b32.xlu0 %v1841, 32
  %v1844 = vpop.permute.xlu0 %1843
  %v1845 = vsel %vm217, %v1844, 0
  %1847 = vmatprep.subr.mxu0 0.0
  %1848 = vmatpush1.msra.mxu0 0.0
  %1849 = vmatprep.subr.mxu0 0.0
  %1850 = vmatpush1.msra.mxu0 0.0
  %1851 = vmatprep.subr.mxu0 0.0
  %1852 = vmatpush1.msra.mxu0 0.0
  %1853 = vmatprep.subr.mxu0 0.0
  %1854 = vmatpush1.msra.mxu0 0.0
  %1855 = vmatprep.subr.mxu0 0.0
  %1856 = vmatpush1.msra.mxu0 0.0
  %1857 = vmatprep.subr.mxu0 0.0
  %1858 = vmatpush1.msra.mxu0 0.0
  %1859 = vmatprep.subr.mxu0 0.0
  %1860 = vmatpush1.msra.mxu0 0.0
  %1861 = vmatprep.subr.mxu0 0.0
  %1862 = vmatpush1.msra.mxu0 0.0
  %1863 = vmatprep.subr.mxu0 0.0
  %1864 = vmatpush1.msra.mxu0 0.0
  %1865 = vmatprep.subr.mxu0 0.0
  %1866 = vmatpush1.msra.mxu0 0.0
  %1867 = vmatprep.subr.mxu0 0.0
  %1868 = vmatpush1.msra.mxu0 0.0
  %1869 = vmatprep.subr.mxu0 0.0
  %1870 = vmatpush1.msra.mxu0 0.0
  %1871 = vmatprep.subr.mxu0 0.0
  %1872 = vmatpush1.msra.mxu0 %v209
  %1873 = vmatprep.subr.mxu0 0.0
  %1874 = vmatpush1.msra.mxu0 %v208
  %1875 = vmatprep.subr.mxu0 0.0
  %1876 = vmatpush1.msra.mxu0 %v207
  %1877 = vmatprep.subr.mxu0 0.0
  %1878 = vmatpush1.msra.mxu0 %v206
  %1879 = vmatprep.subr.mxu0 0.0
  %1880 = vmatpush2.msra.mxu0 0.0
  %1881 = vmatprep.subr.mxu0 0.0
  %1882 = vmatpush2.msra.mxu0 0.0
  %1883 = vmatprep.subr.mxu0 0.0
  %1884 = vmatpush2.msra.mxu0 0.0
  %1885 = vmatprep.subr.mxu0 0.0
  %1886 = vmatpush2.msra.mxu0 0.0
  %1887 = vmatprep.subr.mxu0 0.0
  %1888 = vmatpush2.msra.mxu0 0.0
  %1889 = vmatprep.subr.mxu0 0.0
  %1890 = vmatpush2.msra.mxu0 0.0
  %1891 = vmatprep.subr.mxu0 0.0
  %1892 = vmatpush2.msra.mxu0 0.0
  %1893 = vmatprep.subr.mxu0 0.0
  %1894 = vmatpush2.msra.mxu0 0.0
  %1895 = vmatprep.subr.mxu0 0.0
  %1896 = vmatpush2.msra.mxu0 0.0
  %1897 = vmatprep.subr.mxu0 0.0
  %1898 = vmatpush2.msra.mxu0 0.0
  %1899 = vmatprep.subr.mxu0 0.0
  %1900 = vmatpush2.msra.mxu0 0.0
  %1901 = vmatprep.subr.mxu0 0.0
  %1902 = vmatpush2.msra.mxu0 0.0
  %1903 = vmatprep.subr.mxu0 0.0
  %1904 = vmatpush2.msra.mxu0 0.0
  %1905 = vmatprep.subr.mxu0 0.0
  %1906 = vmatpush2.msra.mxu0 0.0
  %1907 = vmatprep.subr.mxu0 0.0
  %1908 = vmatpush2.msra.mxu0 0.0
  %1909 = vmatprep.subr.mxu0 0.0
  %1910 = vmatpush2.msra.mxu0 0.0
  %1911 = vmatprep.mubr.f32.mxu0 0.0
  %1912 = vmatmul.mubr.f32.gmra.mxu0 %v1845
  %v1913 = vpop.f32.mrf.mxu0
  %v1914 = vadd.f32 %v215, %v1913
  %v1915 = vpop.f32.mrf.mxu0
  %1916 = vdwg.mxu0
  %1917 = vmatprep.subr.mxu0 0.0
  %1918 = vmatpush1.msra.mxu0 0.0
  %1919 = vmatprep.subr.mxu0 0.0
  %1920 = vmatpush1.msra.mxu0 0.0
  %1921 = vmatprep.subr.mxu0 0.0
  %1922 = vmatpush1.msra.mxu0 0.0
  %1923 = vmatprep.subr.mxu0 0.0
  %1924 = vmatpush1.msra.mxu0 0.0
  %1925 = vmatprep.subr.mxu0 0.0
  %1926 = vmatpush1.msra.mxu0 0.0
  %1927 = vmatprep.subr.mxu0 0.0
  %1928 = vmatpush1.msra.mxu0 0.0
  %1929 = vmatprep.subr.mxu0 0.0
  %1930 = vmatpush1.msra.mxu0 0.0
  %1931 = vmatprep.subr.mxu0 0.0
  %1932 = vmatpush1.msra.mxu0 0.0
  %1933 = vmatprep.subr.mxu0 0.0
  %1934 = vmatpush1.msra.mxu0 0.0
  %1935 = vmatprep.subr.mxu0 0.0
  %1936 = vmatpush1.msra.mxu0 0.0
  %1937 = vmatprep.subr.mxu0 0.0
  %1938 = vmatpush1.msra.mxu0 0.0
  %1939 = vmatprep.subr.mxu0 0.0
  %1940 = vmatpush1.msra.mxu0 0.0
  %1941 = vmatprep.subr.mxu0 0.0
  %1942 = vmatpush1.msra.mxu0 %v201
  %1943 = vmatprep.subr.mxu0 0.0
  %1944 = vmatpush1.msra.mxu0 %v200
  %1945 = vmatprep.subr.mxu0 0.0
  %1946 = vmatpush1.msra.mxu0 %v199
  %1947 = vmatprep.subr.mxu0 0.0
  %1948 = vmatpush1.msra.mxu0 %v198
  %1949 = vmatprep.subr.mxu0 0.0
  %1950 = vmatpush2.msra.mxu0 0.0
  %1951 = vmatprep.subr.mxu0 0.0
  %1952 = vmatpush2.msra.mxu0 0.0
  %1953 = vmatprep.subr.mxu0 0.0
  %1954 = vmatpush2.msra.mxu0 0.0
  %1955 = vmatprep.subr.mxu0 0.0
  %1956 = vmatpush2.msra.mxu0 0.0
  %1957 = vmatprep.subr.mxu0 0.0
  %1958 = vmatpush2.msra.mxu0 0.0
  %1959 = vmatprep.subr.mxu0 0.0
  %1960 = vmatpush2.msra.mxu0 0.0
  %1961 = vmatprep.subr.mxu0 0.0
  %1962 = vmatpush2.msra.mxu0 0.0
  %1963 = vmatprep.subr.mxu0 0.0
  %1964 = vmatpush2.msra.mxu0 0.0
  %1965 = vmatprep.subr.mxu0 0.0
  %1966 = vmatpush2.msra.mxu0 0.0
  %1967 = vmatprep.subr.mxu0 0.0
  %1968 = vmatpush2.msra.mxu0 0.0
  %1969 = vmatprep.subr.mxu0 0.0
  %1970 = vmatpush2.msra.mxu0 0.0
  %1971 = vmatprep.subr.mxu0 0.0
  %1972 = vmatpush2.msra.mxu0 0.0
  %1973 = vmatprep.subr.mxu0 0.0
  %1974 = vmatpush2.msra.mxu0 0.0
  %1975 = vmatprep.subr.mxu0 0.0
  %1976 = vmatpush2.msra.mxu0 0.0
  %1977 = vmatprep.subr.mxu0 0.0
  %1978 = vmatpush2.msra.mxu0 0.0
  %1979 = vmatprep.subr.mxu0 0.0
  %1980 = vmatpush2.msra.mxu0 0.0
  %1981 = vmatprep.mubr.f32.mxu0 0.0
  %1982 = vmatmul.mubr.f32.gmra.mxu0 %v1745
  %v1983 = vpop.f32.mrf.mxu0
  %v1984 = vadd.f32 0.0, %v1983
  %v1985 = vpop.f32.mrf.mxu0
  %1986 = vdwg.mxu0
  %v1987 = vadd.f32 %v190, %v1984
  %v1988 = vxor.u32 %v1987, 2147483648
  %v1989 = vmul.f32 %v1988, 1.442695
  %v1990 = vpow.pop %v1989
  %v1991 = vadd.f32 %v1990, 1.0
  %v1992 = vrcp.pop %v1991
  %v1993 = vmul.f32 1.0, %v1992
  %v1994 = vmul.f32 %v1993, 2.0
  %v1995 = vsub.f32 %v1994, 1.0
  %v1996 = vmul.f32 %v1993, %v1735
  %1998 = vrot.lane.b32.xlu0 %v1995, 64
  %v1999 = vpop.permute.xlu0 %1998
  %v2001 = vmul.f32 %v1993, %v1999
  %2003 = vrot.lane.b32.xlu0 %v2001, 32
  %v2004 = vpop.permute.xlu0 %2003
  %v2006 = vadd.f32 %v1996, %v2004
  %v2007 = vtanh.pop %v2006
  %2009 = vrot.lane.b32.xlu0 %v2007, 64
  %v2010 = vpop.permute.xlu0 %2009
  %v2012 = vmul.f32 %v1993, %v2010
  %2014 = vrot.lane.b32.xlu0 %v2012, 32
  %v2015 = vpop.permute.xlu0 %2014
  %v2016 = vsel %vm217, %v2015, 0
  %2018 = vmatprep.subr.mxu0 0.0
  %2019 = vmatpush1.msra.mxu0 0.0
  %2020 = vmatprep.subr.mxu0 0.0
  %2021 = vmatpush1.msra.mxu0 0.0
  %2022 = vmatprep.subr.mxu0 0.0
  %2023 = vmatpush1.msra.mxu0 0.0
  %2024 = vmatprep.subr.mxu0 0.0
  %2025 = vmatpush1.msra.mxu0 0.0
  %2026 = vmatprep.subr.mxu0 0.0
  %2027 = vmatpush1.msra.mxu0 0.0
  %2028 = vmatprep.subr.mxu0 0.0
  %2029 = vmatpush1.msra.mxu0 0.0
  %2030 = vmatprep.subr.mxu0 0.0
  %2031 = vmatpush1.msra.mxu0 0.0
  %2032 = vmatprep.subr.mxu0 0.0
  %2033 = vmatpush1.msra.mxu0 0.0
  %2034 = vmatprep.subr.mxu0 0.0
  %2035 = vmatpush1.msra.mxu0 0.0
  %2036 = vmatprep.subr.mxu0 0.0
  %2037 = vmatpush1.msra.mxu0 0.0
  %2038 = vmatprep.subr.mxu0 0.0
  %2039 = vmatpush1.msra.mxu0 0.0
  %2040 = vmatprep.subr.mxu0 0.0
  %2041 = vmatpush1.msra.mxu0 0.0
  %2042 = vmatprep.subr.mxu0 0.0
  %2043 = vmatpush1.msra.mxu0 %v205
  %2044 = vmatprep.subr.mxu0 0.0
  %2045 = vmatpush1.msra.mxu0 %v204
  %2046 = vmatprep.subr.mxu0 0.0
  %2047 = vmatpush1.msra.mxu0 %v203
  %2048 = vmatprep.subr.mxu0 0.0
  %2049 = vmatpush1.msra.mxu0 %v202
  %2050 = vmatprep.subr.mxu0 0.0
  %2051 = vmatpush2.msra.mxu0 0.0
  %2052 = vmatprep.subr.mxu0 0.0
  %2053 = vmatpush2.msra.mxu0 0.0
  %2054 = vmatprep.subr.mxu0 0.0
  %2055 = vmatpush2.msra.mxu0 0.0
  %2056 = vmatprep.subr.mxu0 0.0
  %2057 = vmatpush2.msra.mxu0 0.0
  %2058 = vmatprep.subr.mxu0 0.0
  %2059 = vmatpush2.msra.mxu0 0.0
  %2060 = vmatprep.subr.mxu0 0.0
  %2061 = vmatpush2.msra.mxu0 0.0
  %2062 = vmatprep.subr.mxu0 0.0
  %2063 = vmatpush2.msra.mxu0 0.0
  %2064 = vmatprep.subr.mxu0 0.0
  %2065 = vmatpush2.msra.mxu0 0.0
  %2066 = vmatprep.subr.mxu0 0.0
  %2067 = vmatpush2.msra.mxu0 0.0
  %2068 = vmatprep.subr.mxu0 0.0
  %2069 = vmatpush2.msra.mxu0 0.0
  %2070 = vmatprep.subr.mxu0 0.0
  %2071 = vmatpush2.msra.mxu0 0.0
  %2072 = vmatprep.subr.mxu0 0.0
  %2073 = vmatpush2.msra.mxu0 0.0
  %2074 = vmatprep.subr.mxu0 0.0
  %2075 = vmatpush2.msra.mxu0 0.0
  %2076 = vmatprep.subr.mxu0 0.0
  %2077 = vmatpush2.msra.mxu0 0.0
  %2078 = vmatprep.subr.mxu0 0.0
  %2079 = vmatpush2.msra.mxu0 0.0
  %2080 = vmatprep.subr.mxu0 0.0
  %2081 = vmatpush2.msra.mxu0 0.0
  %2082 = vmatprep.mubr.f32.mxu0 0.0
  %2083 = vmatmul.mubr.f32.gmra.mxu0 %v2016
  %v2084 = vpop.f32.mrf.mxu0
  %v2085 = vadd.f32 %v1914, %v2084
  %v2086 = vpop.f32.mrf.mxu0
  %2087 = vdwg.mxu0
  %v2088 = vxor.u32 %v2085, 2147483648
  %v2089 = vmul.f32 %v2088, 1.442695
  %v2090 = vpow.pop %v2089
  %v2091 = vadd.f32 %v2090, 1.0
  %v2092 = vrcp.pop %v2091
  %v2093 = vmul.f32 1.0, %v2092
  %v2094 = vmul.f32 %v2093, 2.0
  %v2095 = vsub.f32 %v2094, 1.0
  %v2096 = vmul.f32 %v2093, %v1835
  %2098 = vrot.lane.b32.xlu0 %v2095, 64
  %v2099 = vpop.permute.xlu0 %2098
  %v2101 = vmul.f32 %v2093, %v2099
  %2103 = vrot.lane.b32.xlu0 %v2101, 32
  %v2104 = vpop.permute.xlu0 %2103
  %v2106 = vadd.f32 %v2096, %v2104
  %v2107 = vtanh.pop %v2106
  %2109 = vrot.lane.b32.xlu0 %v2107, 64
  %v2110 = vpop.permute.xlu0 %2109
  %v2112 = vmul.f32 %v2093, %v2110
  %2114 = vrot.lane.b32.xlu0 %v2112, 32
  %v2115 = vpop.permute.xlu0 %2114
  %v2116 = vsel %vm217, %v2115, 0
  %2118 = vmatprep.subr.mxu0 0.0
  %2119 = vmatpush1.msra.mxu0 0.0
  %2120 = vmatprep.subr.mxu0 0.0
  %2121 = vmatpush1.msra.mxu0 0.0
  %2122 = vmatprep.subr.mxu0 0.0
  %2123 = vmatpush1.msra.mxu0 0.0
  %2124 = vmatprep.subr.mxu0 0.0
  %2125 = vmatpush1.msra.mxu0 0.0
  %2126 = vmatprep.subr.mxu0 0.0
  %2127 = vmatpush1.msra.mxu0 0.0
  %2128 = vmatprep.subr.mxu0 0.0
  %2129 = vmatpush1.msra.mxu0 0.0
  %2130 = vmatprep.subr.mxu0 0.0
  %2131 = vmatpush1.msra.mxu0 0.0
  %2132 = vmatprep.subr.mxu0 0.0
  %2133 = vmatpush1.msra.mxu0 0.0
  %2134 = vmatprep.subr.mxu0 0.0
  %2135 = vmatpush1.msra.mxu0 0.0
  %2136 = vmatprep.subr.mxu0 0.0
  %2137 = vmatpush1.msra.mxu0 0.0
  %2138 = vmatprep.subr.mxu0 0.0
  %2139 = vmatpush1.msra.mxu0 0.0
  %2140 = vmatprep.subr.mxu0 0.0
  %2141 = vmatpush1.msra.mxu0 0.0
  %2142 = vmatprep.subr.mxu0 0.0
  %2143 = vmatpush1.msra.mxu0 %v209
  %2144 = vmatprep.subr.mxu0 0.0
  %2145 = vmatpush1.msra.mxu0 %v208
  %2146 = vmatprep.subr.mxu0 0.0
  %2147 = vmatpush1.msra.mxu0 %v207
  %2148 = vmatprep.subr.mxu0 0.0
  %2149 = vmatpush1.msra.mxu0 %v206
  %2150 = vmatprep.subr.mxu0 0.0
  %2151 = vmatpush2.msra.mxu0 0.0
  %2152 = vmatprep.subr.mxu0 0.0
  %2153 = vmatpush2.msra.mxu0 0.0
  %2154 = vmatprep.subr.mxu0 0.0
  %2155 = vmatpush2.msra.mxu0 0.0
  %2156 = vmatprep.subr.mxu0 0.0
  %2157 = vmatpush2.msra.mxu0 0.0
  %2158 = vmatprep.subr.mxu0 0.0
  %2159 = vmatpush2.msra.mxu0 0.0
  %2160 = vmatprep.subr.mxu0 0.0
  %2161 = vmatpush2.msra.mxu0 0.0
  %2162 = vmatprep.subr.mxu0 0.0
  %2163 = vmatpush2.msra.mxu0 0.0
  %2164 = vmatprep.subr.mxu0 0.0
  %2165 = vmatpush2.msra.mxu0 0.0
  %2166 = vmatprep.subr.mxu0 0.0
  %2167 = vmatpush2.msra.mxu0 0.0
  %2168 = vmatprep.subr.mxu0 0.0
  %2169 = vmatpush2.msra.mxu0 0.0
  %2170 = vmatprep.subr.mxu0 0.0
  %2171 = vmatpush2.msra.mxu0 0.0
  %2172 = vmatprep.subr.mxu0 0.0
  %2173 = vmatpush2.msra.mxu0 0.0
  %2174 = vmatprep.subr.mxu0 0.0
  %2175 = vmatpush2.msra.mxu0 0.0
  %2176 = vmatprep.subr.mxu0 0.0
  %2177 = vmatpush2.msra.mxu0 0.0
  %2178 = vmatprep.subr.mxu0 0.0
  %2179 = vmatpush2.msra.mxu0 0.0
  %2180 = vmatprep.subr.mxu0 0.0
  %2181 = vmatpush2.msra.mxu0 0.0
  %2182 = vmatprep.mubr.f32.mxu0 0.0
  %2183 = vmatmul.mubr.f32.gmra.mxu0 %v2116
  %v2184 = vpop.f32.mrf.mxu0
  %v2185 = vadd.f32 %v215, %v2184
  %v2186 = vpop.f32.mrf.mxu0
  %2187 = vdwg.mxu0
  %2188 = vmatprep.subr.mxu0 0.0
  %2189 = vmatpush1.msra.mxu0 0.0
  %2190 = vmatprep.subr.mxu0 0.0
  %2191 = vmatpush1.msra.mxu0 0.0
  %2192 = vmatprep.subr.mxu0 0.0
  %2193 = vmatpush1.msra.mxu0 0.0
  %2194 = vmatprep.subr.mxu0 0.0
  %2195 = vmatpush1.msra.mxu0 0.0
  %2196 = vmatprep.subr.mxu0 0.0
  %2197 = vmatpush1.msra.mxu0 0.0
  %2198 = vmatprep.subr.mxu0 0.0
  %2199 = vmatpush1.msra.mxu0 0.0
  %2200 = vmatprep.subr.mxu0 0.0
  %2201 = vmatpush1.msra.mxu0 0.0
  %2202 = vmatprep.subr.mxu0 0.0
  %2203 = vmatpush1.msra.mxu0 0.0
  %2204 = vmatprep.subr.mxu0 0.0
  %2205 = vmatpush1.msra.mxu0 0.0
  %2206 = vmatprep.subr.mxu0 0.0
  %2207 = vmatpush1.msra.mxu0 0.0
  %2208 = vmatprep.subr.mxu0 0.0
  %2209 = vmatpush1.msra.mxu0 0.0
  %2210 = vmatprep.subr.mxu0 0.0
  %2211 = vmatpush1.msra.mxu0 0.0
  %2212 = vmatprep.subr.mxu0 0.0
  %2213 = vmatpush1.msra.mxu0 %v201
  %2214 = vmatprep.subr.mxu0 0.0
  %2215 = vmatpush1.msra.mxu0 %v200
  %2216 = vmatprep.subr.mxu0 0.0
  %2217 = vmatpush1.msra.mxu0 %v199
  %2218 = vmatprep.subr.mxu0 0.0
  %2219 = vmatpush1.msra.mxu0 %v198
  %2220 = vmatprep.subr.mxu0 0.0
  %2221 = vmatpush2.msra.mxu0 0.0
  %2222 = vmatprep.subr.mxu0 0.0
  %2223 = vmatpush2.msra.mxu0 0.0
  %2224 = vmatprep.subr.mxu0 0.0
  %2225 = vmatpush2.msra.mxu0 0.0
  %2226 = vmatprep.subr.mxu0 0.0
  %2227 = vmatpush2.msra.mxu0 0.0
  %2228 = vmatprep.subr.mxu0 0.0
  %2229 = vmatpush2.msra.mxu0 0.0
  %2230 = vmatprep.subr.mxu0 0.0
  %2231 = vmatpush2.msra.mxu0 0.0
  %2232 = vmatprep.subr.mxu0 0.0
  %2233 = vmatpush2.msra.mxu0 0.0
  %2234 = vmatprep.subr.mxu0 0.0
  %2235 = vmatpush2.msra.mxu0 0.0
  %2236 = vmatprep.subr.mxu0 0.0
  %2237 = vmatpush2.msra.mxu0 0.0
  %2238 = vmatprep.subr.mxu0 0.0
  %2239 = vmatpush2.msra.mxu0 0.0
  %2240 = vmatprep.subr.mxu0 0.0
  %2241 = vmatpush2.msra.mxu0 0.0
  %2242 = vmatprep.subr.mxu0 0.0
  %2243 = vmatpush2.msra.mxu0 0.0
  %2244 = vmatprep.subr.mxu0 0.0
  %2245 = vmatpush2.msra.mxu0 0.0
  %2246 = vmatprep.subr.mxu0 0.0
  %2247 = vmatpush2.msra.mxu0 0.0
  %2248 = vmatprep.subr.mxu0 0.0
  %2249 = vmatpush2.msra.mxu0 0.0
  %2250 = vmatprep.subr.mxu0 0.0
  %2251 = vmatpush2.msra.mxu0 0.0
  %2252 = vmatprep.mubr.f32.mxu0 0.0
  %2253 = vmatmul.mubr.f32.gmra.mxu0 %v2016
  %v2254 = vpop.f32.mrf.mxu0
  %v2255 = vadd.f32 0.0, %v2254
  %v2256 = vpop.f32.mrf.mxu0
  %2257 = vdwg.mxu0
  %v2258 = vadd.f32 %v195, %v2255
  %v2259 = vxor.u32 %v2258, 2147483648
  %v2260 = vmul.f32 %v2259, 1.442695
  %v2261 = vpow.pop %v2260
  %v2262 = vadd.f32 %v2261, 1.0
  %v2263 = vrcp.pop %v2262
  %v2264 = vmul.f32 1.0, %v2263
  %v2265 = vmul.f32 %v2264, 2.0
  %v2266 = vsub.f32 %v2265, 1.0
  %v2267 = vmul.f32 %v2264, %v2006
  %2269 = vrot.lane.b32.xlu0 %v2266, 64
  %v2270 = vpop.permute.xlu0 %2269
  %v2272 = vmul.f32 %v2264, %v2270
  %2274 = vrot.lane.b32.xlu0 %v2272, 32
  %v2275 = vpop.permute.xlu0 %2274
  %v2277 = vadd.f32 %v2267, %v2275
  %v2278 = vtanh.pop %v2277
  %2280 = vrot.lane.b32.xlu0 %v2278, 64
  %v2281 = vpop.permute.xlu0 %2280
  %v2283 = vmul.f32 %v2264, %v2281
  %2285 = vrot.lane.b32.xlu0 %v2283, 32
  %v2286 = vpop.permute.xlu0 %2285
  %v2287 = vsel %vm217, %v2286, 0
  %2289 = vmatprep.subr.mxu0 0.0
  %2290 = vmatpush1.msra.mxu0 0.0
  %2291 = vmatprep.subr.mxu0 0.0
  %2292 = vmatpush1.msra.mxu0 0.0
  %2293 = vmatprep.subr.mxu0 0.0
  %2294 = vmatpush1.msra.mxu0 0.0
  %2295 = vmatprep.subr.mxu0 0.0
  %2296 = vmatpush1.msra.mxu0 0.0
  %2297 = vmatprep.subr.mxu0 0.0
  %2298 = vmatpush1.msra.mxu0 0.0
  %2299 = vmatprep.subr.mxu0 0.0
  %2300 = vmatpush1.msra.mxu0 0.0
  %2301 = vmatprep.subr.mxu0 0.0
  %2302 = vmatpush1.msra.mxu0 0.0
  %2303 = vmatprep.subr.mxu0 0.0
  %2304 = vmatpush1.msra.mxu0 0.0
  %2305 = vmatprep.subr.mxu0 0.0
  %2306 = vmatpush1.msra.mxu0 0.0
  %2307 = vmatprep.subr.mxu0 0.0
  %2308 = vmatpush1.msra.mxu0 0.0
  %2309 = vmatprep.subr.mxu0 0.0
  %2310 = vmatpush1.msra.mxu0 0.0
  %2311 = vmatprep.subr.mxu0 0.0
  %2312 = vmatpush1.msra.mxu0 0.0
  %2313 = vmatprep.subr.mxu0 0.0
  %2314 = vmatpush1.msra.mxu0 %v205
  %2315 = vmatprep.subr.mxu0 0.0
  %2316 = vmatpush1.msra.mxu0 %v204
  %2317 = vmatprep.subr.mxu0 0.0
  %2318 = vmatpush1.msra.mxu0 %v203
  %2319 = vmatprep.subr.mxu0 0.0
  %2320 = vmatpush1.msra.mxu0 %v202
  %2321 = vmatprep.subr.mxu0 0.0
  %2322 = vmatpush2.msra.mxu0 0.0
  %2323 = vmatprep.subr.mxu0 0.0
  %2324 = vmatpush2.msra.mxu0 0.0
  %2325 = vmatprep.subr.mxu0 0.0
  %2326 = vmatpush2.msra.mxu0 0.0
  %2327 = vmatprep.subr.mxu0 0.0
  %2328 = vmatpush2.msra.mxu0 0.0
  %2329 = vmatprep.subr.mxu0 0.0
  %2330 = vmatpush2.msra.mxu0 0.0
  %2331 = vmatprep.subr.mxu0 0.0
  %2332 = vmatpush2.msra.mxu0 0.0
  %2333 = vmatprep.subr.mxu0 0.0
  %2334 = vmatpush2.msra.mxu0 0.0
  %2335 = vmatprep.subr.mxu0 0.0
  %2336 = vmatpush2.msra.mxu0 0.0
  %2337 = vmatprep.subr.mxu0 0.0
  %2338 = vmatpush2.msra.mxu0 0.0
  %2339 = vmatprep.subr.mxu0 0.0
  %2340 = vmatpush2.msra.mxu0 0.0
  %2341 = vmatprep.subr.mxu0 0.0
  %2342 = vmatpush2.msra.mxu0 0.0
  %2343 = vmatprep.subr.mxu0 0.0
  %2344 = vmatpush2.msra.mxu0 0.0
  %2345 = vmatprep.subr.mxu0 0.0
  %2346 = vmatpush2.msra.mxu0 0.0
  %2347 = vmatprep.subr.mxu0 0.0
  %2348 = vmatpush2.msra.mxu0 0.0
  %2349 = vmatprep.subr.mxu0 0.0
  %2350 = vmatpush2.msra.mxu0 0.0
  %2351 = vmatprep.subr.mxu0 0.0
  %2352 = vmatpush2.msra.mxu0 0.0
  %2353 = vmatprep.mubr.f32.mxu0 0.0
  %2354 = vmatmul.mubr.f32.gmra.mxu0 %v2287
  %v2355 = vpop.f32.mrf.mxu0
  %v2356 = vadd.f32 %v2185, %v2355
  %v2357 = vpop.f32.mrf.mxu0
  %2358 = vdwg.mxu0
  %v2359 = vxor.u32 %v2356, 2147483648
  %v2360 = vmul.f32 %v2359, 1.442695
  %v2361 = vpow.pop %v2360
  %v2362 = vadd.f32 %v2361, 1.0
  %v2363 = vrcp.pop %v2362
  %v2364 = vmul.f32 1.0, %v2363
  %v2365 = vmul.f32 %v2364, 2.0
  %v2366 = vsub.f32 %v2365, 1.0
  %v2367 = vmul.f32 %v2364, %v2106
  %2369 = vrot.lane.b32.xlu0 %v2366, 64
  %v2370 = vpop.permute.xlu0 %2369
  %v2372 = vmul.f32 %v2364, %v2370
  %2374 = vrot.lane.b32.xlu0 %v2372, 32
  %v2375 = vpop.permute.xlu0 %2374
  %v2377 = vadd.f32 %v2367, %v2375
  %v2378 = vtanh.pop %v2377
  %2380 = vrot.lane.b32.xlu0 %v2378, 64
  %v2381 = vpop.permute.xlu0 %2380
  %v2383 = vmul.f32 %v2364, %v2381
  %v2384 = vld [vmem:[%s7] sm:$0xff]
  %v2385 = vld [vmem:[%s7 + $0x8] sm:$0xff]
  %v2386 = vld [vmem:[%s7 + $0x10] sm:$0xff]
  %v2387 = vld [vmem:[%s7 + $0x18] sm:$0xff]
  %v2388 = vld [vmem:[%s8] sm:$0x1]
  %v2390 = vlaneseq
  %v2391 = vshrl.u32 %v2390, 7
  %v2392 = vsub.s32 0, %v2391
  %v2393 = vrot.slane %v2388, %v2392
  %2396 = vrot.lane.b32.xlu0 %v2383, 32
  %v2397 = vpop.permute.xlu0 %2396
  %v2398 = vsel %vm217, %v2397, 0
  %2400 = vmatprep.subr.mxu0 0.0
  %2401 = vmatpush1.msra.mxu0 0.0
  %2402 = vmatprep.subr.mxu0 0.0
  %2403 = vmatpush1.msra.mxu0 0.0
  %2404 = vmatprep.subr.mxu0 0.0
  %2405 = vmatpush1.msra.mxu0 0.0
  %2406 = vmatprep.subr.mxu0 0.0
  %2407 = vmatpush1.msra.mxu0 0.0
  %2408 = vmatprep.subr.mxu0 0.0
  %2409 = vmatpush1.msra.mxu0 0.0
  %2410 = vmatprep.subr.mxu0 0.0
  %2411 = vmatpush1.msra.mxu0 0.0
  %2412 = vmatprep.subr.mxu0 0.0
  %2413 = vmatpush1.msra.mxu0 0.0
  %2414 = vmatprep.subr.mxu0 0.0
  %2415 = vmatpush1.msra.mxu0 0.0
  %2416 = vmatprep.subr.mxu0 0.0
  %2417 = vmatpush1.msra.mxu0 0.0
  %2418 = vmatprep.subr.mxu0 0.0
  %2419 = vmatpush1.msra.mxu0 0.0
  %2420 = vmatprep.subr.mxu0 0.0
  %2421 = vmatpush1.msra.mxu0 0.0
  %2422 = vmatprep.subr.mxu0 0.0
  %2423 = vmatpush1.msra.mxu0 0.0
  %2424 = vmatprep.subr.mxu0 0.0
  %2425 = vmatpush1.msra.mxu0 %v2387
  %2426 = vmatprep.subr.mxu0 0.0
  %2427 = vmatpush1.msra.mxu0 %v2386
  %2428 = vmatprep.subr.mxu0 0.0
  %2429 = vmatpush1.msra.mxu0 %v2385
  %2430 = vmatprep.subr.mxu0 0.0
  %2431 = vmatpush1.msra.mxu0 %v2384
  %2432 = vmatprep.subr.mxu0 0.0
  %2433 = vmatpush2.msra.mxu0 0.0
  %2434 = vmatprep.subr.mxu0 0.0
  %2435 = vmatpush2.msra.mxu0 0.0
  %2436 = vmatprep.subr.mxu0 0.0
  %2437 = vmatpush2.msra.mxu0 0.0
  %2438 = vmatprep.subr.mxu0 0.0
  %2439 = vmatpush2.msra.mxu0 0.0
  %2440 = vmatprep.subr.mxu0 0.0
  %2441 = vmatpush2.msra.mxu0 0.0
  %2442 = vmatprep.subr.mxu0 0.0
  %2443 = vmatpush2.msra.mxu0 0.0
  %2444 = vmatprep.subr.mxu0 0.0
  %2445 = vmatpush2.msra.mxu0 0.0
  %2446 = vmatprep.subr.mxu0 0.0
  %2447 = vmatpush2.msra.mxu0 0.0
  %2448 = vmatprep.subr.mxu0 0.0
  %2449 = vmatpush2.msra.mxu0 0.0
  %2450 = vmatprep.subr.mxu0 0.0
  %2451 = vmatpush2.msra.mxu0 0.0
  %2452 = vmatprep.subr.mxu0 0.0
  %2453 = vmatpush2.msra.mxu0 0.0
  %2454 = vmatprep.subr.mxu0 0.0
  %2455 = vmatpush2.msra.mxu0 0.0
  %2456 = vmatprep.subr.mxu0 0.0
  %2457 = vmatpush2.msra.mxu0 0.0
  %2458 = vmatprep.subr.mxu0 0.0
  %2459 = vmatpush2.msra.mxu0 0.0
  %2460 = vmatprep.subr.mxu0 0.0
  %2461 = vmatpush2.msra.mxu0 0.0
  %2462 = vmatprep.subr.mxu0 0.0
  %2463 = vmatpush2.msra.mxu0 0.0
  %2464 = vmatprep.mubr.f32.mxu0 0.0
  %2465 = vmatmul.mubr.f32.gmra.mxu0 %v490
  %v2466 = vpop.f32.mrf.mxu0
  %v2467 = vadd.f32 %v2393, %v2466
  %v2468 = vpop.f32.mrf.mxu0
  %2469 = vmatprep.mubr.f32.mxu0 0.0
  %2470 = vmatmul.mubr.f32.gmra.mxu0 %v761
  %v2471 = vpop.f32.mrf.mxu0
  %v2472 = vadd.f32 %v2393, %v2471
  %v2473 = vpop.f32.mrf.mxu0
  %2474 = vmatprep.mubr.f32.mxu0 0.0
  %2475 = vmatmul.mubr.f32.gmra.mxu0 %v1032
  %v2476 = vpop.f32.mrf.mxu0
  %v2477 = vadd.f32 %v2393, %v2476
  %v2478 = vpop.f32.mrf.mxu0
  %2479 = vmatprep.mubr.f32.mxu0 0.0
  %2480 = vmatmul.mubr.f32.gmra.mxu0 %v1303
  %v2481 = vpop.f32.mrf.mxu0
  %v2482 = vadd.f32 %v2393, %v2481
  %v2483 = vpop.f32.mrf.mxu0
  %2484 = vmatprep.mubr.f32.mxu0 0.0
  %2485 = vmatmul.mubr.f32.gmra.mxu0 %v1574
  %v2486 = vpop.f32.mrf.mxu0
  %v2487 = vadd.f32 %v2393, %v2486
  %v2488 = vpop.f32.mrf.mxu0
  %2489 = vmatprep.mubr.f32.mxu0 0.0
  %2490 = vmatmul.mubr.f32.gmra.mxu0 %v1845
  %v2491 = vpop.f32.mrf.mxu0
  %v2492 = vadd.f32 %v2393, %v2491
  %v2493 = vpop.f32.mrf.mxu0
  %2494 = vmatprep.mubr.f32.mxu0 0.0
  %2495 = vmatmul.mubr.f32.gmra.mxu0 %v2116
  %v2496 = vpop.f32.mrf.mxu0
  %v2497 = vadd.f32 %v2393, %v2496
  %v2498 = vpop.f32.mrf.mxu0
  %2499 = vmatprep.mubr.f32.mxu0 0.0
  %2500 = vmatmul.mubr.f32.gmra.mxu0 %v2398
  %v2501 = vpop.f32.mrf.mxu0
  %v2502 = vadd.f32 %v2393, %v2501
  %v2503 = vpop.f32.mrf.mxu0
  %2504 = vdwg.mxu0
  %v2505 = vtanh.pop %v2467
  %v2506 = vtanh.pop %v2472
  %v2507 = vtanh.pop %v2477
  %v2508 = vtanh.pop %v2482
  %v2509 = vtanh.pop %v2487
  %v2510 = vtanh.pop %v2492
  %v2511 = vtanh.pop %v2497
  %v2512 = vtanh.pop %v2502
  %v2513 = vld [vmem:[%s9] sm:$0x1]
  %v2515 = vlaneseq
  %v2516 = vshrl.u32 %v2515, 7
  %v2517 = vsub.s32 0, %v2516
  %v2518 = vrot.slane %v2513, %v2517
  %v2520 = vmul.f32 %v2505, %v2518
  %v2521 = vmul.f32 %v2506, %v2518
  %v2522 = vmul.f32 %v2507, %v2518
  %v2523 = vmul.f32 %v2508, %v2518
  %v2524 = vmul.f32 %v2509, %v2518
  %v2525 = vmul.f32 %v2510, %v2518
  %v2526 = vmul.f32 %v2511, %v2518
  %v2527 = vmul.f32 %v2512, %v2518
  %vm2528 = vcmask 523264
  %v2529 = vsel %vm2528, %v2520, 0.0
  %2530 = vadd.xlane.f32.xlu0 %v2529
  %v2531 = vpop.xlane.xlu0 %2530
  %v2532 = vsel %vm2528, %v2521, 0.0
  %2533 = vadd.xlane.f32.xlu0 %v2532
  %v2534 = vpop.xlane.xlu0 %2533
  %v2535 = vsel %vm2528, %v2522, 0.0
  %2536 = vadd.xlane.f32.xlu0 %v2535
  %v2537 = vpop.xlane.xlu0 %2536
  %v2538 = vsel %vm2528, %v2523, 0.0
  %2539 = vadd.xlane.f32.xlu0 %v2538
  %v2540 = vpop.xlane.xlu0 %2539
  %v2541 = vsel %vm2528, %v2524, 0.0
  %2542 = vadd.xlane.f32.xlu0 %v2541
  %v2543 = vpop.xlane.xlu0 %2542
  %v2544 = vsel %vm2528, %v2525, 0.0
  %2545 = vadd.xlane.f32.xlu0 %v2544
  %v2546 = vpop.xlane.xlu0 %2545
  %v2547 = vsel %vm2528, %v2526, 0.0
  %2548 = vadd.xlane.f32.xlu0 %v2547
  %v2549 = vpop.xlane.xlu0 %2548
  %v2550 = vsel %vm2528, %v2527, 0.0
  %2551 = vadd.xlane.f32.xlu0 %v2550
  %v2552 = vpop.xlane.xlu0 %2551
  %v2553 = vld [vmem:[#allocation2] sm:$0x1]
  %v2555 = vlaneseq
  %v2556 = vshrl.u32 %v2555, 7
  %v2557 = vsub.s32 0, %v2556
  %v2558 = vrot.slane %v2553, %v2557
  %v2560 = vadd.f32 %v2531, %v2558
  %v2561 = vadd.f32 %v2534, %v2558
  %v2562 = vadd.f32 %v2537, %v2558
  %v2563 = vadd.f32 %v2540, %v2558
  %v2564 = vadd.f32 %v2543, %v2558
  %v2565 = vadd.f32 %v2546, %v2558
  %v2566 = vadd.f32 %v2549, %v2558
  %v2567 = vadd.f32 %v2552, %v2558
  %2569 = vrot.lane.b32.xlu0 %v2561, 1
  %v2570 = vpop.permute.xlu0 %2569
  %2573 = vrot.lane.b32.xlu0 %v2562, 2
  %v2574 = vpop.permute.xlu0 %2573
  %2577 = vrot.lane.b32.xlu0 %v2563, 3
  %v2578 = vpop.permute.xlu0 %2577
  %2581 = vrot.lane.b32.xlu0 %v2564, 4
  %v2582 = vpop.permute.xlu0 %2581
  %2585 = vrot.lane.b32.xlu0 %v2565, 5
  %v2586 = vpop.permute.xlu0 %2585
  %2589 = vrot.lane.b32.xlu0 %v2566, 6
  %v2590 = vpop.permute.xlu0 %2589
  %2593 = vrot.lane.b32.xlu0 %v2567, 7
  %v2594 = vpop.permute.xlu0 %2593
  %vm2596 = vcmask 7168
  %v2597 = vsel %vm2596, %v2560, %v2570
  %vm2598 = vcmask 15360
  %v2599 = vsel %vm2598, %v2597, %v2574
  %vm2600 = vcmask 23552
  %v2601 = vsel %vm2600, %v2599, %v2578
  %vm2602 = vcmask 31744
  %v2603 = vsel %vm2602, %v2601, %v2582
  %vm2604 = vcmask 39936
  %v2605 = vsel %vm2604, %v2603, %v2586
  %vm2606 = vcmask 48128
  %v2607 = vsel %vm2606, %v2605, %v2590
  %v2608 = vsel %vm64, %v2607, %v2594
  %vm2609 = vcmask 64512
  %v2610 = vsel %vm2609, %v2608, -inf
  %2611 = vmax.xlane.f32.xlu0 %v2610
  %v2612 = vpop.xlane.xlu0 %2611
  %v2613 = vsub.f32 %v2608, %v2612
  %v2614 = vmul.f32 %v2613, 1.442695
  %v2615 = vpow.pop %v2614
  %v2616 = vsel %vm2609, %v2615, 0.0
  %2617 = vadd.xlane.f32.xlu0 %v2616
  %v2618 = vpop.xlane.xlu0 %2617
  %2620 = vset.pattern.permute.xlu0 0
  %2621 = vperm.xlu0 %2620, %v2615
  %v2622 = vpop.permute.xlu0 %2621
  %v2624 = vmul.f32 %v2622, %v486
  %v2625 = vadd.f32 %v2624, 0.0
  %2626 = vset.pattern.permute.xlu0 1
  %2627 = vperm.xlu0 %2626, %v2615
  %v2628 = vpop.permute.xlu0 %2627
  %v2630 = vmul.f32 %v2628, %v757
  %v2631 = vadd.f32 %v2625, %v2630
  %2632 = vset.pattern.permute.xlu0 2
  %2633 = vperm.xlu0 %2632, %v2615
  %v2634 = vpop.permute.xlu0 %2633
  %v2636 = vmul.f32 %v2634, %v1028
  %v2637 = vadd.f32 %v2631, %v2636
  %2638 = vset.pattern.permute.xlu0 3
  %2639 = vperm.xlu0 %2638, %v2615
  %v2640 = vpop.permute.xlu0 %2639
  %v2642 = vmul.f32 %v2640, %v1299
  %v2643 = vadd.f32 %v2637, %v2642
  %2644 = vset.pattern.permute.xlu0 4
  %2645 = vperm.xlu0 %2644, %v2615
  %v2646 = vpop.permute.xlu0 %2645
  %v2648 = vmul.f32 %v2646, %v1570
  %v2649 = vadd.f32 %v2643, %v2648
  %2650 = vset.pattern.permute.xlu0 5
  %2651 = vperm.xlu0 %2650, %v2615
  %v2652 = vpop.permute.xlu0 %2651
  %v2654 = vmul.f32 %v2652, %v1841
  %v2655 = vadd.f32 %v2649, %v2654
  %2656 = vset.pattern.permute.xlu0 6
  %2657 = vperm.xlu0 %2656, %v2615
  %v2658 = vpop.permute.xlu0 %2657
  %v2660 = vmul.f32 %v2658, %v2112
  %v2661 = vadd.f32 %v2655, %v2660
  %2662 = vset.pattern.permute.xlu0 7
  %2663 = vperm.xlu0 %2662, %v2615
  %v2664 = vpop.permute.xlu0 %2663
  %v2666 = vmul.f32 %v2664, %v2383
  %v2667 = vadd.f32 %v2661, %v2666
  %v2668 = vrcp.pop %v2618
  %v2669 = vmul.f32 %v2667, %v2668
  %v2670 = vld [vmem:[%s11] sm:$0xff]
  %v2671 = vld [vmem:[%s11 + $0x8] sm:$0xff]
  %v2672 = vld [vmem:[%s11 + $0x10] sm:$0xff]
  %v2673 = vld [vmem:[%s11 + $0x18] sm:$0xff]
  %v2674 = vld [vmem:[#allocation3] sm:$0x1]
  %v2676 = vlaneseq
  %v2677 = vshrl.u32 %v2676, 7
  %v2678 = vsub.s32 0, %v2677
  %v2679 = vrot.slane %v2674, %v2678
  %2682 = vrot.lane.b32.xlu0 %v2669, 32
  %v2683 = vpop.permute.xlu0 %2682
  %v2684 = vsel %vm217, %v2683, 0
  %2686 = vmatprep.subr.mxu0 0.0
  %2687 = vmatpush1.msra.mxu0 0.0
  %2688 = vmatprep.subr.mxu0 0.0
  %2689 = vmatpush1.msra.mxu0 0.0
  %2690 = vmatprep.subr.mxu0 0.0
  %2691 = vmatpush1.msra.mxu0 0.0
  %2692 = vmatprep.subr.mxu0 0.0
  %2693 = vmatpush1.msra.mxu0 0.0
  %2694 = vmatprep.subr.mxu0 0.0
  %2695 = vmatpush1.msra.mxu0 0.0
  %2696 = vmatprep.subr.mxu0 0.0
  %2697 = vmatpush1.msra.mxu0 0.0
  %2698 = vmatprep.subr.mxu0 0.0
  %2699 = vmatpush1.msra.mxu0 0.0
  %2700 = vmatprep.subr.mxu0 0.0
  %2701 = vmatpush1.msra.mxu0 0.0
  %2702 = vmatprep.subr.mxu0 0.0
  %2703 = vmatpush1.msra.mxu0 0.0
  %2704 = vmatprep.subr.mxu0 0.0
  %2705 = vmatpush1.msra.mxu0 0.0
  %2706 = vmatprep.subr.mxu0 0.0
  %2707 = vmatpush1.msra.mxu0 0.0
  %2708 = vmatprep.subr.mxu0 0.0
  %2709 = vmatpush1.msra.mxu0 0.0
  %2710 = vmatprep.subr.mxu0 0.0
  %2711 = vmatpush1.msra.mxu0 %v2673
  %2712 = vmatprep.subr.mxu0 0.0
  %2713 = vmatpush1.msra.mxu0 %v2672
  %2714 = vmatprep.subr.mxu0 0.0
  %2715 = vmatpush1.msra.mxu0 %v2671
  %2716 = vmatprep.subr.mxu0 0.0
  %2717 = vmatpush1.msra.mxu0 %v2670
  %2718 = vmatprep.subr.mxu0 0.0
  %2719 = vmatpush2.msra.mxu0 0.0
  %2720 = vmatprep.subr.mxu0 0.0
  %2721 = vmatpush2.msra.mxu0 0.0
  %2722 = vmatprep.subr.mxu0 0.0
  %2723 = vmatpush2.msra.mxu0 0.0
  %2724 = vmatprep.subr.mxu0 0.0
  %2725 = vmatpush2.msra.mxu0 0.0
  %2726 = vmatprep.subr.mxu0 0.0
  %2727 = vmatpush2.msra.mxu0 0.0
  %2728 = vmatprep.subr.mxu0 0.0
  %2729 = vmatpush2.msra.mxu0 0.0
  %2730 = vmatprep.subr.mxu0 0.0
  %2731 = vmatpush2.msra.mxu0 0.0
  %2732 = vmatprep.subr.mxu0 0.0
  %2733 = vmatpush2.msra.mxu0 0.0
  %2734 = vmatprep.subr.mxu0 0.0
  %2735 = vmatpush2.msra.mxu0 0.0
  %2736 = vmatprep.subr.mxu0 0.0
  %2737 = vmatpush2.msra.mxu0 0.0
  %2738 = vmatprep.subr.mxu0 0.0
  %2739 = vmatpush2.msra.mxu0 0.0
  %2740 = vmatprep.subr.mxu0 0.0
  %2741 = vmatpush2.msra.mxu0 0.0
  %2742 = vmatprep.subr.mxu0 0.0
  %2743 = vmatpush2.msra.mxu0 0.0
  %2744 = vmatprep.subr.mxu0 0.0
  %2745 = vmatpush2.msra.mxu0 0.0
  %2746 = vmatprep.subr.mxu0 0.0
  %2747 = vmatpush2.msra.mxu0 0.0
  %2748 = vmatprep.subr.mxu0 0.0
  %2749 = vmatpush2.msra.mxu0 0.0
  %2750 = vmatprep.mubr.f32.mxu0 0.0
  %2751 = vmatmul.mubr.f32.gmra.mxu0 %v2684
  %v2752 = vpop.f32.mrf.mxu0
  %v2753 = vadd.f32 %v2679, %v2752
  %v2754 = vpop.f32.mrf.mxu0
  %2755 = vdwg.mxu0
  %2756 = vst.msk [vmem:[%s13] sm:$0xff] %vm2596, %v2753
  // Predicated region
  $region54: #{attention_lstm_forward.1} parent=0 // pred_check
    _
  $region55: #{attention_lstm_forward.1} parent=0 // pred_check_branch
    %2758 = sbr.rel (0) target = $region57
  $region56: #{attention_lstm_forward.1} parent=0 // pred_region
    _
  $region57: #{attention_lstm_forward.1} parent=0 // pred_fallthru
    _
  // Predicated region
  $region58: #{attention_lstm_forward.1} parent=0 // pred_check
    _
  $region59: #{attention_lstm_forward.1} parent=0 // pred_check_branch
    %2760 = sbr.rel (0) target = $region61
  $region60: #{attention_lstm_forward.1} parent=0 // pred_region
    _
  $region61: #{attention_lstm_forward.1} parent=0 // pred_fallthru
    _

</llo_original>
